<compile_context>
chip_gen: v6e
topology: v6e:2x2x1
jax: 0.10.0
libtpu: 0.0.40
codegen_flags: <defaults>
</compile_context>

<pallas_src>
import functools
import math

import jax
import jax.numpy as jnp
from jax.experimental import pallas as pl
from jax.experimental.pallas import tpu as pltpu


VMEM_LIMIT = 40 * 1024 * 1024  # fits v7x (64 MiB physical VMEM) with headroom; fine on v5e/v6e


def _pick_tile(dim, cap, align):
    """Largest tile <= cap that divides dim and is a multiple of `align`; else the full dim."""
    if dim <= cap:
        return dim
    t = (cap // align) * align
    while t >= align:
        if dim % t == 0:
            return t
        t -= align
    return dim


# ----------------------------- dense (bias + activation fused) ------------------------------


def _dense_kernel(x_ref, w_ref, b_ref, o_ref, acc_ref, *, activation):
    # y = x @ W + b, tiled over (M, N, K); bf16 MXU operands, f32 VMEM accumulation.
    @pl.when(pl.program_id(2) == 0)
    def _():
        acc_ref[...] = jnp.zeros_like(acc_ref)

    acc_ref[...] += jnp.dot(x_ref[...], w_ref[...], preferred_element_type=jnp.float32)

    @pl.when(pl.program_id(2) == pl.num_programs(2) - 1)
    def _():
        y = acc_ref[...] + b_ref[...]
        if activation == "relu":
            y = jnp.maximum(y, 0.0)
        elif activation == "gelu":
            # TODO(synk): torch DistilBERT uses exact erf GELU; tanh approximation used here.
            y = jax.nn.gelu(y)
        o_ref[...] = y.astype(o_ref.dtype)


def dense(x, w, b, activation="none", out_dtype=jnp.bfloat16):
    M, K = x.shape
    N = w.shape[1]
    tm = _pick_tile(M, 512, 16)     # 16-aligned: bf16 sublane packing
    tn = _pick_tile(N, 512, 128)
    tk = _pick_tile(K, 512, 128)
    grid = (M // tm, N // tn, K // tk)
    # v5e: small-M (weight-DMA-bound) calls benefit from a deeper weight pipeline.
    w_kwargs = {}
    if M <= 64 and grid[2] >= 3:
        w_kwargs["pipeline_mode"] = pl.Buffered(3)
    return pl.pallas_call(
        functools.partial(_dense_kernel, activation=activation),
        out_shape=jax.ShapeDtypeStruct((M, N), out_dtype),
        grid=grid,
        in_specs=[pl.BlockSpec((tm, tk), lambda i, j, k: (i, k)),
                  pl.BlockSpec((tk, tn), lambda i, j, k: (k, j), **w_kwargs),
                  pl.BlockSpec((1, tn), lambda i, j, k: (0, j))],
        out_specs=pl.BlockSpec((tm, tn), lambda i, j, k: (i, j)),
        scratch_shapes=[pltpu.VMEM((tm, tn), jnp.float32)],
        compiler_params=pltpu.CompilerParams(
            dimension_semantics=("parallel", "parallel", "arbitrary"),
            vmem_limit_bytes=VMEM_LIMIT),
    )(x.astype(jnp.bfloat16), w, b.reshape(1, N))


# -------------------- dense with fused residual-add + LayerNorm epilogue --------------------


def _dense_ln_kernel(x_ref, w_ref, b_ref, r_ref, g_ref, bb_ref, o_ref, acc_ref, *, eps):
    @pl.when(pl.program_id(1) == 0)
    def _():
        acc_ref[...] = jnp.zeros_like(acc_ref)

    acc_ref[...] += jnp.dot(x_ref[...], w_ref[...], preferred_element_type=jnp.float32)

    @pl.when(pl.program_id(1) == pl.num_programs(1) - 1)
    def _():
        y = acc_ref[...] + b_ref[...] + r_ref[...].astype(jnp.float32)
        mu = jnp.mean(y, axis=-1, keepdims=True)
        var = jnp.mean((y - mu) ** 2, axis=-1, keepdims=True)
        yn = (y - mu) * jax.lax.rsqrt(var + eps)
        o_ref[...] = (yn * g_ref[...] + bb_ref[...]).astype(o_ref.dtype)


def dense_ln(x, w, b, residual, gamma, beta, eps=1e-12, out_dtype=jnp.bfloat16):
    """LayerNorm((x @ W + b) + residual): full output row (N = hidden) kept in one tn tile so
    the mean/var/scale run in the matmul flush, skipping the HBM round trip."""
    M, K = x.shape
    N = w.shape[1]
    tm = _pick_tile(M, 512, 16)
    tk = _pick_tile(K, 512, 128)
    grid = (M // tm, K // tk)
    return pl.pallas_call(
        functools.partial(_dense_ln_kernel, eps=eps),
        out_shape=jax.ShapeDtypeStruct((M, N), out_dtype),
        grid=grid,
        in_specs=[pl.BlockSpec((tm, tk), lambda i, k: (i, k)),
                  pl.BlockSpec((tk, N), lambda i, k: (k, 0)),
                  pl.BlockSpec((1, N), lambda i, k: (0, 0)),
                  pl.BlockSpec((tm, N), lambda i, k: (i, 0)),
                  pl.BlockSpec((1, N), lambda i, k: (0, 0)),
                  pl.BlockSpec((1, N), lambda i, k: (0, 0))],
        out_specs=pl.BlockSpec((tm, N), lambda i, k: (i, 0)),
        scratch_shapes=[pltpu.VMEM((tm, N), jnp.float32)],
        compiler_params=pltpu.CompilerParams(
            dimension_semantics=("parallel", "arbitrary"),
            vmem_limit_bytes=VMEM_LIMIT),
    )(x.astype(jnp.bfloat16), w, b.reshape(1, N), residual,
      gamma.reshape(1, N), beta.reshape(1, N))


# ------------------------------ standalone LayerNorm (embeddings) ---------------------------


def _ln_kernel(x_ref, g_ref, b_ref, o_ref, *, eps):
    x = x_ref[...].astype(jnp.float32)
    mu = jnp.mean(x, axis=-1, keepdims=True)
    var = jnp.mean((x - mu) ** 2, axis=-1, keepdims=True)
    y = (x - mu) * jax.lax.rsqrt(var + eps)
    o_ref[...] = (y * g_ref[...] + b_ref[...]).astype(o_ref.dtype)


def layernorm(x, g, b, eps=1e-12, out_dtype=jnp.bfloat16):
    M, H = x.shape
    tm = _pick_tile(M, 512, 8)
    row_spec = pl.BlockSpec((tm, H), lambda i: (i, 0))
    vec_spec = pl.BlockSpec((1, H), lambda i: (0, 0))
    return pl.pallas_call(
        functools.partial(_ln_kernel, eps=eps),
        out_shape=jax.ShapeDtypeStruct((M, H), out_dtype),
        grid=(M // tm,),
        in_specs=[row_spec, vec_spec, vec_spec],
        out_specs=row_spec,
        compiler_params=pltpu.CompilerParams(
            dimension_semantics=("parallel",),
            vmem_limit_bytes=VMEM_LIMIT),
    )(x, g.reshape(1, H), b.reshape(1, H))


# ----------------------------------- multi-head attention -----------------------------------


def _attn_kernel(q_ref, k_ref, v_ref, mask_ref, o_ref, *, heads_per_slab, dh, scale):
    # One (batch row, 128-lane head slab) per grid step.  q/k/v_ref: (S, heads_per_slab*dh) bf16.
    S = q_ref.shape[0]
    neg = (mask_ref[0] - 1.0) * 1e9                       # (1, S) f32: 0 keep, -1e9 pad
    neg_b = jnp.broadcast_to(neg, (S, S))                 # hoisted: one broadcast per slab
    ctxs = []
    for h in range(heads_per_slab):                       # small static loop (<= 4 heads / slab)
        q = q_ref[:, pl.ds(h * dh, dh)]
        k = k_ref[:, pl.ds(h * dh, dh)]
        v = v_ref[:, pl.ds(h * dh, dh)]
        s = jax.lax.dot_general(q, k, (((1,), (1,)), ((), ())),
                                preferred_element_type=jnp.float32) * scale   # (S, S) f32
        s = s + neg_b
        # TODO(synk): a fully-padded row degenerates to uniform attention over pad keys.
        s = s - jnp.max(s, axis=-1, keepdims=True)
        p = jnp.exp(s)
        p = p * pl.reciprocal(jnp.sum(p, axis=-1, keepdims=True))             # exact normalize
        ctxs.append(jnp.dot(p.astype(jnp.bfloat16), v, preferred_element_type=jnp.float32))
    o_ref[...] = jnp.concatenate(ctxs, axis=-1).astype(o_ref.dtype)           # lane-dense store


def attention(qkv, mask_f, *, hidden, nh, seq):
    """qkv: (B*S, 3*hidden) bf16 from the un-padded fused QKV projection; returns (B*S, hidden)."""
    M, _ = qkv.shape
    B = M // seq
    dh = hidden // nh
    heads_per_slab = max(1, min(nh, 128 // dh)) if dh < 128 else 1
    slab = heads_per_slab * dh                              # 128-lane (or full-H) slab
    assert hidden % slab == 0 and (slab % 128 == 0 or slab == hidden)
    n_slabs = hidden // slab
    scale = 1.0 / math.sqrt(dh)
    kern = functools.partial(_attn_kernel, heads_per_slab=heads_per_slab, dh=dh, scale=scale)
    return pl.pallas_call(
        kern,
        out_shape=jax.ShapeDtypeStruct((M, hidden), jnp.bfloat16),
        grid=(B, n_slabs),
        in_specs=[pl.BlockSpec((seq, slab), lambda b, g: (b, g)),
                  pl.BlockSpec((seq, slab), lambda b, g: (b, n_slabs + g)),
                  pl.BlockSpec((seq, slab), lambda b, g: (b, 2 * n_slabs + g)),
                  pl.BlockSpec((1, 1, seq), lambda b, g: (b, 0, 0))],
        out_specs=pl.BlockSpec((seq, slab), lambda b, g: (b, g)),
        compiler_params=pltpu.CompilerParams(
            dimension_semantics=("parallel", "parallel"),
            vmem_limit_bytes=VMEM_LIMIT),
    )(qkv, qkv, qkv, mask_f)


# --------------------------------------- model wrapper --------------------------------------


def init_params(key, *, vocab, max_pos, hidden, ffn, heads, layers, num_classes):
    H = hidden
    c_pad = ((num_classes + 127) // 128) * 128   # classifier output padded to 128 lanes

    def nrm(k, shape, scale=0.02):
        return (scale * jax.random.normal(k, shape)).astype(jnp.float32)

    keys = iter(jax.random.split(key, 8 + 8 * layers))
    params = {
        "word_emb": nrm(next(keys), (vocab, H)),
        "pos_emb": nrm(next(keys), (max_pos, H)),
        "emb_ln_g": jnp.ones((H,), jnp.float32),
        "emb_ln_b": jnp.zeros((H,), jnp.float32),
        "layers": [],
        "head_w1": nrm(next(keys), (H, H)).astype(jnp.bfloat16),
        "head_b1": jnp.zeros((H,), jnp.float32),
    }
    w2 = nrm(next(keys), (H, num_classes))
    params["head_w2"] = (jnp.zeros((H, c_pad), jnp.float32)
                         .at[:, :num_classes].set(w2).astype(jnp.bfloat16))
    params["head_b2"] = jnp.zeros((c_pad,), jnp.float32)

    for _ in range(layers):
        wq = nrm(next(keys), (H, H))
        wk = nrm(next(keys), (H, H))
        wv = nrm(next(keys), (H, H))
        wo = nrm(next(keys), (H, H))
        params["layers"].append({
            # Un-padded fused QKV (H, 3H) / attn-out (H, H); heads split inside the attn kernel.
            "wqkv": jnp.concatenate([wq, wk, wv], axis=1).astype(jnp.bfloat16),
            "bqkv": jnp.zeros((3 * H,), jnp.float32),
            "wo": wo.astype(jnp.bfloat16),
            "bo": jnp.zeros((H,), jnp.float32),
            "saln_g": jnp.ones((H,), jnp.float32), "saln_b": jnp.zeros((H,), jnp.float32),
            "w1": nrm(next(keys), (H, ffn)).astype(jnp.bfloat16),
            "b1": jnp.zeros((ffn,), jnp.float32),
            "w2": nrm(next(keys), (ffn, H)).astype(jnp.bfloat16),
            "b2": jnp.zeros((H,), jnp.float32),
            "oln_g": jnp.ones((H,), jnp.float32), "oln_b": jnp.zeros((H,), jnp.float32),
        })
    return params


def distilbert_classifier_forward(params, input_ids, attention_mask, *, hidden, heads,
                                  num_classes):
    B, S = input_ids.shape
    H = hidden

    # --- embeddings (gather is JAX glue; LayerNorm -> bf16 in Pallas) ---
    we = params["word_emb"][input_ids]                 # (B, S, H)
    pe = params["pos_emb"][jnp.arange(S)]              # (S, H)
    x = (we + pe[None, :, :]).reshape(B * S, H)
    x = layernorm(x, params["emb_ln_g"], params["emb_ln_b"])   # bf16 activations from here on
    # TODO(synk): embedding / attention / FFN / head dropout are identity at inference.

    mask_f = attention_mask.astype(jnp.float32).reshape(B, 1, S)   # additive mask built in-kernel

    # --- transformer blocks ---
    for lyr in params["layers"]:
        qkv = dense(x, lyr["wqkv"], lyr["bqkv"])                                  # (B*S, 3H) bf16
        ctx = attention(qkv, mask_f, hidden=H, nh=heads, seq=S)                   # (B*S, H) bf16
        x = dense_ln(ctx, lyr["wo"], lyr["bo"], x, lyr["saln_g"], lyr["saln_b"])  # sa_layer_norm
        h = dense(x, lyr["w1"], lyr["b1"], activation="gelu")                     # (B*S, ffn) bf16
        x = dense_ln(h, lyr["w2"], lyr["b2"], x, lyr["oln_g"], lyr["oln_b"])      # output_layer_norm

    # --- classification head on the [CLS] token ---
    cls = x.reshape(B, S, H)[:, 0]                                                # hidden_state[:, 0]
    h1 = dense(cls, params["head_w1"], params["head_b1"], activation="relu")
    logits = dense(h1, params["head_w2"], params["head_b2"], out_dtype=jnp.float32)
    return logits[:, :num_classes]


# -------------------------------------------- main ------------------------------------------


if __name__ == "__main__":
    # small synthetic DistilBERT-like config
    B, S = 2, 8
    HIDDEN, HEADS, LAYERS, FFN = 128, 4, 2, 256
    VOCAB, MAX_POS, NUM_CLASSES = 1000, 64, 5

    key = jax.random.PRNGKey(0)
    k_param, k_ids = jax.random.split(key)
    params = init_params(k_param, vocab=VOCAB, max_pos=MAX_POS, hidden=HIDDEN,
                         ffn=FFN, heads=HEADS, layers=LAYERS, num_classes=NUM_CLASSES)

    input_ids = jax.random.randint(k_ids, (B, S), 0, VOCAB, dtype=jnp.int32)
    attention_mask = jnp.array([[1, 1, 1, 1, 1, 1, 1, 1],
                                [1, 1, 1, 1, 1, 0, 0, 0]], dtype=jnp.int32)

    fwd = jax.jit(functools.partial(distilbert_classifier_forward,
                                    hidden=HIDDEN, heads=HEADS, num_classes=NUM_CLASSES))
    logits = fwd(params, input_ids, attention_mask)
    jax.block_until_ready(logits)
    assert logits.shape == (B, NUM_CLASSES) and logits.dtype == jnp.float32
    assert bool(jnp.all(jnp.isfinite(logits)))
    print("KERNEL_OK")
</pallas_src>

<mosaic_0001>
module attributes {stable_mosaic.version = 11 : i64} {
  func.func @_ln_kernel(%arg0: i32, %arg1: memref<16x128xf32, #tpu.memory_space<vmem>>, %arg2: memref<1x128xf32, #tpu.memory_space<vmem>>, %arg3: memref<1x128xf32, #tpu.memory_space<vmem>>, %arg4: memref<16x128xbf16, #tpu.memory_space<vmem>>) attributes {dimension_semantics = [#tpu.dimension_semantics<parallel>], iteration_bounds = array<i64: 1>, scalar_prefetch = 0 : i64, scratch_operands = 0 : i64, tpu.core_type = #tpu.core_type<tc>, window_params = [{transform_indices = @transform_0, window_bounds = array<i64: 16, 128>}, {pipeline_mode = #tpu.pipeline_mode<synchronous>, transform_indices = @transform_1, window_bounds = array<i64: 1, 128>}, {pipeline_mode = #tpu.pipeline_mode<synchronous>, transform_indices = @transform_2, window_bounds = array<i64: 1, 128>}, {transform_indices = @transform_3, window_bounds = array<i64: 16, 128>}]} {
    %c0 = arith.constant 0 : index
    %c0_0 = arith.constant 0 : index
    %0 = vector.load %arg1[%c0, %c0_0] : memref<16x128xf32, #tpu.memory_space<vmem>>, vector<16x128xf32>
    %cst = arith.constant dense<0.000000e+00> : vector<16xf32>
    %1 = vector.multi_reduction <add>, %0, %cst [1] : vector<16x128xf32> to vector<16xf32>
    %2 = vector.shape_cast %1 : vector<16xf32> to vector<16x1xf32>
    %cst_1 = arith.constant 1.280000e+02 : f32
    %3 = vector.broadcast %cst_1 : f32 to vector<16x1xf32>
    %4 = arith.divf %2, %3 : vector<16x1xf32>
    %5 = vector.broadcast %4 : vector<16x1xf32> to vector<16x128xf32>
    %6 = arith.subf %0, %5 : vector<16x128xf32>
    %7 = arith.mulf %6, %6 : vector<16x128xf32>
    %cst_2 = arith.constant dense<0.000000e+00> : vector<16xf32>
    %8 = vector.multi_reduction <add>, %7, %cst_2 [1] : vector<16x128xf32> to vector<16xf32>
    %9 = vector.shape_cast %8 : vector<16xf32> to vector<16x1xf32>
    %cst_3 = arith.constant 1.280000e+02 : f32
    %10 = vector.broadcast %cst_3 : f32 to vector<16x1xf32>
    %11 = arith.divf %9, %10 : vector<16x1xf32>
    %12 = vector.broadcast %4 : vector<16x1xf32> to vector<16x128xf32>
    %13 = arith.subf %0, %12 : vector<16x128xf32>
    %cst_4 = arith.constant 9.99999996E-13 : f32
    %14 = vector.broadcast %cst_4 : f32 to vector<16x1xf32>
    %15 = arith.addf %11, %14 : vector<16x1xf32>
    %16 = math.rsqrt %15 : vector<16x1xf32>
    %17 = vector.broadcast %16 : vector<16x1xf32> to vector<16x128xf32>
    %18 = arith.mulf %13, %17 : vector<16x128xf32>
    %c0_5 = arith.constant 0 : index
    %c0_6 = arith.constant 0 : index
    %19 = vector.load %arg2[%c0_5, %c0_6] : memref<1x128xf32, #tpu.memory_space<vmem>>, vector<1x128xf32>
    %20 = vector.broadcast %19 : vector<1x128xf32> to vector<16x128xf32>
    %21 = arith.mulf %18, %20 : vector<16x128xf32>
    %c0_7 = arith.constant 0 : index
    %c0_8 = arith.constant 0 : index
    %22 = vector.load %arg3[%c0_7, %c0_8] : memref<1x128xf32, #tpu.memory_space<vmem>>, vector<1x128xf32>
    %23 = vector.broadcast %22 : vector<1x128xf32> to vector<16x128xf32>
    %24 = arith.addf %21, %23 : vector<16x128xf32>
    %25 = arith.truncf %24 : vector<16x128xf32> to vector<16x128xbf16>
    %c0_9 = arith.constant 0 : index
    %c0_10 = arith.constant 0 : index
    %26 = vector.load %arg4[%c0_9, %c0_10] : memref<16x128xbf16, #tpu.memory_space<vmem>>, vector<16x128xbf16>
    tpu.vector_store %arg4[%c0_9, %c0_10], %25 {strides = array<i32>} : memref<16x128xbf16, #tpu.memory_space<vmem>>, vector<16x128xbf16>,
    return
  }
  func.func @transform_0(%arg0: i32) -> (i32, i32) {
    %c0_i32 = arith.constant 0 : i32
    %c0_i32_0 = arith.constant 0 : i32
    return %arg0, %c0_i32 : i32, i32
  }
  func.func @transform_1(%arg0: i32) -> (i32, i32) {
    %c0_i32 = arith.constant 0 : i32
    %c0_i32_0 = arith.constant 0 : i32
    %c0_i32_1 = arith.constant 0 : i32
    return %c0_i32, %c0_i32_0 : i32, i32
  }
  func.func @transform_2(%arg0: i32) -> (i32, i32) {
    %c0_i32 = arith.constant 0 : i32
    %c0_i32_0 = arith.constant 0 : i32
    %c0_i32_1 = arith.constant 0 : i32
    return %c0_i32, %c0_i32_0 : i32, i32
  }
  func.func @transform_3(%arg0: i32) -> (i32, i32) {
    %c0_i32 = arith.constant 0 : i32
    %c0_i32_0 = arith.constant 0 : i32
    return %arg0, %c0_i32 : i32, i32
  }
}

module attributes {stable_mosaic.version = 11 : i64} {
  func.func @_dense_kernel(%arg0: i32, %arg1: i32, %arg2: i32, %arg3: memref<16x128xbf16, #tpu.memory_space<vmem>>, %arg4: memref<128x384xbf16, #tpu.memory_space<vmem>>, %arg5: memref<1x384xf32, #tpu.memory_space<vmem>>, %arg6: memref<16x384xbf16, #tpu.memory_space<vmem>>, %arg7: memref<16x384xf32, #tpu.memory_space<vmem>>) attributes {dimension_semantics = [#tpu.dimension_semantics<parallel>, #tpu.dimension_semantics<parallel>, #tpu.dimension_semantics<arbitrary>], iteration_bounds = array<i64: 1, 1, 1>, scalar_prefetch = 0 : i64, scratch_operands = 1 : i64, tpu.core_type = #tpu.core_type<tc>, window_params = [{transform_indices = @transform_0, window_bounds = array<i64: 16, 128>}, {transform_indices = @transform_1, window_bounds = array<i64: 128, 384>}, {transform_indices = @transform_2, window_bounds = array<i64: 1, 384>}, {transform_indices = @transform_3, window_bounds = array<i64: 16, 384>}]} {
    %c0_i32 = arith.constant 0 : i32
    %0 = arith.cmpi eq, %arg2, %c0_i32 : i32
    %1 = arith.extui %0 : i1 to i32
    %c0_i32_0 = arith.constant 0 : i32
    %2 = arith.cmpi ne, %1, %c0_i32_0 : i32
    scf.if %2 {
      %cst_10 = arith.constant 0.000000e+00 : f32
      %12 = vector.broadcast %cst_10 : f32 to vector<16x384xf32>
      %c0_11 = arith.constant 0 : index
      %c0_12 = arith.constant 0 : index
      %13 = vector.load %arg7[%c0_11, %c0_12] : memref<16x384xf32, #tpu.memory_space<vmem>>, vector<16x384xf32>
      tpu.vector_store %arg7[%c0_11, %c0_12], %12 {strides = array<i32>} : memref<16x384xf32, #tpu.memory_space<vmem>>, vector<16x384xf32>,
    } else {
    }
    %c0 = arith.constant 0 : index
    %c0_1 = arith.constant 0 : index
    %3 = vector.load %arg7[%c0, %c0_1] : memref<16x384xf32, #tpu.memory_space<vmem>>, vector<16x384xf32>
    %c0_2 = arith.constant 0 : index
    %c0_3 = arith.constant 0 : index
    %4 = vector.load %arg3[%c0_2, %c0_3] : memref<16x128xbf16, #tpu.memory_space<vmem>>, vector<16x128xbf16>
    %c0_4 = arith.constant 0 : index
    %c0_5 = arith.constant 0 : index
    %5 = vector.load %arg4[%c0_4, %c0_5] : memref<128x384xbf16, #tpu.memory_space<vmem>>, vector<128x384xbf16>
    %cst = arith.constant dense<0.000000e+00> : vector<16x384xf32>
    %6 = tpu.matmul %4, %5, %cst {dimension_numbers = #tpu.dot_dimension_numbers<[1], [0], [0], [1], [0, 0, 1, 1], [], []>} : vector<16x128xbf16>, vector<128x384xbf16>, vector<16x384xf32> -> vector<16x384xf32>
    %7 = arith.addf %3, %6 : vector<16x384xf32>
    %c0_6 = arith.constant 0 : index
    %c0_7 = arith.constant 0 : index
    %8 = vector.load %arg7[%c0_6, %c0_7] : memref<16x384xf32, #tpu.memory_space<vmem>>, vector<16x384xf32>
    tpu.vector_store %arg7[%c0_6, %c0_7], %7 {strides = array<i32>} : memref<16x384xf32, #tpu.memory_space<vmem>>, vector<16x384xf32>,
    %c0_i32_8 = arith.constant 0 : i32
    %9 = arith.cmpi eq, %arg2, %c0_i32_8 : i32
    %10 = arith.extui %9 : i1 to i32
    %c0_i32_9 = arith.constant 0 : i32
    %11 = arith.cmpi ne, %10, %c0_i32_9 : i32
    scf.if %11 {
      %c0_10 = arith.constant 0 : index
      %c0_11 = arith.constant 0 : index
      %12 = vector.load %arg7[%c0_10, %c0_11] : memref<16x384xf32, #tpu.memory_space<vmem>>, vector<16x384xf32>
      %c0_12 = arith.constant 0 : index
      %c0_13 = arith.constant 0 : index
      %13 = vector.load %arg5[%c0_12, %c0_13] : memref<1x384xf32, #tpu.memory_space<vmem>>, vector<1x384xf32>
      %14 = vector.broadcast %13 : vector<1x384xf32> to vector<16x384xf32>
      %15 = arith.addf %12, %14 : vector<16x384xf32>
      %16 = arith.truncf %15 : vector<16x384xf32> to vector<16x384xbf16>
      %c0_14 = arith.constant 0 : index
      %c0_15 = arith.constant 0 : index
      %17 = vector.load %arg6[%c0_14, %c0_15] : memref<16x384xbf16, #tpu.memory_space<vmem>>, vector<16x384xbf16>
      tpu.vector_store %arg6[%c0_14, %c0_15], %16 {strides = array<i32>} : memref<16x384xbf16, #tpu.memory_space<vmem>>, vector<16x384xbf16>,
    } else {
    }
    return
  }
  func.func @transform_0(%arg0: i32, %arg1: i32, %arg2: i32) -> (i32, i32) {
    %c0_i32 = arith.constant 0 : i32
    return %arg0, %arg2 : i32, i32
  }
  func.func @transform_1(%arg0: i32, %arg1: i32, %arg2: i32) -> (i32, i32) {
    %c0_i32 = arith.constant 0 : i32
    return %arg2, %arg1 : i32, i32
  }
  func.func @transform_2(%arg0: i32, %arg1: i32, %arg2: i32) -> (i32, i32) {
    %c0_i32 = arith.constant 0 : i32
    %c0_i32_0 = arith.constant 0 : i32
    return %c0_i32, %arg1 : i32, i32
  }
  func.func @transform_3(%arg0: i32, %arg1: i32, %arg2: i32) -> (i32, i32) {
    %c0_i32 = arith.constant 0 : i32
    return %arg0, %arg1 : i32, i32
  }
}

module attributes {stable_mosaic.version = 11 : i64} {
  func.func @_attn_kernel(%arg0: i32, %arg1: i32, %arg2: memref<8x128xbf16, #tpu.memory_space<vmem>>, %arg3: memref<8x128xbf16, #tpu.memory_space<vmem>>, %arg4: memref<8x128xbf16, #tpu.memory_space<vmem>>, %arg5: memref<1x1x8xf32, #tpu.memory_space<vmem>>, %arg6: memref<8x128xbf16, #tpu.memory_space<vmem>>) attributes {dimension_semantics = [#tpu.dimension_semantics<parallel>, #tpu.dimension_semantics<parallel>], iteration_bounds = array<i64: 2, 1>, scalar_prefetch = 0 : i64, scratch_operands = 0 : i64, tpu.core_type = #tpu.core_type<tc>, window_params = [{transform_indices = @transform_0, window_bounds = array<i64: 8, 128>}, {transform_indices = @transform_1, window_bounds = array<i64: 8, 128>}, {transform_indices = @transform_2, window_bounds = array<i64: 8, 128>}, {transform_indices = @transform_3, window_bounds = array<i64: 1, 1, 8>}, {transform_indices = @transform_4, window_bounds = array<i64: 8, 128>}]} {
    %c0 = arith.constant 0 : index
    %c0_0 = arith.constant 0 : index
    %c0_1 = arith.constant 0 : index
    %0 = vector.load %arg5[%c0, %c0_0, %c0_1] : memref<1x1x8xf32, #tpu.memory_space<vmem>>, vector<1x1x8xf32>
    %1 = vector.shape_cast %0 : vector<1x1x8xf32> to vector<1x8xf32>
    %cst = arith.constant 1.000000e+00 : f32
    %2 = vector.broadcast %cst : f32 to vector<1x8xf32>
    %3 = arith.subf %1, %2 : vector<1x8xf32>
    %cst_2 = arith.constant 1.000000e+09 : f32
    %4 = vector.broadcast %cst_2 : f32 to vector<1x8xf32>
    %5 = arith.mulf %3, %4 : vector<1x8xf32>
    %6 = vector.shape_cast %5 : vector<1x8xf32> to vector<1x8xf32>
    %7 = vector.broadcast %6 : vector<1x8xf32> to vector<8x8xf32>
    %c0_3 = arith.constant 0 : index
    %c0_4 = arith.constant 0 : index
    %8 = vector.load %arg2[%c0_3, %c0_4] : memref<8x128xbf16, #tpu.memory_space<vmem>>, vector<8x32xbf16>
    %c0_5 = arith.constant 0 : index
    %c0_6 = arith.constant 0 : index
    %9 = vector.load %arg3[%c0_5, %c0_6] : memref<8x128xbf16, #tpu.memory_space<vmem>>, vector<8x32xbf16>
    %c0_7 = arith.constant 0 : index
    %c0_8 = arith.constant 0 : index
    %10 = vector.load %arg4[%c0_7, %c0_8] : memref<8x128xbf16, #tpu.memory_space<vmem>>, vector<8x32xbf16>
    %cst_9 = arith.constant dense<0.000000e+00> : vector<8x8xf32>
    %11 = tpu.matmul %8, %9, %cst_9 {dimension_numbers = #tpu.dot_dimension_numbers<[1], [1], [0], [0], [0, 0, 1, 0], [], []>} : vector<8x32xbf16>, vector<8x32xbf16>, vector<8x8xf32> -> vector<8x8xf32>
    %cst_10 = arith.constant 0.176776692 : f32
    %12 = vector.broadcast %cst_10 : f32 to vector<8x8xf32>
    %13 = arith.mulf %11, %12 : vector<8x8xf32>
    %14 = arith.addf %13, %7 : vector<8x8xf32>
    %cst_11 = arith.constant dense<0xFF800000> : vector<8xf32>
    %15 = vector.multi_reduction <maximumf>, %14, %cst_11 [1] : vector<8x8xf32> to vector<8xf32>
    %16 = vector.shape_cast %15 : vector<8xf32> to vector<8x1xf32>
    %17 = vector.broadcast %16 : vector<8x1xf32> to vector<8x8xf32>
    %18 = arith.subf %14, %17 : vector<8x8xf32>
    %19 = math.exp %18 : vector<8x8xf32>
    %cst_12 = arith.constant dense<0.000000e+00> : vector<8xf32>
    %20 = vector.multi_reduction <add>, %19, %cst_12 [1] : vector<8x8xf32> to vector<8xf32>
    %21 = vector.shape_cast %20 : vector<8xf32> to vector<8x1xf32>
    %22 = tpu.reciprocal %21 : vector<8x1xf32> -> vector<8x1xf32>
    %23 = vector.broadcast %22 : vector<8x1xf32> to vector<8x8xf32>
    %24 = arith.mulf %19, %23 : vector<8x8xf32>
    %25 = arith.truncf %24 : vector<8x8xf32> to vector<8x8xbf16>
    %cst_13 = arith.constant dense<0.000000e+00> : vector<8x32xf32>
    %26 = tpu.matmul %25, %10, %cst_13 {dimension_numbers = #tpu.dot_dimension_numbers<[1], [0], [0], [1], [0, 0, 1, 1], [], []>} : vector<8x8xbf16>, vector<8x32xbf16>, vector<8x32xf32> -> vector<8x32xf32>
    %c0_14 = arith.constant 0 : index
    %c32 = arith.constant 32 : index
    %27 = vector.load %arg2[%c0_14, %c32] : memref<8x128xbf16, #tpu.memory_space<vmem>>, vector<8x32xbf16>
    %c0_15 = arith.constant 0 : index
    %c32_16 = arith.constant 32 : index
    %28 = vector.load %arg3[%c0_15, %c32_16] : memref<8x128xbf16, #tpu.memory_space<vmem>>, vector<8x32xbf16>
    %c0_17 = arith.constant 0 : index
    %c32_18 = arith.constant 32 : index
    %29 = vector.load %arg4[%c0_17, %c32_18] : memref<8x128xbf16, #tpu.memory_space<vmem>>, vector<8x32xbf16>
    %cst_19 = arith.constant dense<0.000000e+00> : vector<8x8xf32>
    %30 = tpu.matmul %27, %28, %cst_19 {dimension_numbers = #tpu.dot_dimension_numbers<[1], [1], [0], [0], [0, 0, 1, 0], [], []>} : vector<8x32xbf16>, vector<8x32xbf16>, vector<8x8xf32> -> vector<8x8xf32>
    %cst_20 = arith.constant 0.176776692 : f32
    %31 = vector.broadcast %cst_20 : f32 to vector<8x8xf32>
    %32 = arith.mulf %30, %31 : vector<8x8xf32>
    %33 = arith.addf %32, %7 : vector<8x8xf32>
    %cst_21 = arith.constant dense<0xFF800000> : vector<8xf32>
    %34 = vector.multi_reduction <maximumf>, %33, %cst_21 [1] : vector<8x8xf32> to vector<8xf32>
    %35 = vector.shape_cast %34 : vector<8xf32> to vector<8x1xf32>
    %36 = vector.broadcast %35 : vector<8x1xf32> to vector<8x8xf32>
    %37 = arith.subf %33, %36 : vector<8x8xf32>
    %38 = math.exp %37 : vector<8x8xf32>
    %cst_22 = arith.constant dense<0.000000e+00> : vector<8xf32>
    %39 = vector.multi_reduction <add>, %38, %cst_22 [1] : vector<8x8xf32> to vector<8xf32>
    %40 = vector.shape_cast %39 : vector<8xf32> to vector<8x1xf32>
    %41 = tpu.reciprocal %40 : vector<8x1xf32> -> vector<8x1xf32>
    %42 = vector.broadcast %41 : vector<8x1xf32> to vector<8x8xf32>
    %43 = arith.mulf %38, %42 : vector<8x8xf32>
    %44 = arith.truncf %43 : vector<8x8xf32> to vector<8x8xbf16>
    %cst_23 = arith.constant dense<0.000000e+00> : vector<8x32xf32>
    %45 = tpu.matmul %44, %29, %cst_23 {dimension_numbers = #tpu.dot_dimension_numbers<[1], [0], [0], [1], [0, 0, 1, 1], [], []>} : vector<8x8xbf16>, vector<8x32xbf16>, vector<8x32xf32> -> vector<8x32xf32>
    %c0_24 = arith.constant 0 : index
    %c64 = arith.constant 64 : index
    %46 = vector.load %arg2[%c0_24, %c64] : memref<8x128xbf16, #tpu.memory_space<vmem>>, vector<8x32xbf16>
    %c0_25 = arith.constant 0 : index
    %c64_26 = arith.constant 64 : index
    %47 = vector.load %arg3[%c0_25, %c64_26] : memref<8x128xbf16, #tpu.memory_space<vmem>>, vector<8x32xbf16>
    %c0_27 = arith.constant 0 : index
    %c64_28 = arith.constant 64 : index
    %48 = vector.load %arg4[%c0_27, %c64_28] : memref<8x128xbf16, #tpu.memory_space<vmem>>, vector<8x32xbf16>
    %cst_29 = arith.constant dense<0.000000e+00> : vector<8x8xf32>
    %49 = tpu.matmul %46, %47, %cst_29 {dimension_numbers = #tpu.dot_dimension_numbers<[1], [1], [0], [0], [0, 0, 1, 0], [], []>} : vector<8x32xbf16>, vector<8x32xbf16>, vector<8x8xf32> -> vector<8x8xf32>
    %cst_30 = arith.constant 0.176776692 : f32
    %50 = vector.broadcast %cst_30 : f32 to vector<8x8xf32>
    %51 = arith.mulf %49, %50 : vector<8x8xf32>
    %52 = arith.addf %51, %7 : vector<8x8xf32>
    %cst_31 = arith.constant dense<0xFF800000> : vector<8xf32>
    %53 = vector.multi_reduction <maximumf>, %52, %cst_31 [1] : vector<8x8xf32> to vector<8xf32>
    %54 = vector.shape_cast %53 : vector<8xf32> to vector<8x1xf32>
    %55 = vector.broadcast %54 : vector<8x1xf32> to vector<8x8xf32>
    %56 = arith.subf %52, %55 : vector<8x8xf32>
    %57 = math.exp %56 : vector<8x8xf32>
    %cst_32 = arith.constant dense<0.000000e+00> : vector<8xf32>
    %58 = vector.multi_reduction <add>, %57, %cst_32 [1] : vector<8x8xf32> to vector<8xf32>
    %59 = vector.shape_cast %58 : vector<8xf32> to vector<8x1xf32>
    %60 = tpu.reciprocal %59 : vector<8x1xf32> -> vector<8x1xf32>
    %61 = vector.broadcast %60 : vector<8x1xf32> to vector<8x8xf32>
    %62 = arith.mulf %57, %61 : vector<8x8xf32>
    %63 = arith.truncf %62 : vector<8x8xf32> to vector<8x8xbf16>
    %cst_33 = arith.constant dense<0.000000e+00> : vector<8x32xf32>
    %64 = tpu.matmul %63, %48, %cst_33 {dimension_numbers = #tpu.dot_dimension_numbers<[1], [0], [0], [1], [0, 0, 1, 1], [], []>} : vector<8x8xbf16>, vector<8x32xbf16>, vector<8x32xf32> -> vector<8x32xf32>
    %c0_34 = arith.constant 0 : index
    %c96 = arith.constant 96 : index
    %65 = vector.load %arg2[%c0_34, %c96] : memref<8x128xbf16, #tpu.memory_space<vmem>>, vector<8x32xbf16>
    %c0_35 = arith.constant 0 : index
    %c96_36 = arith.constant 96 : index
    %66 = vector.load %arg3[%c0_35, %c96_36] : memref<8x128xbf16, #tpu.memory_space<vmem>>, vector<8x32xbf16>
    %c0_37 = arith.constant 0 : index
    %c96_38 = arith.constant 96 : index
    %67 = vector.load %arg4[%c0_37, %c96_38] : memref<8x128xbf16, #tpu.memory_space<vmem>>, vector<8x32xbf16>
    %cst_39 = arith.constant dense<0.000000e+00> : vector<8x8xf32>
    %68 = tpu.matmul %65, %66, %cst_39 {dimension_numbers = #tpu.dot_dimension_numbers<[1], [1], [0], [0], [0, 0, 1, 0], [], []>} : vector<8x32xbf16>, vector<8x32xbf16>, vector<8x8xf32> -> vector<8x8xf32>
    %cst_40 = arith.constant 0.176776692 : f32
    %69 = vector.broadcast %cst_40 : f32 to vector<8x8xf32>
    %70 = arith.mulf %68, %69 : vector<8x8xf32>
    %71 = arith.addf %70, %7 : vector<8x8xf32>
    %cst_41 = arith.constant dense<0xFF800000> : vector<8xf32>
    %72 = vector.multi_reduction <maximumf>, %71, %cst_41 [1] : vector<8x8xf32> to vector<8xf32>
    %73 = vector.shape_cast %72 : vector<8xf32> to vector<8x1xf32>
    %74 = vector.broadcast %73 : vector<8x1xf32> to vector<8x8xf32>
    %75 = arith.subf %71, %74 : vector<8x8xf32>
    %76 = math.exp %75 : vector<8x8xf32>
    %cst_42 = arith.constant dense<0.000000e+00> : vector<8xf32>
    %77 = vector.multi_reduction <add>, %76, %cst_42 [1] : vector<8x8xf32> to vector<8xf32>
    %78 = vector.shape_cast %77 : vector<8xf32> to vector<8x1xf32>
    %79 = tpu.reciprocal %78 : vector<8x1xf32> -> vector<8x1xf32>
    %80 = vector.broadcast %79 : vector<8x1xf32> to vector<8x8xf32>
    %81 = arith.mulf %76, %80 : vector<8x8xf32>
    %82 = arith.truncf %81 : vector<8x8xf32> to vector<8x8xbf16>
    %cst_43 = arith.constant dense<0.000000e+00> : vector<8x32xf32>
    %83 = tpu.matmul %82, %67, %cst_43 {dimension_numbers = #tpu.dot_dimension_numbers<[1], [0], [0], [1], [0, 0, 1, 1], [], []>} : vector<8x8xbf16>, vector<8x32xbf16>, vector<8x32xf32> -> vector<8x32xf32>
    %84 = tpu.concatenate %26, %45, %64, %83 in 1 : vector<8x32xf32>, vector<8x32xf32>, vector<8x32xf32>, vector<8x32xf32> -> vector<8x128xf32>
    %85 = arith.truncf %84 : vector<8x128xf32> to vector<8x128xbf16>
    %c0_44 = arith.constant 0 : index
    %c0_45 = arith.constant 0 : index
    %86 = vector.load %arg6[%c0_44, %c0_45] : memref<8x128xbf16, #tpu.memory_space<vmem>>, vector<8x128xbf16>
    tpu.vector_store %arg6[%c0_44, %c0_45], %85 {strides = array<i32>} : memref<8x128xbf16, #tpu.memory_space<vmem>>, vector<8x128xbf16>,
    return
  }
  func.func @transform_0(%arg0: i32, %arg1: i32) -> (i32, i32) {
    %c0_i32 = arith.constant 0 : i32
    return %arg0, %arg1 : i32, i32
  }
  func.func @transform_1(%arg0: i32, %arg1: i32) -> (i32, i32) {
    %c1_i32 = arith.constant 1 : i32
    %0 = arith.addi %c1_i32, %arg1 : i32
    %c0_i32 = arith.constant 0 : i32
    return %arg0, %0 : i32, i32
  }
  func.func @transform_2(%arg0: i32, %arg1: i32) -> (i32, i32) {
    %c2_i32 = arith.constant 2 : i32
    %0 = arith.addi %c2_i32, %arg1 : i32
    %c0_i32 = arith.constant 0 : i32
    return %arg0, %0 : i32, i32
  }
  func.func @transform_3(%arg0: i32, %arg1: i32) -> (i32, i32, i32) {
    %c0_i32 = arith.constant 0 : i32
    %c0_i32_0 = arith.constant 0 : i32
    %c0_i32_1 = arith.constant 0 : i32
    return %arg0, %c0_i32, %c0_i32_0 : i32, i32, i32
  }
  func.func @transform_4(%arg0: i32, %arg1: i32) -> (i32, i32) {
    %c0_i32 = arith.constant 0 : i32
    return %arg0, %arg1 : i32, i32
  }
}

module attributes {stable_mosaic.version = 11 : i64} {
  func.func @_dense_ln_kernel(%arg0: i32, %arg1: i32, %arg2: memref<16x128xbf16, #tpu.memory_space<vmem>>, %arg3: memref<128x128xbf16, #tpu.memory_space<vmem>>, %arg4: memref<1x128xf32, #tpu.memory_space<vmem>>, %arg5: memref<16x128xbf16, #tpu.memory_space<vmem>>, %arg6: memref<1x128xf32, #tpu.memory_space<vmem>>, %arg7: memref<1x128xf32, #tpu.memory_space<vmem>>, %arg8: memref<16x128xbf16, #tpu.memory_space<vmem>>, %arg9: memref<16x128xf32, #tpu.memory_space<vmem>>) attributes {dimension_semantics = [#tpu.dimension_semantics<parallel>, #tpu.dimension_semantics<arbitrary>], iteration_bounds = array<i64: 1, 1>, scalar_prefetch = 0 : i64, scratch_operands = 1 : i64, tpu.core_type = #tpu.core_type<tc>, window_params = [{transform_indices = @transform_0, window_bounds = array<i64: 16, 128>}, {transform_indices = @transform_1, window_bounds = array<i64: 128, 128>}, {pipeline_mode = #tpu.pipeline_mode<synchronous>, transform_indices = @transform_2, window_bounds = array<i64: 1, 128>}, {transform_indices = @transform_3, window_bounds = array<i64: 16, 128>}, {pipeline_mode = #tpu.pipeline_mode<synchronous>, transform_indices = @transform_4, window_bounds = array<i64: 1, 128>}, {pipeline_mode = #tpu.pipeline_mode<synchronous>, transform_indices = @transform_5, window_bounds = array<i64: 1, 128>}, {transform_indices = @transform_6, window_bounds = array<i64: 16, 128>}]} {
    %c0_i32 = arith.constant 0 : i32
    %0 = arith.cmpi eq, %arg1, %c0_i32 : i32
    %1 = arith.extui %0 : i1 to i32
    %c0_i32_0 = arith.constant 0 : i32
    %2 = arith.cmpi ne, %1, %c0_i32_0 : i32
    scf.if %2 {
      %cst_10 = arith.constant 0.000000e+00 : f32
      %12 = vector.broadcast %cst_10 : f32 to vector<16x128xf32>
      %c0_11 = arith.constant 0 : index
      %c0_12 = arith.constant 0 : index
      %13 = vector.load %arg9[%c0_11, %c0_12] : memref<16x128xf32, #tpu.memory_space<vmem>>, vector<16x128xf32>
      tpu.vector_store %arg9[%c0_11, %c0_12], %12 {strides = array<i32>} : memref<16x128xf32, #tpu.memory_space<vmem>>, vector<16x128xf32>,
    } else {
    }
    %c0 = arith.constant 0 : index
    %c0_1 = arith.constant 0 : index
    %3 = vector.load %arg9[%c0, %c0_1] : memref<16x128xf32, #tpu.memory_space<vmem>>, vector<16x128xf32>
    %c0_2 = arith.constant 0 : index
    %c0_3 = arith.constant 0 : index
    %4 = vector.load %arg2[%c0_2, %c0_3] : memref<16x128xbf16, #tpu.memory_space<vmem>>, vector<16x128xbf16>
    %c0_4 = arith.constant 0 : index
    %c0_5 = arith.constant 0 : index
    %5 = vector.load %arg3[%c0_4, %c0_5] : memref<128x128xbf16, #tpu.memory_space<vmem>>, vector<128x128xbf16>
    %cst = arith.constant dense<0.000000e+00> : vector<16x128xf32>
    %6 = tpu.matmul %4, %5, %cst {dimension_numbers = #tpu.dot_dimension_numbers<[1], [0], [0], [1], [0, 0, 1, 1], [], []>} : vector<16x128xbf16>, vector<128x128xbf16>, vector<16x128xf32> -> vector<16x128xf32>
    %7 = arith.addf %3, %6 : vector<16x128xf32>
    %c0_6 = arith.constant 0 : index
    %c0_7 = arith.constant 0 : index
    %8 = vector.load %arg9[%c0_6, %c0_7] : memref<16x128xf32, #tpu.memory_space<vmem>>, vector<16x128xf32>
    tpu.vector_store %arg9[%c0_6, %c0_7], %7 {strides = array<i32>} : memref<16x128xf32, #tpu.memory_space<vmem>>, vector<16x128xf32>,
    %c0_i32_8 = arith.constant 0 : i32
    %9 = arith.cmpi eq, %arg1, %c0_i32_8 : i32
    %10 = arith.extui %9 : i1 to i32
    %c0_i32_9 = arith.constant 0 : i32
    %11 = arith.cmpi ne, %10, %c0_i32_9 : i32
    scf.if %11 {
      %c0_10 = arith.constant 0 : index
      %c0_11 = arith.constant 0 : index
      %12 = vector.load %arg9[%c0_10, %c0_11] : memref<16x128xf32, #tpu.memory_space<vmem>>, vector<16x128xf32>
      %c0_12 = arith.constant 0 : index
      %c0_13 = arith.constant 0 : index
      %13 = vector.load %arg4[%c0_12, %c0_13] : memref<1x128xf32, #tpu.memory_space<vmem>>, vector<1x128xf32>
      %14 = vector.broadcast %13 : vector<1x128xf32> to vector<16x128xf32>
      %15 = arith.addf %12, %14 : vector<16x128xf32>
      %c0_14 = arith.constant 0 : index
      %c0_15 = arith.constant 0 : index
      %16 = vector.load %arg5[%c0_14, %c0_15] : memref<16x128xbf16, #tpu.memory_space<vmem>>, vector<16x128xbf16>
      %17 = arith.extf %16 : vector<16x128xbf16> to vector<16x128xf32>
      %18 = arith.addf %15, %17 : vector<16x128xf32>
      %cst_16 = arith.constant dense<0.000000e+00> : vector<16xf32>
      %19 = vector.multi_reduction <add>, %18, %cst_16 [1] : vector<16x128xf32> to vector<16xf32>
      %20 = vector.shape_cast %19 : vector<16xf32> to vector<16x1xf32>
      %cst_17 = arith.constant 1.280000e+02 : f32
      %21 = vector.broadcast %cst_17 : f32 to vector<16x1xf32>
      %22 = arith.divf %20, %21 : vector<16x1xf32>
      %23 = vector.broadcast %22 : vector<16x1xf32> to vector<16x128xf32>
      %24 = arith.subf %18, %23 : vector<16x128xf32>
      %25 = arith.mulf %24, %24 : vector<16x128xf32>
      %cst_18 = arith.constant dense<0.000000e+00> : vector<16xf32>
      %26 = vector.multi_reduction <add>, %25, %cst_18 [1] : vector<16x128xf32> to vector<16xf32>
      %27 = vector.shape_cast %26 : vector<16xf32> to vector<16x1xf32>
      %cst_19 = arith.constant 1.280000e+02 : f32
      %28 = vector.broadcast %cst_19 : f32 to vector<16x1xf32>
      %29 = arith.divf %27, %28 : vector<16x1xf32>
      %30 = vector.broadcast %22 : vector<16x1xf32> to vector<16x128xf32>
      %31 = arith.subf %18, %30 : vector<16x128xf32>
      %cst_20 = arith.constant 9.99999996E-13 : f32
      %32 = vector.broadcast %cst_20 : f32 to vector<16x1xf32>
      %33 = arith.addf %29, %32 : vector<16x1xf32>
      %34 = math.rsqrt %33 : vector<16x1xf32>
      %35 = vector.broadcast %34 : vector<16x1xf32> to vector<16x128xf32>
      %36 = arith.mulf %31, %35 : vector<16x128xf32>
      %c0_21 = arith.constant 0 : index
      %c0_22 = arith.constant 0 : index
      %37 = vector.load %arg6[%c0_21, %c0_22] : memref<1x128xf32, #tpu.memory_space<vmem>>, vector<1x128xf32>
      %38 = vector.broadcast %37 : vector<1x128xf32> to vector<16x128xf32>
      %39 = arith.mulf %36, %38 : vector<16x128xf32>
      %c0_23 = arith.constant 0 : index
      %c0_24 = arith.constant 0 : index
      %40 = vector.load %arg7[%c0_23, %c0_24] : memref<1x128xf32, #tpu.memory_space<vmem>>, vector<1x128xf32>
      %41 = vector.broadcast %40 : vector<1x128xf32> to vector<16x128xf32>
      %42 = arith.addf %39, %41 : vector<16x128xf32>
      %43 = arith.truncf %42 : vector<16x128xf32> to vector<16x128xbf16>
      %c0_25 = arith.constant 0 : index
      %c0_26 = arith.constant 0 : index
      %44 = vector.load %arg8[%c0_25, %c0_26] : memref<16x128xbf16, #tpu.memory_space<vmem>>, vector<16x128xbf16>
      tpu.vector_store %arg8[%c0_25, %c0_26], %43 {strides = array<i32>} : memref<16x128xbf16, #tpu.memory_space<vmem>>, vector<16x128xbf16>,
    } else {
    }
    return
  }
  func.func @transform_0(%arg0: i32, %arg1: i32) -> (i32, i32) {
    %c0_i32 = arith.constant 0 : i32
    return %arg0, %arg1 : i32, i32
  }
  func.func @transform_1(%arg0: i32, %arg1: i32) -> (i32, i32) {
    %c0_i32 = arith.constant 0 : i32
    %c0_i32_0 = arith.constant 0 : i32
    return %arg1, %c0_i32 : i32, i32
  }
  func.func @transform_2(%arg0: i32, %arg1: i32) -> (i32, i32) {
    %c0_i32 = arith.constant 0 : i32
    %c0_i32_0 = arith.constant 0 : i32
    %c0_i32_1 = arith.constant 0 : i32
    return %c0_i32, %c0_i32_0 : i32, i32
  }
  func.func @transform_3(%arg0: i32, %arg1: i32) -> (i32, i32) {
    %c0_i32 = arith.constant 0 : i32
    %c0_i32_0 = arith.constant 0 : i32
    return %arg0, %c0_i32 : i32, i32
  }
  func.func @transform_4(%arg0: i32, %arg1: i32) -> (i32, i32) {
    %c0_i32 = arith.constant 0 : i32
    %c0_i32_0 = arith.constant 0 : i32
    %c0_i32_1 = arith.constant 0 : i32
    return %c0_i32, %c0_i32_0 : i32, i32
  }
  func.func @transform_5(%arg0: i32, %arg1: i32) -> (i32, i32) {
    %c0_i32 = arith.constant 0 : i32
    %c0_i32_0 = arith.constant 0 : i32
    %c0_i32_1 = arith.constant 0 : i32
    return %c0_i32, %c0_i32_0 : i32, i32
  }
  func.func @transform_6(%arg0: i32, %arg1: i32) -> (i32, i32) {
    %c0_i32 = arith.constant 0 : i32
    %c0_i32_0 = arith.constant 0 : i32
    return %arg0, %c0_i32 : i32, i32
  }
}

module attributes {stable_mosaic.version = 11 : i64} {
  func.func @_dense_kernel(%arg0: i32, %arg1: i32, %arg2: i32, %arg3: memref<16x128xbf16, #tpu.memory_space<vmem>>, %arg4: memref<128x256xbf16, #tpu.memory_space<vmem>>, %arg5: memref<1x256xf32, #tpu.memory_space<vmem>>, %arg6: memref<16x256xbf16, #tpu.memory_space<vmem>>, %arg7: memref<16x256xf32, #tpu.memory_space<vmem>>) attributes {dimension_semantics = [#tpu.dimension_semantics<parallel>, #tpu.dimension_semantics<parallel>, #tpu.dimension_semantics<arbitrary>], iteration_bounds = array<i64: 1, 1, 1>, scalar_prefetch = 0 : i64, scratch_operands = 1 : i64, tpu.core_type = #tpu.core_type<tc>, window_params = [{transform_indices = @transform_0, window_bounds = array<i64: 16, 128>}, {transform_indices = @transform_1, window_bounds = array<i64: 128, 256>}, {transform_indices = @transform_2, window_bounds = array<i64: 1, 256>}, {transform_indices = @transform_3, window_bounds = array<i64: 16, 256>}]} {
    %c0_i32 = arith.constant 0 : i32
    %0 = arith.cmpi eq, %arg2, %c0_i32 : i32
    %1 = arith.extui %0 : i1 to i32
    %c0_i32_0 = arith.constant 0 : i32
    %2 = arith.cmpi ne, %1, %c0_i32_0 : i32
    scf.if %2 {
      %cst_10 = arith.constant 0.000000e+00 : f32
      %12 = vector.broadcast %cst_10 : f32 to vector<16x256xf32>
      %c0_11 = arith.constant 0 : index
      %c0_12 = arith.constant 0 : index
      %13 = vector.load %arg7[%c0_11, %c0_12] : memref<16x256xf32, #tpu.memory_space<vmem>>, vector<16x256xf32>
      tpu.vector_store %arg7[%c0_11, %c0_12], %12 {strides = array<i32>} : memref<16x256xf32, #tpu.memory_space<vmem>>, vector<16x256xf32>,
    } else {
    }
    %c0 = arith.constant 0 : index
    %c0_1 = arith.constant 0 : index
    %3 = vector.load %arg7[%c0, %c0_1] : memref<16x256xf32, #tpu.memory_space<vmem>>, vector<16x256xf32>
    %c0_2 = arith.constant 0 : index
    %c0_3 = arith.constant 0 : index
    %4 = vector.load %arg3[%c0_2, %c0_3] : memref<16x128xbf16, #tpu.memory_space<vmem>>, vector<16x128xbf16>
    %c0_4 = arith.constant 0 : index
    %c0_5 = arith.constant 0 : index
    %5 = vector.load %arg4[%c0_4, %c0_5] : memref<128x256xbf16, #tpu.memory_space<vmem>>, vector<128x256xbf16>
    %cst = arith.constant dense<0.000000e+00> : vector<16x256xf32>
    %6 = tpu.matmul %4, %5, %cst {dimension_numbers = #tpu.dot_dimension_numbers<[1], [0], [0], [1], [0, 0, 1, 1], [], []>} : vector<16x128xbf16>, vector<128x256xbf16>, vector<16x256xf32> -> vector<16x256xf32>
    %7 = arith.addf %3, %6 : vector<16x256xf32>
    %c0_6 = arith.constant 0 : index
    %c0_7 = arith.constant 0 : index
    %8 = vector.load %arg7[%c0_6, %c0_7] : memref<16x256xf32, #tpu.memory_space<vmem>>, vector<16x256xf32>
    tpu.vector_store %arg7[%c0_6, %c0_7], %7 {strides = array<i32>} : memref<16x256xf32, #tpu.memory_space<vmem>>, vector<16x256xf32>,
    %c0_i32_8 = arith.constant 0 : i32
    %9 = arith.cmpi eq, %arg2, %c0_i32_8 : i32
    %10 = arith.extui %9 : i1 to i32
    %c0_i32_9 = arith.constant 0 : i32
    %11 = arith.cmpi ne, %10, %c0_i32_9 : i32
    scf.if %11 {
      %c0_10 = arith.constant 0 : index
      %c0_11 = arith.constant 0 : index
      %12 = vector.load %arg7[%c0_10, %c0_11] : memref<16x256xf32, #tpu.memory_space<vmem>>, vector<16x256xf32>
      %c0_12 = arith.constant 0 : index
      %c0_13 = arith.constant 0 : index
      %13 = vector.load %arg5[%c0_12, %c0_13] : memref<1x256xf32, #tpu.memory_space<vmem>>, vector<1x256xf32>
      %14 = vector.broadcast %13 : vector<1x256xf32> to vector<16x256xf32>
      %15 = arith.addf %12, %14 : vector<16x256xf32>
      %16 = arith.mulf %15, %15 : vector<16x256xf32>
      %17 = arith.mulf %15, %16 : vector<16x256xf32>
      %cst_14 = arith.constant 4.471500e-02 : f32
      %18 = vector.broadcast %cst_14 : f32 to vector<16x256xf32>
      %19 = arith.mulf %18, %17 : vector<16x256xf32>
      %20 = arith.addf %15, %19 : vector<16x256xf32>
      %cst_15 = arith.constant 0.797884583 : f32
      %21 = vector.broadcast %cst_15 : f32 to vector<16x256xf32>
      %22 = arith.mulf %21, %20 : vector<16x256xf32>
      %23 = math.tanh %22 : vector<16x256xf32>
      %cst_16 = arith.constant 1.000000e+00 : f32
      %24 = vector.broadcast %cst_16 : f32 to vector<16x256xf32>
      %25 = arith.addf %24, %23 : vector<16x256xf32>
      %cst_17 = arith.constant 5.000000e-01 : f32
      %26 = vector.broadcast %cst_17 : f32 to vector<16x256xf32>
      %27 = arith.mulf %26, %25 : vector<16x256xf32>
      %28 = arith.mulf %15, %27 : vector<16x256xf32>
      %29 = arith.truncf %28 : vector<16x256xf32> to vector<16x256xbf16>
      %c0_18 = arith.constant 0 : index
      %c0_19 = arith.constant 0 : index
      %30 = vector.load %arg6[%c0_18, %c0_19] : memref<16x256xbf16, #tpu.memory_space<vmem>>, vector<16x256xbf16>
      tpu.vector_store %arg6[%c0_18, %c0_19], %29 {strides = array<i32>} : memref<16x256xbf16, #tpu.memory_space<vmem>>, vector<16x256xbf16>,
    } else {
    }
    return
  }
  func.func @transform_0(%arg0: i32, %arg1: i32, %arg2: i32) -> (i32, i32) {
    %c0_i32 = arith.constant 0 : i32
    return %arg0, %arg2 : i32, i32
  }
  func.func @transform_1(%arg0: i32, %arg1: i32, %arg2: i32) -> (i32, i32) {
    %c0_i32 = arith.constant 0 : i32
    return %arg2, %arg1 : i32, i32
  }
  func.func @transform_2(%arg0: i32, %arg1: i32, %arg2: i32) -> (i32, i32) {
    %c0_i32 = arith.constant 0 : i32
    %c0_i32_0 = arith.constant 0 : i32
    return %c0_i32, %arg1 : i32, i32
  }
  func.func @transform_3(%arg0: i32, %arg1: i32, %arg2: i32) -> (i32, i32) {
    %c0_i32 = arith.constant 0 : i32
    return %arg0, %arg1 : i32, i32
  }
}

module attributes {stable_mosaic.version = 11 : i64} {
  func.func @_dense_kernel(%arg0: i32, %arg1: i32, %arg2: i32, %arg3: memref<2x128xbf16, #tpu.memory_space<vmem>>, %arg4: memref<128x128xbf16, #tpu.memory_space<vmem>>, %arg5: memref<1x128xf32, #tpu.memory_space<vmem>>, %arg6: memref<2x128xbf16, #tpu.memory_space<vmem>>, %arg7: memref<2x128xf32, #tpu.memory_space<vmem>>) attributes {dimension_semantics = [#tpu.dimension_semantics<parallel>, #tpu.dimension_semantics<parallel>, #tpu.dimension_semantics<arbitrary>], iteration_bounds = array<i64: 1, 1, 1>, scalar_prefetch = 0 : i64, scratch_operands = 1 : i64, tpu.core_type = #tpu.core_type<tc>, window_params = [{transform_indices = @transform_0, window_bounds = array<i64: 2, 128>}, {transform_indices = @transform_1, window_bounds = array<i64: 128, 128>}, {transform_indices = @transform_2, window_bounds = array<i64: 1, 128>}, {transform_indices = @transform_3, window_bounds = array<i64: 2, 128>}]} {
    %c0_i32 = arith.constant 0 : i32
    %0 = arith.cmpi eq, %arg2, %c0_i32 : i32
    %1 = arith.extui %0 : i1 to i32
    %c0_i32_0 = arith.constant 0 : i32
    %2 = arith.cmpi ne, %1, %c0_i32_0 : i32
    scf.if %2 {
      %cst_10 = arith.constant 0.000000e+00 : f32
      %12 = vector.broadcast %cst_10 : f32 to vector<2x128xf32>
      %c0_11 = arith.constant 0 : index
      %c0_12 = arith.constant 0 : index
      %13 = vector.load %arg7[%c0_11, %c0_12] : memref<2x128xf32, #tpu.memory_space<vmem>>, vector<2x128xf32>
      tpu.vector_store %arg7[%c0_11, %c0_12], %12 {strides = array<i32>} : memref<2x128xf32, #tpu.memory_space<vmem>>, vector<2x128xf32>,
    } else {
    }
    %c0 = arith.constant 0 : index
    %c0_1 = arith.constant 0 : index
    %3 = vector.load %arg7[%c0, %c0_1] : memref<2x128xf32, #tpu.memory_space<vmem>>, vector<2x128xf32>
    %c0_2 = arith.constant 0 : index
    %c0_3 = arith.constant 0 : index
    %4 = vector.load %arg3[%c0_2, %c0_3] : memref<2x128xbf16, #tpu.memory_space<vmem>>, vector<2x128xbf16>
    %c0_4 = arith.constant 0 : index
    %c0_5 = arith.constant 0 : index
    %5 = vector.load %arg4[%c0_4, %c0_5] : memref<128x128xbf16, #tpu.memory_space<vmem>>, vector<128x128xbf16>
    %cst = arith.constant dense<0.000000e+00> : vector<2x128xf32>
    %6 = tpu.matmul %4, %5, %cst {dimension_numbers = #tpu.dot_dimension_numbers<[1], [0], [0], [1], [0, 0, 1, 1], [], []>} : vector<2x128xbf16>, vector<128x128xbf16>, vector<2x128xf32> -> vector<2x128xf32>
    %7 = arith.addf %3, %6 : vector<2x128xf32>
    %c0_6 = arith.constant 0 : index
    %c0_7 = arith.constant 0 : index
    %8 = vector.load %arg7[%c0_6, %c0_7] : memref<2x128xf32, #tpu.memory_space<vmem>>, vector<2x128xf32>
    tpu.vector_store %arg7[%c0_6, %c0_7], %7 {strides = array<i32>} : memref<2x128xf32, #tpu.memory_space<vmem>>, vector<2x128xf32>,
    %c0_i32_8 = arith.constant 0 : i32
    %9 = arith.cmpi eq, %arg2, %c0_i32_8 : i32
    %10 = arith.extui %9 : i1 to i32
    %c0_i32_9 = arith.constant 0 : i32
    %11 = arith.cmpi ne, %10, %c0_i32_9 : i32
    scf.if %11 {
      %c0_10 = arith.constant 0 : index
      %c0_11 = arith.constant 0 : index
      %12 = vector.load %arg7[%c0_10, %c0_11] : memref<2x128xf32, #tpu.memory_space<vmem>>, vector<2x128xf32>
      %c0_12 = arith.constant 0 : index
      %c0_13 = arith.constant 0 : index
      %13 = vector.load %arg5[%c0_12, %c0_13] : memref<1x128xf32, #tpu.memory_space<vmem>>, vector<1x128xf32>
      %14 = vector.broadcast %13 : vector<1x128xf32> to vector<2x128xf32>
      %15 = arith.addf %12, %14 : vector<2x128xf32>
      %cst_14 = arith.constant 0.000000e+00 : f32
      %16 = vector.broadcast %cst_14 : f32 to vector<2x128xf32>
      %17 = arith.maximumf %15, %16 : vector<2x128xf32>
      %18 = arith.truncf %17 : vector<2x128xf32> to vector<2x128xbf16>
      %c0_15 = arith.constant 0 : index
      %c0_16 = arith.constant 0 : index
      %19 = vector.load %arg6[%c0_15, %c0_16] : memref<2x128xbf16, #tpu.memory_space<vmem>>, vector<2x128xbf16>
      tpu.vector_store %arg6[%c0_15, %c0_16], %18 {strides = array<i32>} : memref<2x128xbf16, #tpu.memory_space<vmem>>, vector<2x128xbf16>,
    } else {
    }
    return
  }
  func.func @transform_0(%arg0: i32, %arg1: i32, %arg2: i32) -> (i32, i32) {
    %c0_i32 = arith.constant 0 : i32
    return %arg0, %arg2 : i32, i32
  }
  func.func @transform_1(%arg0: i32, %arg1: i32, %arg2: i32) -> (i32, i32) {
    %c0_i32 = arith.constant 0 : i32
    return %arg2, %arg1 : i32, i32
  }
  func.func @transform_2(%arg0: i32, %arg1: i32, %arg2: i32) -> (i32, i32) {
    %c0_i32 = arith.constant 0 : i32
    %c0_i32_0 = arith.constant 0 : i32
    return %c0_i32, %arg1 : i32, i32
  }
  func.func @transform_3(%arg0: i32, %arg1: i32, %arg2: i32) -> (i32, i32) {
    %c0_i32 = arith.constant 0 : i32
    return %arg0, %arg1 : i32, i32
  }
}

module attributes {stable_mosaic.version = 11 : i64} {
  func.func @_dense_kernel(%arg0: i32, %arg1: i32, %arg2: i32, %arg3: memref<2x128xbf16, #tpu.memory_space<vmem>>, %arg4: memref<128x128xbf16, #tpu.memory_space<vmem>>, %arg5: memref<1x128xf32, #tpu.memory_space<vmem>>, %arg6: memref<2x128xf32, #tpu.memory_space<vmem>>, %arg7: memref<2x128xf32, #tpu.memory_space<vmem>>) attributes {dimension_semantics = [#tpu.dimension_semantics<parallel>, #tpu.dimension_semantics<parallel>, #tpu.dimension_semantics<arbitrary>], iteration_bounds = array<i64: 1, 1, 1>, scalar_prefetch = 0 : i64, scratch_operands = 1 : i64, tpu.core_type = #tpu.core_type<tc>, window_params = [{transform_indices = @transform_0, window_bounds = array<i64: 2, 128>}, {transform_indices = @transform_1, window_bounds = array<i64: 128, 128>}, {transform_indices = @transform_2, window_bounds = array<i64: 1, 128>}, {transform_indices = @transform_3, window_bounds = array<i64: 2, 128>}]} {
    %c0_i32 = arith.constant 0 : i32
    %0 = arith.cmpi eq, %arg2, %c0_i32 : i32
    %1 = arith.extui %0 : i1 to i32
    %c0_i32_0 = arith.constant 0 : i32
    %2 = arith.cmpi ne, %1, %c0_i32_0 : i32
    scf.if %2 {
      %cst_10 = arith.constant 0.000000e+00 : f32
      %12 = vector.broadcast %cst_10 : f32 to vector<2x128xf32>
      %c0_11 = arith.constant 0 : index
      %c0_12 = arith.constant 0 : index
      %13 = vector.load %arg7[%c0_11, %c0_12] : memref<2x128xf32, #tpu.memory_space<vmem>>, vector<2x128xf32>
      tpu.vector_store %arg7[%c0_11, %c0_12], %12 {strides = array<i32>} : memref<2x128xf32, #tpu.memory_space<vmem>>, vector<2x128xf32>,
    } else {
    }
    %c0 = arith.constant 0 : index
    %c0_1 = arith.constant 0 : index
    %3 = vector.load %arg7[%c0, %c0_1] : memref<2x128xf32, #tpu.memory_space<vmem>>, vector<2x128xf32>
    %c0_2 = arith.constant 0 : index
    %c0_3 = arith.constant 0 : index
    %4 = vector.load %arg3[%c0_2, %c0_3] : memref<2x128xbf16, #tpu.memory_space<vmem>>, vector<2x128xbf16>
    %c0_4 = arith.constant 0 : index
    %c0_5 = arith.constant 0 : index
    %5 = vector.load %arg4[%c0_4, %c0_5] : memref<128x128xbf16, #tpu.memory_space<vmem>>, vector<128x128xbf16>
    %cst = arith.constant dense<0.000000e+00> : vector<2x128xf32>
    %6 = tpu.matmul %4, %5, %cst {dimension_numbers = #tpu.dot_dimension_numbers<[1], [0], [0], [1], [0, 0, 1, 1], [], []>} : vector<2x128xbf16>, vector<128x128xbf16>, vector<2x128xf32> -> vector<2x128xf32>
    %7 = arith.addf %3, %6 : vector<2x128xf32>
    %c0_6 = arith.constant 0 : index
    %c0_7 = arith.constant 0 : index
    %8 = vector.load %arg7[%c0_6, %c0_7] : memref<2x128xf32, #tpu.memory_space<vmem>>, vector<2x128xf32>
    tpu.vector_store %arg7[%c0_6, %c0_7], %7 {strides = array<i32>} : memref<2x128xf32, #tpu.memory_space<vmem>>, vector<2x128xf32>,
    %c0_i32_8 = arith.constant 0 : i32
    %9 = arith.cmpi eq, %arg2, %c0_i32_8 : i32
    %10 = arith.extui %9 : i1 to i32
    %c0_i32_9 = arith.constant 0 : i32
    %11 = arith.cmpi ne, %10, %c0_i32_9 : i32
    scf.if %11 {
      %c0_10 = arith.constant 0 : index
      %c0_11 = arith.constant 0 : index
      %12 = vector.load %arg7[%c0_10, %c0_11] : memref<2x128xf32, #tpu.memory_space<vmem>>, vector<2x128xf32>
      %c0_12 = arith.constant 0 : index
      %c0_13 = arith.constant 0 : index
      %13 = vector.load %arg5[%c0_12, %c0_13] : memref<1x128xf32, #tpu.memory_space<vmem>>, vector<1x128xf32>
      %14 = vector.broadcast %13 : vector<1x128xf32> to vector<2x128xf32>
      %15 = arith.addf %12, %14 : vector<2x128xf32>
      %c0_14 = arith.constant 0 : index
      %c0_15 = arith.constant 0 : index
      %16 = vector.load %arg6[%c0_14, %c0_15] : memref<2x128xf32, #tpu.memory_space<vmem>>, vector<2x128xf32>
      tpu.vector_store %arg6[%c0_14, %c0_15], %15 {strides = array<i32>} : memref<2x128xf32, #tpu.memory_space<vmem>>, vector<2x128xf32>,
    } else {
    }
    return
  }
  func.func @transform_0(%arg0: i32, %arg1: i32, %arg2: i32) -> (i32, i32) {
    %c0_i32 = arith.constant 0 : i32
    return %arg0, %arg2 : i32, i32
  }
  func.func @transform_1(%arg0: i32, %arg1: i32, %arg2: i32) -> (i32, i32) {
    %c0_i32 = arith.constant 0 : i32
    return %arg2, %arg1 : i32, i32
  }
  func.func @transform_2(%arg0: i32, %arg1: i32, %arg2: i32) -> (i32, i32) {
    %c0_i32 = arith.constant 0 : i32
    %c0_i32_0 = arith.constant 0 : i32
    return %c0_i32, %arg1 : i32, i32
  }
  func.func @transform_3(%arg0: i32, %arg1: i32, %arg2: i32) -> (i32, i32) {
    %c0_i32 = arith.constant 0 : i32
    return %arg0, %arg1 : i32, i32
  }
}

module attributes {stable_mosaic.version = 11 : i64} {
  func.func @_dense_ln_kernel(%arg0: i32, %arg1: i32, %arg2: memref<16x256xbf16, #tpu.memory_space<vmem>>, %arg3: memref<256x128xbf16, #tpu.memory_space<vmem>>, %arg4: memref<1x128xf32, #tpu.memory_space<vmem>>, %arg5: memref<16x128xbf16, #tpu.memory_space<vmem>>, %arg6: memref<1x128xf32, #tpu.memory_space<vmem>>, %arg7: memref<1x128xf32, #tpu.memory_space<vmem>>, %arg8: memref<16x128xbf16, #tpu.memory_space<vmem>>, %arg9: memref<16x128xf32, #tpu.memory_space<vmem>>) attributes {dimension_semantics = [#tpu.dimension_semantics<parallel>, #tpu.dimension_semantics<arbitrary>], iteration_bounds = array<i64: 1, 1>, scalar_prefetch = 0 : i64, scratch_operands = 1 : i64, tpu.core_type = #tpu.core_type<tc>, window_params = [{transform_indices = @transform_0, window_bounds = array<i64: 16, 256>}, {transform_indices = @transform_1, window_bounds = array<i64: 256, 128>}, {pipeline_mode = #tpu.pipeline_mode<synchronous>, transform_indices = @transform_2, window_bounds = array<i64: 1, 128>}, {transform_indices = @transform_3, window_bounds = array<i64: 16, 128>}, {pipeline_mode = #tpu.pipeline_mode<synchronous>, transform_indices = @transform_4, window_bounds = array<i64: 1, 128>}, {pipeline_mode = #tpu.pipeline_mode<synchronous>, transform_indices = @transform_5, window_bounds = array<i64: 1, 128>}, {transform_indices = @transform_6, window_bounds = array<i64: 16, 128>}]} {
    %c0_i32 = arith.constant 0 : i32
    %0 = arith.cmpi eq, %arg1, %c0_i32 : i32
    %1 = arith.extui %0 : i1 to i32
    %c0_i32_0 = arith.constant 0 : i32
    %2 = arith.cmpi ne, %1, %c0_i32_0 : i32
    scf.if %2 {
      %cst_10 = arith.constant 0.000000e+00 : f32
      %12 = vector.broadcast %cst_10 : f32 to vector<16x128xf32>
      %c0_11 = arith.constant 0 : index
      %c0_12 = arith.constant 0 : index
      %13 = vector.load %arg9[%c0_11, %c0_12] : memref<16x128xf32, #tpu.memory_space<vmem>>, vector<16x128xf32>
      tpu.vector_store %arg9[%c0_11, %c0_12], %12 {strides = array<i32>} : memref<16x128xf32, #tpu.memory_space<vmem>>, vector<16x128xf32>,
    } else {
    }
    %c0 = arith.constant 0 : index
    %c0_1 = arith.constant 0 : index
    %3 = vector.load %arg9[%c0, %c0_1] : memref<16x128xf32, #tpu.memory_space<vmem>>, vector<16x128xf32>
    %c0_2 = arith.constant 0 : index
    %c0_3 = arith.constant 0 : index
    %4 = vector.load %arg2[%c0_2, %c0_3] : memref<16x256xbf16, #tpu.memory_space<vmem>>, vector<16x256xbf16>
    %c0_4 = arith.constant 0 : index
    %c0_5 = arith.constant 0 : index
    %5 = vector.load %arg3[%c0_4, %c0_5] : memref<256x128xbf16, #tpu.memory_space<vmem>>, vector<256x128xbf16>
    %cst = arith.constant dense<0.000000e+00> : vector<16x128xf32>
    %6 = tpu.matmul %4, %5, %cst {dimension_numbers = #tpu.dot_dimension_numbers<[1], [0], [0], [1], [0, 0, 1, 1], [], []>} : vector<16x256xbf16>, vector<256x128xbf16>, vector<16x128xf32> -> vector<16x128xf32>
    %7 = arith.addf %3, %6 : vector<16x128xf32>
    %c0_6 = arith.constant 0 : index
    %c0_7 = arith.constant 0 : index
    %8 = vector.load %arg9[%c0_6, %c0_7] : memref<16x128xf32, #tpu.memory_space<vmem>>, vector<16x128xf32>
    tpu.vector_store %arg9[%c0_6, %c0_7], %7 {strides = array<i32>} : memref<16x128xf32, #tpu.memory_space<vmem>>, vector<16x128xf32>,
    %c0_i32_8 = arith.constant 0 : i32
    %9 = arith.cmpi eq, %arg1, %c0_i32_8 : i32
    %10 = arith.extui %9 : i1 to i32
    %c0_i32_9 = arith.constant 0 : i32
    %11 = arith.cmpi ne, %10, %c0_i32_9 : i32
    scf.if %11 {
      %c0_10 = arith.constant 0 : index
      %c0_11 = arith.constant 0 : index
      %12 = vector.load %arg9[%c0_10, %c0_11] : memref<16x128xf32, #tpu.memory_space<vmem>>, vector<16x128xf32>
      %c0_12 = arith.constant 0 : index
      %c0_13 = arith.constant 0 : index
      %13 = vector.load %arg4[%c0_12, %c0_13] : memref<1x128xf32, #tpu.memory_space<vmem>>, vector<1x128xf32>
      %14 = vector.broadcast %13 : vector<1x128xf32> to vector<16x128xf32>
      %15 = arith.addf %12, %14 : vector<16x128xf32>
      %c0_14 = arith.constant 0 : index
      %c0_15 = arith.constant 0 : index
      %16 = vector.load %arg5[%c0_14, %c0_15] : memref<16x128xbf16, #tpu.memory_space<vmem>>, vector<16x128xbf16>
      %17 = arith.extf %16 : vector<16x128xbf16> to vector<16x128xf32>
      %18 = arith.addf %15, %17 : vector<16x128xf32>
      %cst_16 = arith.constant dense<0.000000e+00> : vector<16xf32>
      %19 = vector.multi_reduction <add>, %18, %cst_16 [1] : vector<16x128xf32> to vector<16xf32>
      %20 = vector.shape_cast %19 : vector<16xf32> to vector<16x1xf32>
      %cst_17 = arith.constant 1.280000e+02 : f32
      %21 = vector.broadcast %cst_17 : f32 to vector<16x1xf32>
      %22 = arith.divf %20, %21 : vector<16x1xf32>
      %23 = vector.broadcast %22 : vector<16x1xf32> to vector<16x128xf32>
      %24 = arith.subf %18, %23 : vector<16x128xf32>
      %25 = arith.mulf %24, %24 : vector<16x128xf32>
      %cst_18 = arith.constant dense<0.000000e+00> : vector<16xf32>
      %26 = vector.multi_reduction <add>, %25, %cst_18 [1] : vector<16x128xf32> to vector<16xf32>
      %27 = vector.shape_cast %26 : vector<16xf32> to vector<16x1xf32>
      %cst_19 = arith.constant 1.280000e+02 : f32
      %28 = vector.broadcast %cst_19 : f32 to vector<16x1xf32>
      %29 = arith.divf %27, %28 : vector<16x1xf32>
      %30 = vector.broadcast %22 : vector<16x1xf32> to vector<16x128xf32>
      %31 = arith.subf %18, %30 : vector<16x128xf32>
      %cst_20 = arith.constant 9.99999996E-13 : f32
      %32 = vector.broadcast %cst_20 : f32 to vector<16x1xf32>
      %33 = arith.addf %29, %32 : vector<16x1xf32>
      %34 = math.rsqrt %33 : vector<16x1xf32>
      %35 = vector.broadcast %34 : vector<16x1xf32> to vector<16x128xf32>
      %36 = arith.mulf %31, %35 : vector<16x128xf32>
      %c0_21 = arith.constant 0 : index
      %c0_22 = arith.constant 0 : index
      %37 = vector.load %arg6[%c0_21, %c0_22] : memref<1x128xf32, #tpu.memory_space<vmem>>, vector<1x128xf32>
      %38 = vector.broadcast %37 : vector<1x128xf32> to vector<16x128xf32>
      %39 = arith.mulf %36, %38 : vector<16x128xf32>
      %c0_23 = arith.constant 0 : index
      %c0_24 = arith.constant 0 : index
      %40 = vector.load %arg7[%c0_23, %c0_24] : memref<1x128xf32, #tpu.memory_space<vmem>>, vector<1x128xf32>
      %41 = vector.broadcast %40 : vector<1x128xf32> to vector<16x128xf32>
      %42 = arith.addf %39, %41 : vector<16x128xf32>
      %43 = arith.truncf %42 : vector<16x128xf32> to vector<16x128xbf16>
      %c0_25 = arith.constant 0 : index
      %c0_26 = arith.constant 0 : index
      %44 = vector.load %arg8[%c0_25, %c0_26] : memref<16x128xbf16, #tpu.memory_space<vmem>>, vector<16x128xbf16>
      tpu.vector_store %arg8[%c0_25, %c0_26], %43 {strides = array<i32>} : memref<16x128xbf16, #tpu.memory_space<vmem>>, vector<16x128xbf16>,
    } else {
    }
    return
  }
  func.func @transform_0(%arg0: i32, %arg1: i32) -> (i32, i32) {
    %c0_i32 = arith.constant 0 : i32
    return %arg0, %arg1 : i32, i32
  }
  func.func @transform_1(%arg0: i32, %arg1: i32) -> (i32, i32) {
    %c0_i32 = arith.constant 0 : i32
    %c0_i32_0 = arith.constant 0 : i32
    return %arg1, %c0_i32 : i32, i32
  }
  func.func @transform_2(%arg0: i32, %arg1: i32) -> (i32, i32) {
    %c0_i32 = arith.constant 0 : i32
    %c0_i32_0 = arith.constant 0 : i32
    %c0_i32_1 = arith.constant 0 : i32
    return %c0_i32, %c0_i32_0 : i32, i32
  }
  func.func @transform_3(%arg0: i32, %arg1: i32) -> (i32, i32) {
    %c0_i32 = arith.constant 0 : i32
    %c0_i32_0 = arith.constant 0 : i32
    return %arg0, %c0_i32 : i32, i32
  }
  func.func @transform_4(%arg0: i32, %arg1: i32) -> (i32, i32) {
    %c0_i32 = arith.constant 0 : i32
    %c0_i32_0 = arith.constant 0 : i32
    %c0_i32_1 = arith.constant 0 : i32
    return %c0_i32, %c0_i32_0 : i32, i32
  }
  func.func @transform_5(%arg0: i32, %arg1: i32) -> (i32, i32) {
    %c0_i32 = arith.constant 0 : i32
    %c0_i32_0 = arith.constant 0 : i32
    %c0_i32_1 = arith.constant 0 : i32
    return %c0_i32, %c0_i32_0 : i32, i32
  }
  func.func @transform_6(%arg0: i32, %arg1: i32) -> (i32, i32) {
    %c0_i32 = arith.constant 0 : i32
    %c0_i32_0 = arith.constant 0 : i32
    return %arg0, %c0_i32 : i32, i32
  }
}

</mosaic_0001>

<llo_original>
// kernel: distilbert_classifier_forward.13
$region0: #{distilbert_classifier_forward.13}
  #allocation0 [shape = 'u32[]', space=smem, size = 0x4, offset = 0x4, fixed_abs, tag = 'smem constant byte address 0x4 - core index']
  #allocation1 [shape = 'u32[144,128]{1,0:T(1,128)}', space=vmem, size = 0x12000, scoped, tag = 'internal scratch']
  %s0 = inlined_call_operand.vmem [shape: f32[16,128], index: 0, kind: input, shape index: {}]
  %s1 = inlined_call_operand.vmem [shape: f32[1,128], index: 1, kind: input, shape index: {}]
  %s2 = inlined_call_operand.vmem [shape: f32[1,128], index: 2, kind: input, shape index: {}]
  %s3 = inlined_call_operand.vmem [shape: bf16[16,128], index: 3, kind: output, shape index: {}]
  %s4 = sld [smem:[#allocation0]]
  $region22: #{distilbert_classifier_forward.13} parent=0
    _
  %s6 = ssub.s32 1, %s4
  %s7 = scalar_select 0, %s6, %s4
  // Predicated region
  $region2: #{distilbert_classifier_forward.13} parent=0 // pred_check
    _
  $region3: #{distilbert_classifier_forward.13} parent=0 // pred_check_branch
    %9 = sbr.rel (0) target = $region5
  $region4: #{distilbert_classifier_forward.13} parent=0 // pred_region
    _
  $region5: #{distilbert_classifier_forward.13} parent=0 // pred_fallthru
    _
  // Predicated region
  $region6: #{distilbert_classifier_forward.13} parent=0 // pred_check
    _
  $region7: #{distilbert_classifier_forward.13} parent=0 // pred_check_branch
    %11 = sbr.rel (0) target = $region9
  $region8: #{distilbert_classifier_forward.13} parent=0 // pred_region
    _
  $region9: #{distilbert_classifier_forward.13} parent=0 // pred_fallthru
    _
  // Predicated region
  $region10: #{distilbert_classifier_forward.13} parent=0 // pred_check
    _
  $region11: #{distilbert_classifier_forward.13} parent=0 // pred_check_branch
    %13 = sbr.rel (0) target = $region13
  $region12: #{distilbert_classifier_forward.13} parent=0 // pred_region
    _
  $region13: #{distilbert_classifier_forward.13} parent=0 // pred_fallthru
    _
  %v14 = vld [vmem:[%s0] sm:$0xff]
  %v15 = vld [vmem:[%s0 + $0x8] sm:$0xff]
  %16 = vadd.xlane.f32.xlu0 %v14
  %v17 = vpop.xlane.xlu0 %16
  %18 = vadd.xlane.f32.xlu0 %v15
  %v19 = vpop.xlane.xlu0 %18
  %v20 = vrcp.pop 128.0
  %v21 = vmul.f32 %v17, %v20
  %v22 = vmul.f32 %v19, %v20
  %v23 = vsub.f32 %v14, %v21
  %v24 = vsub.f32 %v15, %v22
  %v25 = vmul.f32 %v23, %v23
  %v26 = vmul.f32 %v24, %v24
  %27 = vadd.xlane.f32.xlu0 %v25
  %v28 = vpop.xlane.xlu0 %27
  %29 = vadd.xlane.f32.xlu0 %v26
  %v30 = vpop.xlane.xlu0 %29
  %v31 = vmul.f32 %v28, %v20
  %v32 = vmul.f32 %v30, %v20
  %v33 = vadd.f32 %v31, 1e-12
  %v34 = vadd.f32 %v32, 1e-12
  %v35 = vrsqrt.pop %v33
  %v36 = vrsqrt.pop %v34
  %v37 = vmul.f32 %v23, %v35
  %v38 = vmul.f32 %v24, %v36
  %v39 = vld [vmem:[%s1] sm:$0x1]
  %v41 = vlaneseq
  %v42 = vshrl.u32 %v41, 7
  %v43 = vsub.s32 0, %v42
  %v44 = vrot.slane %v39, %v43
  %v46 = vmul.f32 %v37, %v44
  %v47 = vmul.f32 %v38, %v44
  %v48 = vld [vmem:[%s2] sm:$0x1]
  %v50 = vlaneseq
  %v51 = vshrl.u32 %v50, 7
  %v52 = vsub.s32 0, %v51
  %v53 = vrot.slane %v48, %v52
  %v55 = vadd.f32 %v46, %v53
  %v56 = vadd.f32 %v47, %v53
  %v57 = vpack.c.bf16 %v56, %v55
  %v59 = vunpack.c.l.b16 %v57
  %v60 = vunpack.c.h.b16 %v57
  %v61 = vpack.c.b16 %v59, %v59
  %v62 = vpack.c.b16 %v60, %v60
  %65 = vst [vmem:[%s3] sm:$0xf] %v61
  %66 = vst [vmem:[%s3 + $0x4] sm:$0xf] %v62
  // Predicated region
  $region14: #{distilbert_classifier_forward.13} parent=0 // pred_check
    _
  $region15: #{distilbert_classifier_forward.13} parent=0 // pred_check_branch
    %68 = sbr.rel (0) target = $region17
  $region16: #{distilbert_classifier_forward.13} parent=0 // pred_region
    _
  $region17: #{distilbert_classifier_forward.13} parent=0 // pred_fallthru
    _
  // Predicated region
  $region18: #{distilbert_classifier_forward.13} parent=0 // pred_check
    _
  $region19: #{distilbert_classifier_forward.13} parent=0 // pred_check_branch
    %70 = sbr.rel (0) target = $region21
  $region20: #{distilbert_classifier_forward.13} parent=0 // pred_region
    _
  $region21: #{distilbert_classifier_forward.13} parent=0 // pred_fallthru
    _

// kernel: distilbert_classifier_forward.16
$region0: #{distilbert_classifier_forward.16}
  #allocation0 [shape = 'u32[]', space=smem, size = 0x4, offset = 0x4, fixed_abs, tag = 'smem constant byte address 0x4 - core index']
  #allocation1 [shape = 'u32[144,128]{1,0:T(1,128)}', space=vmem, size = 0x12000, scoped, tag = 'internal scratch']
  #allocation2 [shape = 'f32[16,128]{1,0:T(8,128)}', space=vmem, size = 0x2000, scoped, tag = 'scratch operand']
  %s0 = inlined_call_operand.vmem [shape: bf16[16,128], index: 0, kind: input, shape index: {}]
  %s1 = inlined_call_operand.vmem [shape: bf16[128,128], index: 1, kind: input, shape index: {}]
  %s2 = inlined_call_operand.vmem [shape: f32[1,128], index: 2, kind: input, shape index: {}]
  %s3 = inlined_call_operand.vmem [shape: bf16[16,128], index: 3, kind: input, shape index: {}]
  %s4 = inlined_call_operand.vmem [shape: f32[1,128], index: 4, kind: input, shape index: {}]
  %s5 = inlined_call_operand.vmem [shape: f32[1,128], index: 5, kind: input, shape index: {}]
  %s6 = inlined_call_operand.vmem [shape: bf16[16,128], index: 6, kind: output, shape index: {}]
  %s7 = sld [smem:[#allocation0]]
  $region42: #{distilbert_classifier_forward.16} parent=0
    _
  %s9 = ssub.s32 1, %s7
  %s10 = scalar_select 0, %s9, %s7
  // Predicated region
  $region2: #{distilbert_classifier_forward.16} parent=0 // pred_check
    _
  $region3: #{distilbert_classifier_forward.16} parent=0 // pred_check_branch
    %12 = sbr.rel (0) target = $region5
  $region4: #{distilbert_classifier_forward.16} parent=0 // pred_region
    _
  $region5: #{distilbert_classifier_forward.16} parent=0 // pred_fallthru
    _
  // Predicated region
  $region6: #{distilbert_classifier_forward.16} parent=0 // pred_check
    _
  $region7: #{distilbert_classifier_forward.16} parent=0 // pred_check_branch
    %14 = sbr.rel (0) target = $region9
  $region8: #{distilbert_classifier_forward.16} parent=0 // pred_region
    _
  $region9: #{distilbert_classifier_forward.16} parent=0 // pred_fallthru
    _
  // Predicated region
  $region10: #{distilbert_classifier_forward.16} parent=0 // pred_check
    _
  $region11: #{distilbert_classifier_forward.16} parent=0 // pred_check_branch
    %16 = sbr.rel (0) target = $region13
  $region12: #{distilbert_classifier_forward.16} parent=0 // pred_region
    _
  $region13: #{distilbert_classifier_forward.16} parent=0 // pred_fallthru
    _
  // Predicated region
  $region14: #{distilbert_classifier_forward.16} parent=0 // pred_check
    _
  $region15: #{distilbert_classifier_forward.16} parent=0 // pred_check_branch
    %18 = sbr.rel (0) target = $region17
  $region16: #{distilbert_classifier_forward.16} parent=0 // pred_region
    _
  $region17: #{distilbert_classifier_forward.16} parent=0 // pred_fallthru
    _
  // Predicated region
  $region18: #{distilbert_classifier_forward.16} parent=0 // pred_check
    _
  $region19: #{distilbert_classifier_forward.16} parent=0 // pred_check_branch
    %20 = sbr.rel (0) target = $region21
  $region20: #{distilbert_classifier_forward.16} parent=0 // pred_region
    _
  $region21: #{distilbert_classifier_forward.16} parent=0 // pred_fallthru
    _
  // Predicated region
  $region22: #{distilbert_classifier_forward.16} parent=0 // pred_check
    _
  $region23: #{distilbert_classifier_forward.16} parent=0 // pred_check_branch
    %22 = sbr.rel (0) target = $region25
  $region24: #{distilbert_classifier_forward.16} parent=0 // pred_region
    _
  $region25: #{distilbert_classifier_forward.16} parent=0 // pred_fallthru
    _
  %p24 = scmp.eq.s32.totalorder 0, 0
  // Predicated region
  $region26: #{distilbert_classifier_forward.16} parent=0 // pred_check
    %p25 = pneg %p24
  $region27: #{distilbert_classifier_forward.16} parent=0 // pred_check_branch
    %27 = sbr.rel (%p25) target = $region29
  $region28: #{distilbert_classifier_forward.16} parent=0 // pred_region
    %28 = vst [vmem:[#allocation2] sm:$0xff] 0.0
    %29 = vst [vmem:[#allocation2 + $0x8] sm:$0xff] 0.0
  $region29: #{distilbert_classifier_forward.16} parent=0 // pred_fallthru
    _
  %v30 = vld [vmem:[#allocation2] sm:$0xff]
  %v31 = vld [vmem:[#allocation2 + $0x8] sm:$0xff]
  %v32 = vld [vmem:[%s0] sm:$0xf]
  %v33 = vld [vmem:[%s0 + $0x4] sm:$0xf]
  %v34 = vld [vmem:[%s1] sm:$0xf]
  %v35 = vld [vmem:[%s1 + $0x4] sm:$0xf]
  %v36 = vld [vmem:[%s1 + $0x8] sm:$0xf]
  %v37 = vld [vmem:[%s1 + $0xc] sm:$0xf]
  %v38 = vld [vmem:[%s1 + $0x10] sm:$0xf]
  %v39 = vld [vmem:[%s1 + $0x14] sm:$0xf]
  %v40 = vld [vmem:[%s1 + $0x18] sm:$0xf]
  %v41 = vld [vmem:[%s1 + $0x1c] sm:$0xf]
  %v42 = vld [vmem:[%s1 + $0x20] sm:$0xf]
  %v43 = vld [vmem:[%s1 + $0x24] sm:$0xf]
  %v44 = vld [vmem:[%s1 + $0x28] sm:$0xf]
  %v45 = vld [vmem:[%s1 + $0x2c] sm:$0xf]
  %v46 = vld [vmem:[%s1 + $0x30] sm:$0xf]
  %v47 = vld [vmem:[%s1 + $0x34] sm:$0xf]
  %v48 = vld [vmem:[%s1 + $0x38] sm:$0xf]
  %v49 = vld [vmem:[%s1 + $0x3c] sm:$0xf]
  %v52 = vunpack.c.l.b16 %v32
  %v53 = vunpack.c.l.b16 %v33
  %v54 = vpack.c.b16 %v53, %v52
  %v72 = vunpack.c.l.b16 %v34
  %v73 = vunpack.c.l.b16 %v35
  %v74 = vunpack.c.l.b16 %v36
  %v75 = vunpack.c.l.b16 %v37
  %v76 = vunpack.c.l.b16 %v38
  %v77 = vunpack.c.l.b16 %v39
  %v78 = vunpack.c.l.b16 %v40
  %v79 = vunpack.c.l.b16 %v41
  %v80 = vunpack.c.l.b16 %v42
  %v81 = vunpack.c.l.b16 %v43
  %v82 = vunpack.c.l.b16 %v44
  %v83 = vunpack.c.l.b16 %v45
  %v84 = vunpack.c.l.b16 %v46
  %v85 = vunpack.c.l.b16 %v47
  %v86 = vunpack.c.l.b16 %v48
  %v87 = vunpack.c.l.b16 %v49
  %v88 = vpack.c.b16 %v73, %v72
  %v89 = vpack.c.b16 %v75, %v74
  %v90 = vpack.c.b16 %v77, %v76
  %v91 = vpack.c.b16 %v79, %v78
  %v92 = vpack.c.b16 %v81, %v80
  %v93 = vpack.c.b16 %v83, %v82
  %v94 = vpack.c.b16 %v85, %v84
  %v95 = vpack.c.b16 %v87, %v86
  %104 = vmatprep.subr.bf16.mxu0 0
  %105 = vmatpush1.bf16.msra.mxu0 %v95
  %106 = vmatprep.subr.bf16.mxu0 0
  %107 = vmatpush1.bf16.msra.mxu0 %v94
  %108 = vmatprep.subr.bf16.mxu0 0
  %109 = vmatpush1.bf16.msra.mxu0 %v93
  %110 = vmatprep.subr.bf16.mxu0 0
  %111 = vmatpush1.bf16.msra.mxu0 %v92
  %112 = vmatprep.subr.bf16.mxu0 0
  %113 = vmatpush1.bf16.msra.mxu0 %v91
  %114 = vmatprep.subr.bf16.mxu0 0
  %115 = vmatpush1.bf16.msra.mxu0 %v90
  %116 = vmatprep.subr.bf16.mxu0 0
  %117 = vmatpush1.bf16.msra.mxu0 %v89
  %118 = vmatprep.subr.bf16.mxu0 0
  %119 = vmatpush1.bf16.msra.mxu0 %v88
  %120 = vmatprep.subr.bf16.mxu0 0
  %121 = vmatpush2.bf16.msra.mxu0 0
  %122 = vmatprep.subr.bf16.mxu0 0
  %123 = vmatpush2.bf16.msra.mxu0 0
  %124 = vmatprep.subr.bf16.mxu0 0
  %125 = vmatpush2.bf16.msra.mxu0 0
  %126 = vmatprep.subr.bf16.mxu0 0
  %127 = vmatpush2.bf16.msra.mxu0 0
  %128 = vmatprep.subr.bf16.mxu0 0
  %129 = vmatpush2.bf16.msra.mxu0 0
  %130 = vmatprep.subr.bf16.mxu0 0
  %131 = vmatpush2.bf16.msra.mxu0 0
  %132 = vmatprep.subr.bf16.mxu0 0
  %133 = vmatpush2.bf16.msra.mxu0 0
  %134 = vmatprep.subr.bf16.mxu0 0
  %135 = vmatpush2.bf16.msra.mxu0 0
  %136 = vmatprep.mubr.bf16.mxu0 0
  %137 = vmatmul.mubr.bf16.gmra.mxu0 %v54
  %v138 = vpop.f32.mrf.mxu0
  %v139 = vadd.f32 0.0, %v138
  %v140 = vpop.f32.mrf.mxu0
  %v141 = vpop.f32.mrf.mxu0
  %v142 = vadd.f32 0.0, %v141
  %v143 = vpop.f32.mrf.mxu0
  %144 = vdwg.mxu0
  %v145 = vadd.f32 %v30, %v139
  %v146 = vadd.f32 %v31, %v142
  %147 = vst [vmem:[#allocation2] sm:$0xff] %v145
  %148 = vst [vmem:[#allocation2 + $0x8] sm:$0xff] %v146
  // Predicated region
  $region30: #{distilbert_classifier_forward.16} parent=0 // pred_check
    %p149 = pneg %p24
  $region31: #{distilbert_classifier_forward.16} parent=0 // pred_check_branch
    %151 = sbr.rel (%p149) target = $region33
  $region32: #{distilbert_classifier_forward.16} parent=0 // pred_region
    %v152 = vld [vmem:[#allocation2] sm:$0xff]
    %v153 = vld [vmem:[#allocation2 + $0x8] sm:$0xff]
    %v154 = vld [vmem:[%s2] sm:$0x1]
    %v156 = vlaneseq
    %v157 = vshrl.u32 %v156, 7
    %v158 = vsub.s32 0, %v157
    %v159 = vrot.slane %v154, %v158
    %v161 = vadd.f32 %v152, %v159
    %v162 = vadd.f32 %v153, %v159
    %v163 = vld [vmem:[%s3] sm:$0xf]
    %v164 = vld [vmem:[%s3 + $0x4] sm:$0xf]
    %v165 = vunpack.c.l.bf16 %v163
    %v166 = vunpack.c.l.bf16 %v164
    %v167 = vadd.f32 %v161, %v165
    %v168 = vadd.f32 %v162, %v166
    %169 = vadd.xlane.f32.xlu0 %v167
    %v170 = vpop.xlane.xlu0 %169
    %171 = vadd.xlane.f32.xlu0 %v168
    %v172 = vpop.xlane.xlu0 %171
    %v173 = vrcp.pop 128.0
    %v174 = vmul.f32 %v170, %v173
    %v175 = vmul.f32 %v172, %v173
    %v176 = vsub.f32 %v167, %v174
    %v177 = vsub.f32 %v168, %v175
    %v178 = vmul.f32 %v176, %v176
    %v179 = vmul.f32 %v177, %v177
    %180 = vadd.xlane.f32.xlu0 %v178
    %v181 = vpop.xlane.xlu0 %180
    %182 = vadd.xlane.f32.xlu0 %v179
    %v183 = vpop.xlane.xlu0 %182
    %v184 = vmul.f32 %v181, %v173
    %v185 = vmul.f32 %v183, %v173
    %v186 = vadd.f32 %v184, 1e-12
    %v187 = vadd.f32 %v185, 1e-12
    %v188 = vrsqrt.pop %v186
    %v189 = vrsqrt.pop %v187
    %v190 = vmul.f32 %v176, %v188
    %v191 = vmul.f32 %v177, %v189
    %v192 = vld [vmem:[%s4] sm:$0x1]
    %v194 = vlaneseq
    %v195 = vshrl.u32 %v194, 7
    %v196 = vsub.s32 0, %v195
    %v197 = vrot.slane %v192, %v196
    %v199 = vmul.f32 %v190, %v197
    %v200 = vmul.f32 %v191, %v197
    %v201 = vld [vmem:[%s5] sm:$0x1]
    %v203 = vlaneseq
    %v204 = vshrl.u32 %v203, 7
    %v205 = vsub.s32 0, %v204
    %v206 = vrot.slane %v201, %v205
    %v208 = vadd.f32 %v199, %v206
    %v209 = vadd.f32 %v200, %v206
    %v210 = vpack.c.bf16 %v209, %v208
    %v212 = vunpack.c.l.b16 %v210
    %v213 = vunpack.c.h.b16 %v210
    %v214 = vpack.c.b16 %v212, %v212
    %v215 = vpack.c.b16 %v213, %v213
    %218 = vst [vmem:[%s6] sm:$0xf] %v214
    %219 = vst [vmem:[%s6 + $0x4] sm:$0xf] %v215
  $region33: #{distilbert_classifier_forward.16} parent=0 // pred_fallthru
    _
  // Predicated region
  $region34: #{distilbert_classifier_forward.16} parent=0 // pred_check
    _
  $region35: #{distilbert_classifier_forward.16} parent=0 // pred_check_branch
    %221 = sbr.rel (0) target = $region37
  $region36: #{distilbert_classifier_forward.16} parent=0 // pred_region
    _
  $region37: #{distilbert_classifier_forward.16} parent=0 // pred_fallthru
    _
  // Predicated region
  $region38: #{distilbert_classifier_forward.16} parent=0 // pred_check
    _
  $region39: #{distilbert_classifier_forward.16} parent=0 // pred_check_branch
    %223 = sbr.rel (0) target = $region41
  $region40: #{distilbert_classifier_forward.16} parent=0 // pred_region
    _
  $region41: #{distilbert_classifier_forward.16} parent=0 // pred_fallthru
    _

// kernel: distilbert_classifier_forward.14
$region0: #{distilbert_classifier_forward.14}
  #allocation0 [shape = 'u32[]', space=smem, size = 0x4, offset = 0x4, fixed_abs, tag = 'smem constant byte address 0x4 - core index']
  #allocation1 [shape = 'u32[144,128]{1,0:T(1,128)}', space=vmem, size = 0x12000, scoped, tag = 'internal scratch']
  #allocation2 [shape = 'f32[16,384]{1,0:T(8,128)}', space=vmem, size = 0x6000, scoped, tag = 'scratch operand']
  %s0 = inlined_call_operand.vmem [shape: bf16[16,128], index: 0, kind: input, shape index: {}]
  %s1 = inlined_call_operand.vmem [shape: bf16[128,384], index: 1, kind: input, shape index: {}]
  %s2 = inlined_call_operand.vmem [shape: f32[1,384], index: 2, kind: input, shape index: {}]
  %s3 = inlined_call_operand.vmem [shape: bf16[16,384], index: 3, kind: output, shape index: {}]
  %s4 = sld [smem:[#allocation0]]
  $region30: #{distilbert_classifier_forward.14} parent=0
    _
  %s6 = ssub.s32 1, %s4
  %s7 = scalar_select 0, %s6, %s4
  // Predicated region
  $region2: #{distilbert_classifier_forward.14} parent=0 // pred_check
    _
  $region3: #{distilbert_classifier_forward.14} parent=0 // pred_check_branch
    %9 = sbr.rel (0) target = $region5
  $region4: #{distilbert_classifier_forward.14} parent=0 // pred_region
    _
  $region5: #{distilbert_classifier_forward.14} parent=0 // pred_fallthru
    _
  // Predicated region
  $region6: #{distilbert_classifier_forward.14} parent=0 // pred_check
    _
  $region7: #{distilbert_classifier_forward.14} parent=0 // pred_check_branch
    %11 = sbr.rel (0) target = $region9
  $region8: #{distilbert_classifier_forward.14} parent=0 // pred_region
    _
  $region9: #{distilbert_classifier_forward.14} parent=0 // pred_fallthru
    _
  // Predicated region
  $region10: #{distilbert_classifier_forward.14} parent=0 // pred_check
    _
  $region11: #{distilbert_classifier_forward.14} parent=0 // pred_check_branch
    %13 = sbr.rel (0) target = $region13
  $region12: #{distilbert_classifier_forward.14} parent=0 // pred_region
    _
  $region13: #{distilbert_classifier_forward.14} parent=0 // pred_fallthru
    _
  %p15 = scmp.eq.s32.totalorder 0, 0
  // Predicated region
  $region14: #{distilbert_classifier_forward.14} parent=0 // pred_check
    %p16 = pneg %p15
  $region15: #{distilbert_classifier_forward.14} parent=0 // pred_check_branch
    %18 = sbr.rel (%p16) target = $region17
  $region16: #{distilbert_classifier_forward.14} parent=0 // pred_region
    %19 = vst [vmem:[#allocation2] sm:$0xff] 0.0
    %20 = vst [vmem:[#allocation2 + $0x8] sm:$0xff] 0.0
    %21 = vst [vmem:[#allocation2 + $0x10] sm:$0xff] 0.0
    %22 = vst [vmem:[#allocation2 + $0x18] sm:$0xff] 0.0
    %23 = vst [vmem:[#allocation2 + $0x20] sm:$0xff] 0.0
    %24 = vst [vmem:[#allocation2 + $0x28] sm:$0xff] 0.0
  $region17: #{distilbert_classifier_forward.14} parent=0 // pred_fallthru
    _
  %v25 = vld [vmem:[#allocation2] sm:$0xff]
  %v26 = vld [vmem:[#allocation2 + $0x8] sm:$0xff]
  %v27 = vld [vmem:[#allocation2 + $0x10] sm:$0xff]
  %v28 = vld [vmem:[#allocation2 + $0x18] sm:$0xff]
  %v29 = vld [vmem:[#allocation2 + $0x20] sm:$0xff]
  %v30 = vld [vmem:[#allocation2 + $0x28] sm:$0xff]
  %v31 = vld [vmem:[%s0] sm:$0xf]
  %v32 = vld [vmem:[%s0 + $0x4] sm:$0xf]
  %v33 = vld [vmem:[%s1] sm:$0xff]
  %v34 = vld [vmem:[%s1 + $0x8] sm:$0xf]
  %v35 = vld [vmem:[%s1 + $0xc] sm:$0xff]
  %v36 = vld [vmem:[%s1 + $0x14] sm:$0xf]
  %v37 = vld [vmem:[%s1 + $0x18] sm:$0xff]
  %v38 = vld [vmem:[%s1 + $0x20] sm:$0xf]
  %v39 = vld [vmem:[%s1 + $0x24] sm:$0xff]
  %v40 = vld [vmem:[%s1 + $0x2c] sm:$0xf]
  %v41 = vld [vmem:[%s1 + $0x30] sm:$0xff]
  %v42 = vld [vmem:[%s1 + $0x38] sm:$0xf]
  %v43 = vld [vmem:[%s1 + $0x3c] sm:$0xff]
  %v44 = vld [vmem:[%s1 + $0x44] sm:$0xf]
  %v45 = vld [vmem:[%s1 + $0x48] sm:$0xff]
  %v46 = vld [vmem:[%s1 + $0x50] sm:$0xf]
  %v47 = vld [vmem:[%s1 + $0x54] sm:$0xff]
  %v48 = vld [vmem:[%s1 + $0x5c] sm:$0xf]
  %v49 = vld [vmem:[%s1 + $0x60] sm:$0xff]
  %v50 = vld [vmem:[%s1 + $0x68] sm:$0xf]
  %v51 = vld [vmem:[%s1 + $0x6c] sm:$0xff]
  %v52 = vld [vmem:[%s1 + $0x74] sm:$0xf]
  %v53 = vld [vmem:[%s1 + $0x78] sm:$0xff]
  %v54 = vld [vmem:[%s1 + $0x80] sm:$0xf]
  %v55 = vld [vmem:[%s1 + $0x84] sm:$0xff]
  %v56 = vld [vmem:[%s1 + $0x8c] sm:$0xf]
  %v57 = vld [vmem:[%s1 + $0x90] sm:$0xff]
  %v58 = vld [vmem:[%s1 + $0x98] sm:$0xf]
  %v59 = vld [vmem:[%s1 + $0x9c] sm:$0xff]
  %v60 = vld [vmem:[%s1 + $0xa4] sm:$0xf]
  %v61 = vld [vmem:[%s1 + $0xa8] sm:$0xff]
  %v62 = vld [vmem:[%s1 + $0xb0] sm:$0xf]
  %v63 = vld [vmem:[%s1 + $0xb4] sm:$0xff]
  %v64 = vld [vmem:[%s1 + $0xbc] sm:$0xf]
  %v67 = vunpack.c.l.b16 %v31
  %v68 = vunpack.c.l.b16 %v32
  %v69 = vpack.c.b16 %v68, %v67
  %v103 = vunpack.c.l.b16 %v33
  %v104 = vunpack.c.h.b16 %v33
  %v105 = vunpack.c.l.b16 %v34
  %v106 = vunpack.c.l.b16 %v35
  %v107 = vunpack.c.h.b16 %v35
  %v108 = vunpack.c.l.b16 %v36
  %v109 = vunpack.c.l.b16 %v37
  %v110 = vunpack.c.h.b16 %v37
  %v111 = vunpack.c.l.b16 %v38
  %v112 = vunpack.c.l.b16 %v39
  %v113 = vunpack.c.h.b16 %v39
  %v114 = vunpack.c.l.b16 %v40
  %v115 = vunpack.c.l.b16 %v41
  %v116 = vunpack.c.h.b16 %v41
  %v117 = vunpack.c.l.b16 %v42
  %v118 = vunpack.c.l.b16 %v43
  %v119 = vunpack.c.h.b16 %v43
  %v120 = vunpack.c.l.b16 %v44
  %v121 = vunpack.c.l.b16 %v45
  %v122 = vunpack.c.h.b16 %v45
  %v123 = vunpack.c.l.b16 %v46
  %v124 = vunpack.c.l.b16 %v47
  %v125 = vunpack.c.h.b16 %v47
  %v126 = vunpack.c.l.b16 %v48
  %v127 = vunpack.c.l.b16 %v49
  %v128 = vunpack.c.h.b16 %v49
  %v129 = vunpack.c.l.b16 %v50
  %v130 = vunpack.c.l.b16 %v51
  %v131 = vunpack.c.h.b16 %v51
  %v132 = vunpack.c.l.b16 %v52
  %v133 = vunpack.c.l.b16 %v53
  %v134 = vunpack.c.h.b16 %v53
  %v135 = vunpack.c.l.b16 %v54
  %v136 = vunpack.c.l.b16 %v55
  %v137 = vunpack.c.h.b16 %v55
  %v138 = vunpack.c.l.b16 %v56
  %v139 = vunpack.c.l.b16 %v57
  %v140 = vunpack.c.h.b16 %v57
  %v141 = vunpack.c.l.b16 %v58
  %v142 = vunpack.c.l.b16 %v59
  %v143 = vunpack.c.h.b16 %v59
  %v144 = vunpack.c.l.b16 %v60
  %v145 = vunpack.c.l.b16 %v61
  %v146 = vunpack.c.h.b16 %v61
  %v147 = vunpack.c.l.b16 %v62
  %v148 = vunpack.c.l.b16 %v63
  %v149 = vunpack.c.h.b16 %v63
  %v150 = vunpack.c.l.b16 %v64
  %v151 = vpack.c.b16 %v106, %v103
  %v152 = vpack.c.b16 %v107, %v104
  %v153 = vpack.c.b16 %v108, %v105
  %v154 = vpack.c.b16 %v112, %v109
  %v155 = vpack.c.b16 %v113, %v110
  %v156 = vpack.c.b16 %v114, %v111
  %v157 = vpack.c.b16 %v118, %v115
  %v158 = vpack.c.b16 %v119, %v116
  %v159 = vpack.c.b16 %v120, %v117
  %v160 = vpack.c.b16 %v124, %v121
  %v161 = vpack.c.b16 %v125, %v122
  %v162 = vpack.c.b16 %v126, %v123
  %v163 = vpack.c.b16 %v130, %v127
  %v164 = vpack.c.b16 %v131, %v128
  %v165 = vpack.c.b16 %v132, %v129
  %v166 = vpack.c.b16 %v136, %v133
  %v167 = vpack.c.b16 %v137, %v134
  %v168 = vpack.c.b16 %v138, %v135
  %v169 = vpack.c.b16 %v142, %v139
  %v170 = vpack.c.b16 %v143, %v140
  %v171 = vpack.c.b16 %v144, %v141
  %v172 = vpack.c.b16 %v148, %v145
  %v173 = vpack.c.b16 %v149, %v146
  %v174 = vpack.c.b16 %v150, %v147
  %199 = vmatprep.subr.bf16.mxu0 %v173
  %200 = vmatpush1.bf16.msra.mxu0 %v172
  %201 = vmatprep.subr.bf16.mxu0 %v170
  %202 = vmatpush1.bf16.msra.mxu0 %v169
  %203 = vmatprep.subr.bf16.mxu0 %v167
  %204 = vmatpush1.bf16.msra.mxu0 %v166
  %205 = vmatprep.subr.bf16.mxu0 %v164
  %206 = vmatpush1.bf16.msra.mxu0 %v163
  %207 = vmatprep.subr.bf16.mxu0 %v161
  %208 = vmatpush1.bf16.msra.mxu0 %v160
  %209 = vmatprep.subr.bf16.mxu0 %v158
  %210 = vmatpush1.bf16.msra.mxu0 %v157
  %211 = vmatprep.subr.bf16.mxu0 %v155
  %212 = vmatpush1.bf16.msra.mxu0 %v154
  %213 = vmatprep.subr.bf16.mxu0 %v152
  %214 = vmatpush1.bf16.msra.mxu0 %v151
  %215 = vmatprep.subr.bf16.mxu0 0
  %216 = vmatpush2.bf16.msra.mxu0 0
  %217 = vmatprep.subr.bf16.mxu0 0
  %218 = vmatpush2.bf16.msra.mxu0 0
  %219 = vmatprep.subr.bf16.mxu0 0
  %220 = vmatpush2.bf16.msra.mxu0 0
  %221 = vmatprep.subr.bf16.mxu0 0
  %222 = vmatpush2.bf16.msra.mxu0 0
  %223 = vmatprep.subr.bf16.mxu0 0
  %224 = vmatpush2.bf16.msra.mxu0 0
  %225 = vmatprep.subr.bf16.mxu0 0
  %226 = vmatpush2.bf16.msra.mxu0 0
  %227 = vmatprep.subr.bf16.mxu0 0
  %228 = vmatpush2.bf16.msra.mxu0 0
  %229 = vmatprep.subr.bf16.mxu0 0
  %230 = vmatpush2.bf16.msra.mxu0 0
  %231 = vmatprep.mubr.bf16.mxu0 0
  %232 = vmatmul.mubr.bf16.gmra.mxu0 %v69
  %v233 = vpop.f32.mrf.mxu0
  %v234 = vadd.f32 0.0, %v233
  %v235 = vpop.f32.mrf.mxu0
  %v236 = vadd.f32 0.0, %v235
  %v237 = vpop.f32.mrf.mxu0
  %v238 = vadd.f32 0.0, %v237
  %v239 = vpop.f32.mrf.mxu0
  %v240 = vadd.f32 0.0, %v239
  %241 = vdwg.mxu0
  %242 = vmatprep.subr.bf16.mxu0 0
  %243 = vmatpush1.bf16.msra.mxu0 %v174
  %244 = vmatprep.subr.bf16.mxu0 0
  %245 = vmatpush1.bf16.msra.mxu0 %v171
  %246 = vmatprep.subr.bf16.mxu0 0
  %247 = vmatpush1.bf16.msra.mxu0 %v168
  %248 = vmatprep.subr.bf16.mxu0 0
  %249 = vmatpush1.bf16.msra.mxu0 %v165
  %250 = vmatprep.subr.bf16.mxu0 0
  %251 = vmatpush1.bf16.msra.mxu0 %v162
  %252 = vmatprep.subr.bf16.mxu0 0
  %253 = vmatpush1.bf16.msra.mxu0 %v159
  %254 = vmatprep.subr.bf16.mxu0 0
  %255 = vmatpush1.bf16.msra.mxu0 %v156
  %256 = vmatprep.subr.bf16.mxu0 0
  %257 = vmatpush1.bf16.msra.mxu0 %v153
  %258 = vmatprep.subr.bf16.mxu0 0
  %259 = vmatpush2.bf16.msra.mxu0 0
  %260 = vmatprep.subr.bf16.mxu0 0
  %261 = vmatpush2.bf16.msra.mxu0 0
  %262 = vmatprep.subr.bf16.mxu0 0
  %263 = vmatpush2.bf16.msra.mxu0 0
  %264 = vmatprep.subr.bf16.mxu0 0
  %265 = vmatpush2.bf16.msra.mxu0 0
  %266 = vmatprep.subr.bf16.mxu0 0
  %267 = vmatpush2.bf16.msra.mxu0 0
  %268 = vmatprep.subr.bf16.mxu0 0
  %269 = vmatpush2.bf16.msra.mxu0 0
  %270 = vmatprep.subr.bf16.mxu0 0
  %271 = vmatpush2.bf16.msra.mxu0 0
  %272 = vmatprep.subr.bf16.mxu0 0
  %273 = vmatpush2.bf16.msra.mxu0 0
  %274 = vmatprep.mubr.bf16.mxu0 0
  %275 = vmatmul.mubr.bf16.gmra.mxu0 %v69
  %v276 = vpop.f32.mrf.mxu0
  %v277 = vadd.f32 0.0, %v276
  %v278 = vpop.f32.mrf.mxu0
  %v279 = vpop.f32.mrf.mxu0
  %v280 = vadd.f32 0.0, %v279
  %v281 = vpop.f32.mrf.mxu0
  %282 = vdwg.mxu0
  %v283 = vadd.f32 %v25, %v234
  %v284 = vadd.f32 %v26, %v236
  %v285 = vadd.f32 %v27, %v277
  %v286 = vadd.f32 %v28, %v238
  %v287 = vadd.f32 %v29, %v240
  %v288 = vadd.f32 %v30, %v280
  %289 = vst [vmem:[#allocation2] sm:$0xff] %v283
  %290 = vst [vmem:[#allocation2 + $0x8] sm:$0xff] %v284
  %291 = vst [vmem:[#allocation2 + $0x10] sm:$0xff] %v285
  %292 = vst [vmem:[#allocation2 + $0x18] sm:$0xff] %v286
  %293 = vst [vmem:[#allocation2 + $0x20] sm:$0xff] %v287
  %294 = vst [vmem:[#allocation2 + $0x28] sm:$0xff] %v288
  // Predicated region
  $region18: #{distilbert_classifier_forward.14} parent=0 // pred_check
    %p295 = pneg %p15
  $region19: #{distilbert_classifier_forward.14} parent=0 // pred_check_branch
    %297 = sbr.rel (%p295) target = $region21
  $region20: #{distilbert_classifier_forward.14} parent=0 // pred_region
    %v298 = vld [vmem:[#allocation2] sm:$0xff]
    %v299 = vld [vmem:[#allocation2 + $0x8] sm:$0xff]
    %v300 = vld [vmem:[#allocation2 + $0x10] sm:$0xff]
    %v301 = vld [vmem:[#allocation2 + $0x18] sm:$0xff]
    %v302 = vld [vmem:[#allocation2 + $0x20] sm:$0xff]
    %v303 = vld [vmem:[#allocation2 + $0x28] sm:$0xff]
    %v304 = vld [vmem:[%s2] sm:$0x7]
    %v306 = vlaneseq
    %v307 = vshrl.u32 %v306, 7
    %v308 = vsub.s32 0, %v307
    %v309 = vrot.slane %v304, %v308
    %v310 = vlaneseq
    %v311 = vshrl.u32 %v310, 7
    %v312 = vsub.s32 1, %v311
    %v313 = vrot.slane %v304, %v312
    %v314 = vlaneseq
    %v315 = vshrl.u32 %v314, 7
    %v316 = vsub.s32 2, %v315
    %v317 = vrot.slane %v304, %v316
    %v321 = vadd.f32 %v298, %v309
    %v322 = vadd.f32 %v299, %v313
    %v323 = vadd.f32 %v300, %v317
    %v324 = vadd.f32 %v301, %v309
    %v325 = vadd.f32 %v302, %v313
    %v326 = vadd.f32 %v303, %v317
    %v327 = vpack.c.bf16 %v324, %v321
    %v328 = vpack.c.bf16 %v325, %v322
    %v329 = vpack.c.bf16 %v326, %v323
    %v333 = vunpack.c.l.b16 %v327
    %v334 = vunpack.c.l.b16 %v328
    %v335 = vunpack.c.l.b16 %v329
    %v336 = vunpack.c.h.b16 %v327
    %v337 = vunpack.c.h.b16 %v328
    %v338 = vunpack.c.h.b16 %v329
    %v339 = vpack.c.b16 %v334, %v333
    %v340 = vpack.c.b16 %v335, %v335
    %v341 = vpack.c.b16 %v337, %v336
    %v342 = vpack.c.b16 %v338, %v338
    %347 = vst [vmem:[%s3] sm:$0xff] %v339
    %348 = vst [vmem:[%s3 + $0x8] sm:$0xf] %v340
    %349 = vst [vmem:[%s3 + $0xc] sm:$0xff] %v341
    %350 = vst [vmem:[%s3 + $0x14] sm:$0xf] %v342
  $region21: #{distilbert_classifier_forward.14} parent=0 // pred_fallthru
    _
  // Predicated region
  $region22: #{distilbert_classifier_forward.14} parent=0 // pred_check
    _
  $region23: #{distilbert_classifier_forward.14} parent=0 // pred_check_branch
    %352 = sbr.rel (0) target = $region25
  $region24: #{distilbert_classifier_forward.14} parent=0 // pred_region
    _
  $region25: #{distilbert_classifier_forward.14} parent=0 // pred_fallthru
    _
  // Predicated region
  $region26: #{distilbert_classifier_forward.14} parent=0 // pred_check
    _
  $region27: #{distilbert_classifier_forward.14} parent=0 // pred_check_branch
    %354 = sbr.rel (0) target = $region29
  $region28: #{distilbert_classifier_forward.14} parent=0 // pred_region
    _
  $region29: #{distilbert_classifier_forward.14} parent=0 // pred_fallthru
    _

// kernel: distilbert_classifier_forward.15
$region0: #{distilbert_classifier_forward.15}
  #allocation0 [shape = 'u32[]', space=smem, size = 0x4, offset = 0x4, fixed_abs, tag = 'smem constant byte address 0x4 - core index']
  #allocation1 [shape = 'u32[144,128]{1,0:T(1,128)}', space=vmem, size = 0x12000, scoped, tag = 'internal scratch']
  %s0 = inlined_call_operand.vmem [shape: bf16[16,384], index: 0, kind: input, shape index: {}, may-alias: {0,1,2}]
  %s1 = inlined_call_operand.vmem [shape: bf16[16,384], index: 1, kind: input, shape index: {}, may-alias: {0,1,2}]
  %s2 = inlined_call_operand.vmem [shape: bf16[16,384], index: 2, kind: input, shape index: {}, may-alias: {0,1,2}]
  %s3 = inlined_call_operand.vmem [shape: f32[2,1,8], index: 3, kind: input, shape index: {}]
  %s4 = inlined_call_operand.vmem [shape: bf16[16,128], index: 4, kind: output, shape index: {}]
  %s5 = sld [smem:[#allocation0]]
  $region49: #{distilbert_classifier_forward.15} parent=0
    _
  %s7 = ssub.s32 1, %s5
  %s8 = scalar_select 0, %s7, %s5
  loop: start=0, step=1, limit=4
  $region2: #{distilbert_classifier_forward.15} parent=0 // loop_pre_header
    _
  $region3: #{distilbert_classifier_forward.15} parent=0 // loop_header
    %s10 = sphi 0, %s14
    %p11 = scmp.ge.s32.totalorder %s10, 4
    %s17 = sphi 0, %s29
    %s18 = sphi 0, %s25
    %s19 = sphi 0, %s17
    %s20 = sphi 0, %s18
    %s21 = sphi 0, %s19
    %s22 = sphi 0, %s20
    %s34 = sphi 0, %s36
    %s37 = sphi 0, %s34
    %s38 = sphi 0, %s37
    %s54 = sphi 0, %s38
    %s64 = sphi 0, %s66
    %s67 = sphi 0, %s64
    %s68 = sphi 0, %s67
    %s84 = sphi 0, %s68
    %s94 = sphi 0, %s96
    %s97 = sphi 0, %s94
    %s98 = sphi 0, %s97
    %s114 = sphi 0, %s98
    %s120 = sphi 0, %s122
    %s123 = sphi 0, %s120
    %s124 = sphi 0, %s123
    %s140 = sphi 0, %s124
    %s148 = sphi 0, %s150
    %s151 = sphi 0, %s148
    %s152 = sphi 0, %s151
    %s168 = sphi 0, %s152
  $region4: #{distilbert_classifier_forward.15} parent=0 // loop_header_branch
    %13 = sbr.rel (%p11) target = $region8
  $region5: #{distilbert_classifier_forward.15} parent=0 // loop_body
    %s15 = ssub.s32 %s10, 1
    %s16 = ssub.s32 %s10, 2
    %s23 = sadd.s32 1, %s18
    %p24 = scmp.ge.s32.totalorder %s23, 1
    %s25 = scalar_select %p24, 0, %s23
    %s26 = sadd.s32 1, %s17
    %s27 = scalar_select %p24, %s26, %s17
    %p28 = scmp.ge.s32.totalorder %s27, 2
    %s29 = scalar_select %p28, 0, %s27
    %s30 = ssub.s32 %s17, %s29
    %s31 = ssub.s32 %s18, %s25
    %s32 = sor.u32 %s30, %s31
    %p33 = scmp.eq.s32.totalorder %s32, 0
    %s35 = sadd.s32 %s34, 1
    %s36 = scalar_select %p33, %s34, %s35
    %p39 = pneg %p33
    %p40 = scmp.eq.s32.totalorder %s10, 1
    %p41 = por %p39, %p40
    %p42 = scmp.ne.s32.totalorder %s34, %s37
    %p43 = scmp.eq.s32.totalorder %s10, 0
    %p44 = por %p42, %p43
    %p45 = scmp.ne.s32.totalorder %s34, %s37
    %p46 = scmp.eq.s32.totalorder %s15, 1
    %p47 = por %p45, %p46
    %p48 = scmp.ne.s32.totalorder %s37, %s38
    %p49 = scmp.eq.s32.totalorder %s15, 0
    %p50 = por %p48, %p49
    %p51 = scmp.ne.s32.totalorder %s37, %s38
    %p52 = scmp.eq.s32.totalorder %s16, 1
    %p53 = por %p51, %p52
    %p55 = scmp.ne.s32.totalorder %s38, %s54
    %p56 = scmp.eq.s32.totalorder %s16, 0
    %p57 = por %p55, %p56
    %s58 = sadd.s32 %s18, 1
    %s59 = sadd.s32 %s25, 1
    %s60 = ssub.s32 %s17, %s29
    %s61 = ssub.s32 %s58, %s59
    %s62 = sor.u32 %s60, %s61
    %p63 = scmp.eq.s32.totalorder %s62, 0
    %s65 = sadd.s32 %s64, 1
    %s66 = scalar_select %p63, %s64, %s65
    %p69 = pneg %p63
    %p70 = scmp.eq.s32.totalorder %s10, 1
    %p71 = por %p69, %p70
    %p72 = scmp.ne.s32.totalorder %s64, %s67
    %p73 = scmp.eq.s32.totalorder %s10, 0
    %p74 = por %p72, %p73
    %p75 = scmp.ne.s32.totalorder %s64, %s67
    %p76 = scmp.eq.s32.totalorder %s15, 1
    %p77 = por %p75, %p76
    %p78 = scmp.ne.s32.totalorder %s67, %s68
    %p79 = scmp.eq.s32.totalorder %s15, 0
    %p80 = por %p78, %p79
    %p81 = scmp.ne.s32.totalorder %s67, %s68
    %p82 = scmp.eq.s32.totalorder %s16, 1
    %p83 = por %p81, %p82
    %p85 = scmp.ne.s32.totalorder %s68, %s84
    %p86 = scmp.eq.s32.totalorder %s16, 0
    %p87 = por %p85, %p86
    %s88 = sadd.s32 %s18, 2
    %s89 = sadd.s32 %s25, 2
    %s90 = ssub.s32 %s17, %s29
    %s91 = ssub.s32 %s88, %s89
    %s92 = sor.u32 %s90, %s91
    %p93 = scmp.eq.s32.totalorder %s92, 0
    %s95 = sadd.s32 %s94, 1
    %s96 = scalar_select %p93, %s94, %s95
    %p99 = pneg %p93
    %p100 = scmp.eq.s32.totalorder %s10, 1
    %p101 = por %p99, %p100
    %p102 = scmp.ne.s32.totalorder %s94, %s97
    %p103 = scmp.eq.s32.totalorder %s10, 0
    %p104 = por %p102, %p103
    %p105 = scmp.ne.s32.totalorder %s94, %s97
    %p106 = scmp.eq.s32.totalorder %s15, 1
    %p107 = por %p105, %p106
    %p108 = scmp.ne.s32.totalorder %s97, %s98
    %p109 = scmp.eq.s32.totalorder %s15, 0
    %p110 = por %p108, %p109
    %p111 = scmp.ne.s32.totalorder %s97, %s98
    %p112 = scmp.eq.s32.totalorder %s16, 1
    %p113 = por %p111, %p112
    %p115 = scmp.ne.s32.totalorder %s98, %s114
    %p116 = scmp.eq.s32.totalorder %s16, 0
    %p117 = por %p115, %p116
    %s118 = ssub.s32 %s17, %s29
    %p119 = scmp.eq.s32.totalorder %s118, 0
    %s121 = sadd.s32 %s120, 1
    %s122 = scalar_select %p119, %s120, %s121
    %p125 = pneg %p119
    %p126 = scmp.eq.s32.totalorder %s10, 1
    %p127 = por %p125, %p126
    %p128 = scmp.ne.s32.totalorder %s120, %s123
    %p129 = scmp.eq.s32.totalorder %s10, 0
    %p130 = por %p128, %p129
    %p131 = scmp.ne.s32.totalorder %s120, %s123
    %p132 = scmp.eq.s32.totalorder %s15, 1
    %p133 = por %p131, %p132
    %p134 = scmp.ne.s32.totalorder %s123, %s124
    %p135 = scmp.eq.s32.totalorder %s15, 0
    %p136 = por %p134, %p135
    %p137 = scmp.ne.s32.totalorder %s123, %s124
    %p138 = scmp.eq.s32.totalorder %s16, 1
    %p139 = por %p137, %p138
    %p141 = scmp.ne.s32.totalorder %s124, %s140
    %p142 = scmp.eq.s32.totalorder %s16, 0
    %p143 = por %p141, %p142
    %s144 = ssub.s32 %s17, %s29
    %s145 = ssub.s32 %s18, %s25
    %s146 = sor.u32 %s144, %s145
    %p147 = scmp.eq.s32.totalorder %s146, 0
    %s149 = sadd.s32 %s148, 1
    %s150 = scalar_select %p147, %s148, %s149
    %p153 = pneg %p147
    %p154 = scmp.eq.s32.totalorder %s10, 1
    %p155 = por %p153, %p154
    %p156 = scmp.ne.s32.totalorder %s148, %s151
    %p157 = scmp.eq.s32.totalorder %s10, 0
    %p158 = por %p156, %p157
    %p159 = scmp.ne.s32.totalorder %s148, %s151
    %p160 = scmp.eq.s32.totalorder %s15, 1
    %p161 = por %p159, %p160
    %p162 = scmp.ne.s32.totalorder %s151, %s152
    %p163 = scmp.eq.s32.totalorder %s15, 0
    %p164 = por %p162, %p163
    %p165 = scmp.ne.s32.totalorder %s151, %s152
    %p166 = scmp.eq.s32.totalorder %s16, 1
    %p167 = por %p165, %p166
    %p169 = scmp.ne.s32.totalorder %s152, %s168
    %p170 = scmp.eq.s32.totalorder %s16, 0
    %p171 = por %p169, %p170
    %p172 = scmp.le.s32.totalorder 1, %s10
    %p173 = scmp.lt.s32.totalorder %s10, 3
    %p174 = pnand %p172, %p173
    %p175 = pneg %p174
    // Predicated region
    $region9: #{distilbert_classifier_forward.15} parent=5 // pred_check
      _
    $region10: #{distilbert_classifier_forward.15} parent=5 // pred_check_branch
      %177 = sbr.rel (%p174) target = $region12
    $region11: #{distilbert_classifier_forward.15} parent=5 // pred_region
      %s178 = ssub.s32 %s10, 1
    $region12: #{distilbert_classifier_forward.15} parent=5 // pred_fallthru
      _
    %p179 = scmp.lt.s32.totalorder %s10, 2
    // Predicated region
    $region13: #{distilbert_classifier_forward.15} parent=5 // pred_check
      %p180 = pneg %p179
    $region14: #{distilbert_classifier_forward.15} parent=5 // pred_check_branch
      %182 = sbr.rel (%p180) target = $region16
    $region15: #{distilbert_classifier_forward.15} parent=5 // pred_region
      // Predicated region
      $region17: #{distilbert_classifier_forward.15} parent=15 // pred_check
        %p183 = pneg %p44
      $region18: #{distilbert_classifier_forward.15} parent=15 // pred_check_branch
        %185 = sbr.rel (%p183) target = $region20
      $region19: #{distilbert_classifier_forward.15} parent=15 // pred_region
        %p186 = scmp.lt.s32.totalorder %s17, 1
        %s187 = scalar_select %p186, %s17, 1
        %p188 = scmp.lt.s32.totalorder %s18, 2
        %s189 = scalar_select %p188, %s18, 2
        %s190 = smul.addr %s187, 3
        %s191 = sadd.s32 %s189, %s190
        %s192 = smul.addr %s191, 4
        %s193 = scalar_lea.vmem %s0, %s192
      $region20: #{distilbert_classifier_forward.15} parent=15 // pred_fallthru
        _
      // Predicated region
      $region21: #{distilbert_classifier_forward.15} parent=15 // pred_check
        %p194 = pneg %p74
      $region22: #{distilbert_classifier_forward.15} parent=15 // pred_check_branch
        %196 = sbr.rel (%p194) target = $region24
      $region23: #{distilbert_classifier_forward.15} parent=15 // pred_region
        %s197 = sadd.s32 %s18, 1
        %p198 = scmp.lt.s32.totalorder %s17, 1
        %s199 = scalar_select %p198, %s17, 1
        %p200 = scmp.lt.s32.totalorder %s197, 2
        %s201 = scalar_select %p200, %s197, 2
        %s202 = smul.addr %s199, 3
        %s203 = sadd.s32 %s201, %s202
        %s204 = smul.addr %s203, 4
        %s205 = scalar_lea.vmem %s1, %s204
        %s206 = sadd.s32 %s18, 1
      $region24: #{distilbert_classifier_forward.15} parent=15 // pred_fallthru
        _
      // Predicated region
      $region25: #{distilbert_classifier_forward.15} parent=15 // pred_check
        %p207 = pneg %p104
      $region26: #{distilbert_classifier_forward.15} parent=15 // pred_check_branch
        %209 = sbr.rel (%p207) target = $region28
      $region27: #{distilbert_classifier_forward.15} parent=15 // pred_region
        %s210 = sadd.s32 %s18, 2
        %p211 = scmp.lt.s32.totalorder %s17, 1
        %s212 = scalar_select %p211, %s17, 1
        %p213 = scmp.lt.s32.totalorder %s210, 2
        %s214 = scalar_select %p213, %s210, 2
        %s215 = smul.addr %s212, 3
        %s216 = sadd.s32 %s214, %s215
        %s217 = smul.addr %s216, 4
        %s218 = scalar_lea.vmem %s2, %s217
        %s219 = sadd.s32 %s18, 2
      $region28: #{distilbert_classifier_forward.15} parent=15 // pred_fallthru
        _
      // Predicated region
      $region29: #{distilbert_classifier_forward.15} parent=15 // pred_check
        %p220 = pneg %p130
      $region30: #{distilbert_classifier_forward.15} parent=15 // pred_check_branch
        %222 = sbr.rel (%p220) target = $region32
      $region31: #{distilbert_classifier_forward.15} parent=15 // pred_region
        %p223 = scmp.lt.s32.totalorder %s17, 1
        %s224 = scalar_select %p223, %s17, 1
        %s225 = scalar_lea.vmem %s3, %s224
      $region32: #{distilbert_classifier_forward.15} parent=15 // pred_fallthru
        _
    $region16: #{distilbert_classifier_forward.15} parent=5 // pred_fallthru
      _
    %p226 = scmp.le.s32.totalorder 1, %s10
    %p227 = scmp.lt.s32.totalorder %s10, 3
    %p228 = pnand %p226, %p227
    %p229 = pneg %p228
    // Predicated region
    $region33: #{distilbert_classifier_forward.15} parent=5 // pred_check
      _
    $region34: #{distilbert_classifier_forward.15} parent=5 // pred_check_branch
      %231 = sbr.rel (%p228) target = $region36
    $region35: #{distilbert_classifier_forward.15} parent=5 // pred_region
      %s232 = ssub.s32 %s10, 1
      %p233 = scmp.lt.s32.totalorder %s19, 1
      %s234 = scalar_select %p233, %s19, 1
      %p235 = scmp.lt.s32.totalorder %s20, 2
      %s236 = scalar_select %p235, %s20, 2
      %s237 = smul.addr %s234, 3
      %s238 = sadd.s32 %s236, %s237
      %s239 = smul.addr %s238, 4
      %s240 = scalar_lea.vmem %s0, %s239
      %p241 = pneg %p50
      %p242 = pneg %p47
      %s243 = sadd.s32 %s20, 1
      %p244 = scmp.lt.s32.totalorder %s19, 1
      %s245 = scalar_select %p244, %s19, 1
      %p246 = scmp.lt.s32.totalorder %s243, 2
      %s247 = scalar_select %p246, %s243, 2
      %s248 = smul.addr %s245, 3
      %s249 = sadd.s32 %s247, %s248
      %s250 = smul.addr %s249, 4
      %s251 = scalar_lea.vmem %s1, %s250
      %p252 = pneg %p80
      %p253 = pneg %p77
      %s254 = sadd.s32 %s20, 2
      %p255 = scmp.lt.s32.totalorder %s19, 1
      %s256 = scalar_select %p255, %s19, 1
      %p257 = scmp.lt.s32.totalorder %s254, 2
      %s258 = scalar_select %p257, %s254, 2
      %s259 = smul.addr %s256, 3
      %s260 = sadd.s32 %s258, %s259
      %s261 = smul.addr %s260, 4
      %s262 = scalar_lea.vmem %s2, %s261
      %p263 = pneg %p110
      %p264 = pneg %p107
      %p265 = scmp.lt.s32.totalorder %s19, 1
      %s266 = scalar_select %p265, %s19, 1
      %s267 = scalar_lea.vmem %s3, %s266
      %p268 = pneg %p136
      %p269 = pneg %p133
      %p270 = pneg %p164
      %p271 = pneg %p161
      %p272 = scmp.lt.s32.totalorder %s19, 1
      %s273 = scalar_select %p272, %s19, 1
      %p274 = scmp.lt.s32.totalorder %s20, 0
      %s275 = scalar_select %p274, %s20, 0
      %s276 = sadd.s32 %s275, %s273
      %s277 = smul.addr %s276, 4
      %s278 = scalar_lea.vmem %s4, %s277
      %p279 = scmp.lt.s32.totalorder %s19, 1
      %s280 = scalar_select %p279, %s19, 1
      %p281 = scmp.lt.s32.totalorder %s20, 2
      %s282 = scalar_select %p281, %s20, 2
      %s283 = smul.addr %s280, 3
      %s284 = sadd.s32 %s282, %s283
      %s285 = smul.addr %s284, 4
      %s286 = scalar_lea.vmem %s0, %s285
      %s287 = sadd.s32 %s20, 1
      %p288 = scmp.lt.s32.totalorder %s19, 1
      %s289 = scalar_select %p288, %s19, 1
      %p290 = scmp.lt.s32.totalorder %s287, 2
      %s291 = scalar_select %p290, %s287, 2
      %s292 = smul.addr %s289, 3
      %s293 = sadd.s32 %s291, %s292
      %s294 = smul.addr %s293, 4
      %s295 = scalar_lea.vmem %s1, %s294
      %s296 = sadd.s32 %s20, 1
      %s297 = sadd.s32 %s20, 2
      %p298 = scmp.lt.s32.totalorder %s19, 1
      %s299 = scalar_select %p298, %s19, 1
      %p300 = scmp.lt.s32.totalorder %s297, 2
      %s301 = scalar_select %p300, %s297, 2
      %s302 = smul.addr %s299, 3
      %s303 = sadd.s32 %s301, %s302
      %s304 = smul.addr %s303, 4
      %s305 = scalar_lea.vmem %s2, %s304
      %s306 = sadd.s32 %s20, 2
      %p307 = scmp.lt.s32.totalorder %s19, 1
      %s308 = scalar_select %p307, %s19, 1
      %s309 = scalar_lea.vmem %s3, %s308
      %p310 = scmp.lt.s32.totalorder %s19, 1
      %s311 = scalar_select %p310, %s19, 1
      %p312 = scmp.lt.s32.totalorder %s20, 0
      %s313 = scalar_select %p312, %s20, 0
      %s314 = sadd.s32 %s313, %s311
      %s315 = smul.addr %s314, 4
      %s316 = scalar_lea.vmem %s4, %s315
      %v318 = vld [vmem:[%s309] sm:$0x1]
      %v319 = vsub.f32 %v318, 1.0
      %v320 = vmul.f32 %v319, 1e+09
      %v322 = vlaneseq
      %v323 = vshrl.u32 %v322, 7
      %v324 = vsub.s32 0, %v323
      %v325 = vrot.slane %v320, %v324
      %v327 = vld [vmem:[%s286] sm:$0xf]
      %v328 = vld [vmem:[%s295] sm:$0xf]
      %v329 = vld [vmem:[%s305] sm:$0xf]
      %vm330 = vcmask 261120
      %v332 = vsel %vm330, %v327, 0
      %v335 = vsel %vm330, %v328, 0
      %337 = vmatprep.subr.bf16.mxu0 0
      %338 = vmatpush1.bf16.xpose.msra.mxu0 0
      %339 = vmatprep.subr.bf16.mxu0 0
      %340 = vmatpush1.bf16.xpose.msra.mxu0 0
      %341 = vmatprep.subr.bf16.mxu0 0
      %342 = vmatpush1.bf16.xpose.msra.mxu0 0
      %343 = vmatprep.subr.bf16.mxu0 0
      %344 = vmatpush1.bf16.xpose.msra.mxu0 0
      %345 = vmatprep.subr.bf16.mxu0 0
      %346 = vmatpush1.bf16.xpose.msra.mxu0 0
      %347 = vmatprep.subr.bf16.mxu0 0
      %348 = vmatpush1.bf16.xpose.msra.mxu0 0
      %349 = vmatprep.subr.bf16.mxu0 0
      %350 = vmatpush1.bf16.xpose.msra.mxu0 0
      %351 = vmatprep.subr.bf16.mxu0 0
      %352 = vmatpush1.bf16.xpose.msra.mxu0 %v335
      %353 = vmatprep.subr.bf16.mxu0 0
      %354 = vmatpush2.bf16.xpose.msra.mxu0 0
      %355 = vmatprep.subr.bf16.mxu0 0
      %356 = vmatpush2.bf16.xpose.msra.mxu0 0
      %357 = vmatprep.subr.bf16.mxu0 0
      %358 = vmatpush2.bf16.xpose.msra.mxu0 0
      %359 = vmatprep.subr.bf16.mxu0 0
      %360 = vmatpush2.bf16.xpose.msra.mxu0 0
      %361 = vmatprep.subr.bf16.mxu0 0
      %362 = vmatpush2.bf16.xpose.msra.mxu0 0
      %363 = vmatprep.subr.bf16.mxu0 0
      %364 = vmatpush2.bf16.xpose.msra.mxu0 0
      %365 = vmatprep.subr.bf16.mxu0 0
      %366 = vmatpush2.bf16.xpose.msra.mxu0 0
      %367 = vmatprep.subr.bf16.mxu0 0
      %368 = vmatpush2.bf16.xpose.msra.mxu0 0
      %369 = vmatprep.mubr.bf16.mxu0 0
      %370 = vmatmul.mubr.bf16.gmra.mxu0 %v332
      %v371 = vpop.f32.mrf.mxu0
      %v372 = vadd.f32 0.0, %v371
      %v373 = vpop.f32.mrf.mxu0
      %v374 = vpop.f32.mrf.mxu0
      %v375 = vpop.f32.mrf.mxu0
      %376 = vdwg.mxu0
      %v377 = vmul.f32 %v372, 0.17677669
      %v378 = vadd.f32 %v377, %v325
      %vm379 = vcmask 64512
      %v380 = vsel %vm379, %v378, -inf
      %381 = vmax.xlane.f32.xlu0 %v380
      %v382 = vpop.xlane.xlu0 %381
      %v383 = vsub.f32 %v378, %v382
      %v384 = vmul.f32 %v383, 1.442695
      %v385 = vpow.pop %v384
      %v386 = vsel %vm379, %v385, 0.0
      %387 = vadd.xlane.f32.xlu0 %v386
      %v388 = vpop.xlane.xlu0 %387
      %v389 = vrcp.pop %v388
      %v390 = vmul.f32 %v385, %v389
      %v391 = vpack.c.bf16 %v390, %v390
      %v393 = vsel %vm379, %v391, 0
      %vm395 = vcmask 1043456
      %v397 = vsel %vm395, %v329, 0
      %399 = vmatprep.subr.bf16.mxu0 0
      %400 = vmatpush1.bf16.msra.mxu0 0
      %401 = vmatprep.subr.bf16.mxu0 0
      %402 = vmatpush1.bf16.msra.mxu0 0
      %403 = vmatprep.subr.bf16.mxu0 0
      %404 = vmatpush1.bf16.msra.mxu0 0
      %405 = vmatprep.subr.bf16.mxu0 0
      %406 = vmatpush1.bf16.msra.mxu0 0
      %407 = vmatprep.subr.bf16.mxu0 0
      %408 = vmatpush1.bf16.msra.mxu0 0
      %409 = vmatprep.subr.bf16.mxu0 0
      %410 = vmatpush1.bf16.msra.mxu0 0
      %411 = vmatprep.subr.bf16.mxu0 0
      %412 = vmatpush1.bf16.msra.mxu0 0
      %413 = vmatprep.subr.bf16.mxu0 0
      %414 = vmatpush1.bf16.msra.mxu0 %v397
      %415 = vmatprep.subr.bf16.mxu0 0
      %416 = vmatpush2.bf16.msra.mxu0 0
      %417 = vmatprep.subr.bf16.mxu0 0
      %418 = vmatpush2.bf16.msra.mxu0 0
      %419 = vmatprep.subr.bf16.mxu0 0
      %420 = vmatpush2.bf16.msra.mxu0 0
      %421 = vmatprep.subr.bf16.mxu0 0
      %422 = vmatpush2.bf16.msra.mxu0 0
      %423 = vmatprep.subr.bf16.mxu0 0
      %424 = vmatpush2.bf16.msra.mxu0 0
      %425 = vmatprep.subr.bf16.mxu0 0
      %426 = vmatpush2.bf16.msra.mxu0 0
      %427 = vmatprep.subr.bf16.mxu0 0
      %428 = vmatpush2.bf16.msra.mxu0 0
      %429 = vmatprep.subr.bf16.mxu0 0
      %430 = vmatpush2.bf16.msra.mxu0 0
      %431 = vmatprep.mubr.bf16.mxu0 0
      %432 = vmatmul.mubr.bf16.gmra.mxu0 %v393
      %v433 = vpop.f32.mrf.mxu0
      %v434 = vadd.f32 0.0, %v433
      %v435 = vpop.f32.mrf.mxu0
      %v436 = vpop.f32.mrf.mxu0
      %v437 = vpop.f32.mrf.mxu0
      %438 = vdwg.mxu0
      %v440 = vunpack.c.l.b16 %v327
      %v441 = vpack.c.b16 %v440, %v440
      %442 = vrot.lane.b32.xlu0 %v441, 96
      %v443 = vpop.permute.xlu0 %442
      %v445 = vunpack.c.l.b16 %v328
      %v446 = vpack.c.b16 %v445, %v445
      %447 = vrot.lane.b32.xlu0 %v446, 96
      %v448 = vpop.permute.xlu0 %447
      %v450 = vsel %vm330, %v443, 0
      %v453 = vsel %vm330, %v448, 0
      %455 = vmatprep.subr.bf16.mxu0 0
      %456 = vmatpush1.bf16.xpose.msra.mxu0 0
      %457 = vmatprep.subr.bf16.mxu0 0
      %458 = vmatpush1.bf16.xpose.msra.mxu0 0
      %459 = vmatprep.subr.bf16.mxu0 0
      %460 = vmatpush1.bf16.xpose.msra.mxu0 0
      %461 = vmatprep.subr.bf16.mxu0 0
      %462 = vmatpush1.bf16.xpose.msra.mxu0 0
      %463 = vmatprep.subr.bf16.mxu0 0
      %464 = vmatpush1.bf16.xpose.msra.mxu0 0
      %465 = vmatprep.subr.bf16.mxu0 0
      %466 = vmatpush1.bf16.xpose.msra.mxu0 0
      %467 = vmatprep.subr.bf16.mxu0 0
      %468 = vmatpush1.bf16.xpose.msra.mxu0 0
      %469 = vmatprep.subr.bf16.mxu0 0
      %470 = vmatpush1.bf16.xpose.msra.mxu0 %v453
      %471 = vmatprep.subr.bf16.mxu0 0
      %472 = vmatpush2.bf16.xpose.msra.mxu0 0
      %473 = vmatprep.subr.bf16.mxu0 0
      %474 = vmatpush2.bf16.xpose.msra.mxu0 0
      %475 = vmatprep.subr.bf16.mxu0 0
      %476 = vmatpush2.bf16.xpose.msra.mxu0 0
      %477 = vmatprep.subr.bf16.mxu0 0
      %478 = vmatpush2.bf16.xpose.msra.mxu0 0
      %479 = vmatprep.subr.bf16.mxu0 0
      %480 = vmatpush2.bf16.xpose.msra.mxu0 0
      %481 = vmatprep.subr.bf16.mxu0 0
      %482 = vmatpush2.bf16.xpose.msra.mxu0 0
      %483 = vmatprep.subr.bf16.mxu0 0
      %484 = vmatpush2.bf16.xpose.msra.mxu0 0
      %485 = vmatprep.subr.bf16.mxu0 0
      %486 = vmatpush2.bf16.xpose.msra.mxu0 0
      %487 = vmatprep.mubr.bf16.mxu0 0
      %488 = vmatmul.mubr.bf16.gmra.mxu0 %v450
      %v489 = vpop.f32.mrf.mxu0
      %v490 = vadd.f32 0.0, %v489
      %v491 = vpop.f32.mrf.mxu0
      %v492 = vpop.f32.mrf.mxu0
      %v493 = vpop.f32.mrf.mxu0
      %494 = vdwg.mxu0
      %v495 = vmul.f32 %v490, 0.17677669
      %v496 = vadd.f32 %v495, %v325
      %v497 = vsel %vm379, %v496, -inf
      %498 = vmax.xlane.f32.xlu0 %v497
      %v499 = vpop.xlane.xlu0 %498
      %v500 = vsub.f32 %v496, %v499
      %v501 = vmul.f32 %v500, 1.442695
      %v502 = vpow.pop %v501
      %v503 = vsel %vm379, %v502, 0.0
      %504 = vadd.xlane.f32.xlu0 %v503
      %v505 = vpop.xlane.xlu0 %504
      %v506 = vrcp.pop %v505
      %v507 = vmul.f32 %v502, %v506
      %v508 = vpack.c.bf16 %v507, %v507
      %v510 = vunpack.c.l.b16 %v329
      %v511 = vpack.c.b16 %v510, %v510
      %512 = vrot.lane.b32.xlu0 %v511, 96
      %v513 = vpop.permute.xlu0 %512
      %v515 = vsel %vm379, %v508, 0
      %v518 = vsel %vm395, %v513, 0
      %520 = vmatprep.subr.bf16.mxu0 0
      %521 = vmatpush1.bf16.msra.mxu0 0
      %522 = vmatprep.subr.bf16.mxu0 0
      %523 = vmatpush1.bf16.msra.mxu0 0
      %524 = vmatprep.subr.bf16.mxu0 0
      %525 = vmatpush1.bf16.msra.mxu0 0
      %526 = vmatprep.subr.bf16.mxu0 0
      %527 = vmatpush1.bf16.msra.mxu0 0
      %528 = vmatprep.subr.bf16.mxu0 0
      %529 = vmatpush1.bf16.msra.mxu0 0
      %530 = vmatprep.subr.bf16.mxu0 0
      %531 = vmatpush1.bf16.msra.mxu0 0
      %532 = vmatprep.subr.bf16.mxu0 0
      %533 = vmatpush1.bf16.msra.mxu0 0
      %534 = vmatprep.subr.bf16.mxu0 0
      %535 = vmatpush1.bf16.msra.mxu0 %v518
      %536 = vmatprep.subr.bf16.mxu0 0
      %537 = vmatpush2.bf16.msra.mxu0 0
      %538 = vmatprep.subr.bf16.mxu0 0
      %539 = vmatpush2.bf16.msra.mxu0 0
      %540 = vmatprep.subr.bf16.mxu0 0
      %541 = vmatpush2.bf16.msra.mxu0 0
      %542 = vmatprep.subr.bf16.mxu0 0
      %543 = vmatpush2.bf16.msra.mxu0 0
      %544 = vmatprep.subr.bf16.mxu0 0
      %545 = vmatpush2.bf16.msra.mxu0 0
      %546 = vmatprep.subr.bf16.mxu0 0
      %547 = vmatpush2.bf16.msra.mxu0 0
      %548 = vmatprep.subr.bf16.mxu0 0
      %549 = vmatpush2.bf16.msra.mxu0 0
      %550 = vmatprep.subr.bf16.mxu0 0
      %551 = vmatpush2.bf16.msra.mxu0 0
      %552 = vmatprep.mubr.bf16.mxu0 0
      %553 = vmatmul.mubr.bf16.gmra.mxu0 %v515
      %v554 = vpop.f32.mrf.mxu0
      %v555 = vadd.f32 0.0, %v554
      %v556 = vpop.f32.mrf.mxu0
      %v557 = vpop.f32.mrf.mxu0
      %v558 = vpop.f32.mrf.mxu0
      %559 = vdwg.mxu0
      %560 = vrot.lane.b32.xlu0 %v441, 64
      %v561 = vpop.permute.xlu0 %560
      %562 = vrot.lane.b32.xlu0 %v446, 64
      %v563 = vpop.permute.xlu0 %562
      %v565 = vsel %vm330, %v561, 0
      %v568 = vsel %vm330, %v563, 0
      %570 = vmatprep.subr.bf16.mxu0 0
      %571 = vmatpush1.bf16.xpose.msra.mxu0 0
      %572 = vmatprep.subr.bf16.mxu0 0
      %573 = vmatpush1.bf16.xpose.msra.mxu0 0
      %574 = vmatprep.subr.bf16.mxu0 0
      %575 = vmatpush1.bf16.xpose.msra.mxu0 0
      %576 = vmatprep.subr.bf16.mxu0 0
      %577 = vmatpush1.bf16.xpose.msra.mxu0 0
      %578 = vmatprep.subr.bf16.mxu0 0
      %579 = vmatpush1.bf16.xpose.msra.mxu0 0
      %580 = vmatprep.subr.bf16.mxu0 0
      %581 = vmatpush1.bf16.xpose.msra.mxu0 0
      %582 = vmatprep.subr.bf16.mxu0 0
      %583 = vmatpush1.bf16.xpose.msra.mxu0 0
      %584 = vmatprep.subr.bf16.mxu0 0
      %585 = vmatpush1.bf16.xpose.msra.mxu0 %v568
      %586 = vmatprep.subr.bf16.mxu0 0
      %587 = vmatpush2.bf16.xpose.msra.mxu0 0
      %588 = vmatprep.subr.bf16.mxu0 0
      %589 = vmatpush2.bf16.xpose.msra.mxu0 0
      %590 = vmatprep.subr.bf16.mxu0 0
      %591 = vmatpush2.bf16.xpose.msra.mxu0 0
      %592 = vmatprep.subr.bf16.mxu0 0
      %593 = vmatpush2.bf16.xpose.msra.mxu0 0
      %594 = vmatprep.subr.bf16.mxu0 0
      %595 = vmatpush2.bf16.xpose.msra.mxu0 0
      %596 = vmatprep.subr.bf16.mxu0 0
      %597 = vmatpush2.bf16.xpose.msra.mxu0 0
      %598 = vmatprep.subr.bf16.mxu0 0
      %599 = vmatpush2.bf16.xpose.msra.mxu0 0
      %600 = vmatprep.subr.bf16.mxu0 0
      %601 = vmatpush2.bf16.xpose.msra.mxu0 0
      %602 = vmatprep.mubr.bf16.mxu0 0
      %603 = vmatmul.mubr.bf16.gmra.mxu0 %v565
      %v604 = vpop.f32.mrf.mxu0
      %v605 = vadd.f32 0.0, %v604
      %v606 = vpop.f32.mrf.mxu0
      %v607 = vpop.f32.mrf.mxu0
      %v608 = vpop.f32.mrf.mxu0
      %609 = vdwg.mxu0
      %v610 = vmul.f32 %v605, 0.17677669
      %v611 = vadd.f32 %v610, %v325
      %v612 = vsel %vm379, %v611, -inf
      %613 = vmax.xlane.f32.xlu0 %v612
      %v614 = vpop.xlane.xlu0 %613
      %v615 = vsub.f32 %v611, %v614
      %v616 = vmul.f32 %v615, 1.442695
      %v617 = vpow.pop %v616
      %v618 = vsel %vm379, %v617, 0.0
      %619 = vadd.xlane.f32.xlu0 %v618
      %v620 = vpop.xlane.xlu0 %619
      %v621 = vrcp.pop %v620
      %v622 = vmul.f32 %v617, %v621
      %v623 = vpack.c.bf16 %v622, %v622
      %624 = vrot.lane.b32.xlu0 %v511, 64
      %v625 = vpop.permute.xlu0 %624
      %v627 = vsel %vm379, %v623, 0
      %v630 = vsel %vm395, %v625, 0
      %632 = vmatprep.subr.bf16.mxu0 0
      %633 = vmatpush1.bf16.msra.mxu0 0
      %634 = vmatprep.subr.bf16.mxu0 0
      %635 = vmatpush1.bf16.msra.mxu0 0
      %636 = vmatprep.subr.bf16.mxu0 0
      %637 = vmatpush1.bf16.msra.mxu0 0
      %638 = vmatprep.subr.bf16.mxu0 0
      %639 = vmatpush1.bf16.msra.mxu0 0
      %640 = vmatprep.subr.bf16.mxu0 0
      %641 = vmatpush1.bf16.msra.mxu0 0
      %642 = vmatprep.subr.bf16.mxu0 0
      %643 = vmatpush1.bf16.msra.mxu0 0
      %644 = vmatprep.subr.bf16.mxu0 0
      %645 = vmatpush1.bf16.msra.mxu0 0
      %646 = vmatprep.subr.bf16.mxu0 0
      %647 = vmatpush1.bf16.msra.mxu0 %v630
      %648 = vmatprep.subr.bf16.mxu0 0
      %649 = vmatpush2.bf16.msra.mxu0 0
      %650 = vmatprep.subr.bf16.mxu0 0
      %651 = vmatpush2.bf16.msra.mxu0 0
      %652 = vmatprep.subr.bf16.mxu0 0
      %653 = vmatpush2.bf16.msra.mxu0 0
      %654 = vmatprep.subr.bf16.mxu0 0
      %655 = vmatpush2.bf16.msra.mxu0 0
      %656 = vmatprep.subr.bf16.mxu0 0
      %657 = vmatpush2.bf16.msra.mxu0 0
      %658 = vmatprep.subr.bf16.mxu0 0
      %659 = vmatpush2.bf16.msra.mxu0 0
      %660 = vmatprep.subr.bf16.mxu0 0
      %661 = vmatpush2.bf16.msra.mxu0 0
      %662 = vmatprep.subr.bf16.mxu0 0
      %663 = vmatpush2.bf16.msra.mxu0 0
      %664 = vmatprep.mubr.bf16.mxu0 0
      %665 = vmatmul.mubr.bf16.gmra.mxu0 %v627
      %v666 = vpop.f32.mrf.mxu0
      %v667 = vadd.f32 0.0, %v666
      %v668 = vpop.f32.mrf.mxu0
      %v669 = vpop.f32.mrf.mxu0
      %v670 = vpop.f32.mrf.mxu0
      %671 = vdwg.mxu0
      %672 = vrot.lane.b32.xlu0 %v441, 32
      %v673 = vpop.permute.xlu0 %672
      %674 = vrot.lane.b32.xlu0 %v446, 32
      %v675 = vpop.permute.xlu0 %674
      %v677 = vsel %vm330, %v673, 0
      %v680 = vsel %vm330, %v675, 0
      %682 = vmatprep.subr.bf16.mxu0 0
      %683 = vmatpush1.bf16.xpose.msra.mxu0 0
      %684 = vmatprep.subr.bf16.mxu0 0
      %685 = vmatpush1.bf16.xpose.msra.mxu0 0
      %686 = vmatprep.subr.bf16.mxu0 0
      %687 = vmatpush1.bf16.xpose.msra.mxu0 0
      %688 = vmatprep.subr.bf16.mxu0 0
      %689 = vmatpush1.bf16.xpose.msra.mxu0 0
      %690 = vmatprep.subr.bf16.mxu0 0
      %691 = vmatpush1.bf16.xpose.msra.mxu0 0
      %692 = vmatprep.subr.bf16.mxu0 0
      %693 = vmatpush1.bf16.xpose.msra.mxu0 0
      %694 = vmatprep.subr.bf16.mxu0 0
      %695 = vmatpush1.bf16.xpose.msra.mxu0 0
      %696 = vmatprep.subr.bf16.mxu0 0
      %697 = vmatpush1.bf16.xpose.msra.mxu0 %v680
      %698 = vmatprep.subr.bf16.mxu0 0
      %699 = vmatpush2.bf16.xpose.msra.mxu0 0
      %700 = vmatprep.subr.bf16.mxu0 0
      %701 = vmatpush2.bf16.xpose.msra.mxu0 0
      %702 = vmatprep.subr.bf16.mxu0 0
      %703 = vmatpush2.bf16.xpose.msra.mxu0 0
      %704 = vmatprep.subr.bf16.mxu0 0
      %705 = vmatpush2.bf16.xpose.msra.mxu0 0
      %706 = vmatprep.subr.bf16.mxu0 0
      %707 = vmatpush2.bf16.xpose.msra.mxu0 0
      %708 = vmatprep.subr.bf16.mxu0 0
      %709 = vmatpush2.bf16.xpose.msra.mxu0 0
      %710 = vmatprep.subr.bf16.mxu0 0
      %711 = vmatpush2.bf16.xpose.msra.mxu0 0
      %712 = vmatprep.subr.bf16.mxu0 0
      %713 = vmatpush2.bf16.xpose.msra.mxu0 0
      %714 = vmatprep.mubr.bf16.mxu0 0
      %715 = vmatmul.mubr.bf16.gmra.mxu0 %v677
      %v716 = vpop.f32.mrf.mxu0
      %v717 = vadd.f32 0.0, %v716
      %v718 = vpop.f32.mrf.mxu0
      %v719 = vpop.f32.mrf.mxu0
      %v720 = vpop.f32.mrf.mxu0
      %721 = vdwg.mxu0
      %v722 = vmul.f32 %v717, 0.17677669
      %v723 = vadd.f32 %v722, %v325
      %v724 = vsel %vm379, %v723, -inf
      %725 = vmax.xlane.f32.xlu0 %v724
      %v726 = vpop.xlane.xlu0 %725
      %v727 = vsub.f32 %v723, %v726
      %v728 = vmul.f32 %v727, 1.442695
      %v729 = vpow.pop %v728
      %v730 = vsel %vm379, %v729, 0.0
      %731 = vadd.xlane.f32.xlu0 %v730
      %v732 = vpop.xlane.xlu0 %731
      %v733 = vrcp.pop %v732
      %v734 = vmul.f32 %v729, %v733
      %v735 = vpack.c.bf16 %v734, %v734
      %736 = vrot.lane.b32.xlu0 %v511, 32
      %v737 = vpop.permute.xlu0 %736
      %v739 = vsel %vm379, %v735, 0
      %v742 = vsel %vm395, %v737, 0
      %744 = vmatprep.subr.bf16.mxu0 0
      %745 = vmatpush1.bf16.msra.mxu0 0
      %746 = vmatprep.subr.bf16.mxu0 0
      %747 = vmatpush1.bf16.msra.mxu0 0
      %748 = vmatprep.subr.bf16.mxu0 0
      %749 = vmatpush1.bf16.msra.mxu0 0
      %750 = vmatprep.subr.bf16.mxu0 0
      %751 = vmatpush1.bf16.msra.mxu0 0
      %752 = vmatprep.subr.bf16.mxu0 0
      %753 = vmatpush1.bf16.msra.mxu0 0
      %754 = vmatprep.subr.bf16.mxu0 0
      %755 = vmatpush1.bf16.msra.mxu0 0
      %756 = vmatprep.subr.bf16.mxu0 0
      %757 = vmatpush1.bf16.msra.mxu0 0
      %758 = vmatprep.subr.bf16.mxu0 0
      %759 = vmatpush1.bf16.msra.mxu0 %v742
      %760 = vmatprep.subr.bf16.mxu0 0
      %761 = vmatpush2.bf16.msra.mxu0 0
      %762 = vmatprep.subr.bf16.mxu0 0
      %763 = vmatpush2.bf16.msra.mxu0 0
      %764 = vmatprep.subr.bf16.mxu0 0
      %765 = vmatpush2.bf16.msra.mxu0 0
      %766 = vmatprep.subr.bf16.mxu0 0
      %767 = vmatpush2.bf16.msra.mxu0 0
      %768 = vmatprep.subr.bf16.mxu0 0
      %769 = vmatpush2.bf16.msra.mxu0 0
      %770 = vmatprep.subr.bf16.mxu0 0
      %771 = vmatpush2.bf16.msra.mxu0 0
      %772 = vmatprep.subr.bf16.mxu0 0
      %773 = vmatpush2.bf16.msra.mxu0 0
      %774 = vmatprep.subr.bf16.mxu0 0
      %775 = vmatpush2.bf16.msra.mxu0 0
      %776 = vmatprep.mubr.bf16.mxu0 0
      %777 = vmatmul.mubr.bf16.gmra.mxu0 %v739
      %v778 = vpop.f32.mrf.mxu0
      %v779 = vadd.f32 0.0, %v778
      %v780 = vpop.f32.mrf.mxu0
      %v781 = vpop.f32.mrf.mxu0
      %v782 = vpop.f32.mrf.mxu0
      %783 = vdwg.mxu0
      %785 = vrot.lane.b32.xlu0 %v555, 32
      %v786 = vpop.permute.xlu0 %785
      %789 = vrot.lane.b32.xlu0 %v667, 64
      %v790 = vpop.permute.xlu0 %789
      %793 = vrot.lane.b32.xlu0 %v779, 96
      %v794 = vpop.permute.xlu0 %793
      %v796 = vsel %vm330, %v434, %v786
      %vm797 = vcmask 523264
      %v798 = vsel %vm797, %v796, %v790
      %vm799 = vcmask 785408
      %v800 = vsel %vm799, %v798, %v794
      %v801 = vpack.c.bf16 %v800, %v800
      %802 = vst [vmem:[%s316] sm:$0xf] %v801
      %p803 = scmp.lt.s32.totalorder %s19, 1
      %s804 = scalar_select %p803, %s19, 1
      %p805 = scmp.lt.s32.totalorder %s20, 0
      %s806 = scalar_select %p805, %s20, 0
      %s807 = sadd.s32 %s806, %s804
      %s808 = smul.addr %s807, 4
      %s809 = scalar_lea.vmem %s4, %s808
      // Predicated region
      $region37: #{distilbert_classifier_forward.15} parent=35 // pred_check
        %p810 = pneg %p161
      $region38: #{distilbert_classifier_forward.15} parent=35 // pred_check_branch
        %812 = sbr.rel (%p810) target = $region40
      $region39: #{distilbert_classifier_forward.15} parent=35 // pred_region
        _
      $region40: #{distilbert_classifier_forward.15} parent=35 // pred_fallthru
        _
    $region36: #{distilbert_classifier_forward.15} parent=5 // pred_fallthru
      _
    %p813 = scmp.le.s32.totalorder 2, %s10
    // Predicated region
    $region41: #{distilbert_classifier_forward.15} parent=5 // pred_check
      %p814 = pneg %p813
    $region42: #{distilbert_classifier_forward.15} parent=5 // pred_check_branch
      %816 = sbr.rel (%p814) target = $region44
    $region43: #{distilbert_classifier_forward.15} parent=5 // pred_region
      %s817 = ssub.s32 %s10, 2
      // Predicated region
      $region45: #{distilbert_classifier_forward.15} parent=43 // pred_check
        %p818 = pneg %p167
      $region46: #{distilbert_classifier_forward.15} parent=43 // pred_check_branch
        %820 = sbr.rel (%p818) target = $region48
      $region47: #{distilbert_classifier_forward.15} parent=43 // pred_region
        %p821 = scmp.lt.s32.totalorder %s21, 1
        %s822 = scalar_select %p821, %s21, 1
        %p823 = scmp.lt.s32.totalorder %s22, 0
        %s824 = scalar_select %p823, %s22, 0
        %s825 = sadd.s32 %s824, %s822
        %s826 = smul.addr %s825, 4
        %s827 = scalar_lea.vmem %s4, %s826
      $region48: #{distilbert_classifier_forward.15} parent=43 // pred_fallthru
        _
    $region44: #{distilbert_classifier_forward.15} parent=5 // pred_fallthru
      _
  $region6: #{distilbert_classifier_forward.15} parent=0 // loop_footer
    %s14 = sadd.s32 1, %s10
  $region7: #{distilbert_classifier_forward.15} parent=0 // loop_footer_branch
    %9 = sbr.rel target = $region3
  $region8: #{distilbert_classifier_forward.15} parent=0 // loop_exit
    _

// kernel: distilbert_classifier_forward.24
$region0: #{distilbert_classifier_forward.24}
  #allocation0 [shape = 'u32[]', space=smem, size = 0x4, offset = 0x4, fixed_abs, tag = 'smem constant byte address 0x4 - core index']
  #allocation1 [shape = 'u32[144,128]{1,0:T(1,128)}', space=vmem, size = 0x12000, scoped, tag = 'internal scratch']
  #allocation2 [shape = 'f32[2,128]{1,0:T(2,128)}', space=vmem, size = 0x400, scoped, tag = 'scratch operand']
  %s0 = inlined_call_operand.vmem [shape: bf16[2,128], index: 0, kind: input, shape index: {}]
  %s1 = inlined_call_operand.vmem [shape: bf16[128,128], index: 1, kind: input, shape index: {}]
  %s2 = inlined_call_operand.vmem [shape: f32[1,128], index: 2, kind: input, shape index: {}]
  %s3 = inlined_call_operand.vmem [shape: bf16[2,128], index: 3, kind: output, shape index: {}]
  %s4 = sld [smem:[#allocation0]]
  $region30: #{distilbert_classifier_forward.24} parent=0
    _
  %s6 = ssub.s32 1, %s4
  %s7 = scalar_select 0, %s6, %s4
  // Predicated region
  $region2: #{distilbert_classifier_forward.24} parent=0 // pred_check
    _
  $region3: #{distilbert_classifier_forward.24} parent=0 // pred_check_branch
    %9 = sbr.rel (0) target = $region5
  $region4: #{distilbert_classifier_forward.24} parent=0 // pred_region
    _
  $region5: #{distilbert_classifier_forward.24} parent=0 // pred_fallthru
    _
  // Predicated region
  $region6: #{distilbert_classifier_forward.24} parent=0 // pred_check
    _
  $region7: #{distilbert_classifier_forward.24} parent=0 // pred_check_branch
    %11 = sbr.rel (0) target = $region9
  $region8: #{distilbert_classifier_forward.24} parent=0 // pred_region
    _
  $region9: #{distilbert_classifier_forward.24} parent=0 // pred_fallthru
    _
  // Predicated region
  $region10: #{distilbert_classifier_forward.24} parent=0 // pred_check
    _
  $region11: #{distilbert_classifier_forward.24} parent=0 // pred_check_branch
    %13 = sbr.rel (0) target = $region13
  $region12: #{distilbert_classifier_forward.24} parent=0 // pred_region
    _
  $region13: #{distilbert_classifier_forward.24} parent=0 // pred_fallthru
    _
  %p15 = scmp.eq.s32.totalorder 0, 0
  // Predicated region
  $region14: #{distilbert_classifier_forward.24} parent=0 // pred_check
    %p16 = pneg %p15
  $region15: #{distilbert_classifier_forward.24} parent=0 // pred_check_branch
    %18 = sbr.rel (%p16) target = $region17
  $region16: #{distilbert_classifier_forward.24} parent=0 // pred_region
    %19 = vst [vmem:[#allocation2] sm:$0x3] 0.0
  $region17: #{distilbert_classifier_forward.24} parent=0 // pred_fallthru
    _
  %v20 = vld [vmem:[#allocation2] sm:$0x3]
  %v21 = vld [vmem:[%s0] sm:$0x1]
  %v22 = vld [vmem:[%s1] sm:$0xf]
  %v23 = vld [vmem:[%s1 + $0x4] sm:$0xf]
  %v24 = vld [vmem:[%s1 + $0x8] sm:$0xf]
  %v25 = vld [vmem:[%s1 + $0xc] sm:$0xf]
  %v26 = vld [vmem:[%s1 + $0x10] sm:$0xf]
  %v27 = vld [vmem:[%s1 + $0x14] sm:$0xf]
  %v28 = vld [vmem:[%s1 + $0x18] sm:$0xf]
  %v29 = vld [vmem:[%s1 + $0x1c] sm:$0xf]
  %v30 = vld [vmem:[%s1 + $0x20] sm:$0xf]
  %v31 = vld [vmem:[%s1 + $0x24] sm:$0xf]
  %v32 = vld [vmem:[%s1 + $0x28] sm:$0xf]
  %v33 = vld [vmem:[%s1 + $0x2c] sm:$0xf]
  %v34 = vld [vmem:[%s1 + $0x30] sm:$0xf]
  %v35 = vld [vmem:[%s1 + $0x34] sm:$0xf]
  %v36 = vld [vmem:[%s1 + $0x38] sm:$0xf]
  %v37 = vld [vmem:[%s1 + $0x3c] sm:$0xf]
  %v54 = vunpack.c.l.b16 %v22
  %v55 = vunpack.c.l.b16 %v23
  %v56 = vunpack.c.l.b16 %v24
  %v57 = vunpack.c.l.b16 %v25
  %v58 = vunpack.c.l.b16 %v26
  %v59 = vunpack.c.l.b16 %v27
  %v60 = vunpack.c.l.b16 %v28
  %v61 = vunpack.c.l.b16 %v29
  %v62 = vunpack.c.l.b16 %v30
  %v63 = vunpack.c.l.b16 %v31
  %v64 = vunpack.c.l.b16 %v32
  %v65 = vunpack.c.l.b16 %v33
  %v66 = vunpack.c.l.b16 %v34
  %v67 = vunpack.c.l.b16 %v35
  %v68 = vunpack.c.l.b16 %v36
  %v69 = vunpack.c.l.b16 %v37
  %v70 = vpack.c.b16 %v55, %v54
  %v71 = vpack.c.b16 %v57, %v56
  %v72 = vpack.c.b16 %v59, %v58
  %v73 = vpack.c.b16 %v61, %v60
  %v74 = vpack.c.b16 %v63, %v62
  %v75 = vpack.c.b16 %v65, %v64
  %v76 = vpack.c.b16 %v67, %v66
  %v77 = vpack.c.b16 %v69, %v68
  %86 = vmatprep.subr.bf16.mxu0 0
  %87 = vmatpush1.bf16.msra.mxu0 %v77
  %88 = vmatprep.subr.bf16.mxu0 0
  %89 = vmatpush1.bf16.msra.mxu0 %v76
  %90 = vmatprep.subr.bf16.mxu0 0
  %91 = vmatpush1.bf16.msra.mxu0 %v75
  %92 = vmatprep.subr.bf16.mxu0 0
  %93 = vmatpush1.bf16.msra.mxu0 %v74
  %94 = vmatprep.subr.bf16.mxu0 0
  %95 = vmatpush1.bf16.msra.mxu0 %v73
  %96 = vmatprep.subr.bf16.mxu0 0
  %97 = vmatpush1.bf16.msra.mxu0 %v72
  %98 = vmatprep.subr.bf16.mxu0 0
  %99 = vmatpush1.bf16.msra.mxu0 %v71
  %100 = vmatprep.subr.bf16.mxu0 0
  %101 = vmatpush1.bf16.msra.mxu0 %v70
  %102 = vmatprep.subr.bf16.mxu0 0
  %103 = vmatpush2.bf16.msra.mxu0 0
  %104 = vmatprep.subr.bf16.mxu0 0
  %105 = vmatpush2.bf16.msra.mxu0 0
  %106 = vmatprep.subr.bf16.mxu0 0
  %107 = vmatpush2.bf16.msra.mxu0 0
  %108 = vmatprep.subr.bf16.mxu0 0
  %109 = vmatpush2.bf16.msra.mxu0 0
  %110 = vmatprep.subr.bf16.mxu0 0
  %111 = vmatpush2.bf16.msra.mxu0 0
  %112 = vmatprep.subr.bf16.mxu0 0
  %113 = vmatpush2.bf16.msra.mxu0 0
  %114 = vmatprep.subr.bf16.mxu0 0
  %115 = vmatpush2.bf16.msra.mxu0 0
  %116 = vmatprep.subr.bf16.mxu0 0
  %117 = vmatpush2.bf16.msra.mxu0 0
  %118 = vmatprep.mubr.bf16.mxu0 0
  %119 = vmatmul.mubr.bf16.gmra.mxu0 %v21
  %v120 = vpop.f32.mrf.mxu0
  %v121 = vadd.f32 0.0, %v120
  %v122 = vpop.f32.mrf.mxu0
  %v123 = vpop.f32.mrf.mxu0
  %v124 = vpop.f32.mrf.mxu0
  %125 = vdwg.mxu0
  %v126 = vadd.f32 %v20, %v121
  %127 = vst [vmem:[#allocation2] sm:$0x3] %v126
  // Predicated region
  $region18: #{distilbert_classifier_forward.24} parent=0 // pred_check
    %p128 = pneg %p15
  $region19: #{distilbert_classifier_forward.24} parent=0 // pred_check_branch
    %130 = sbr.rel (%p128) target = $region21
  $region20: #{distilbert_classifier_forward.24} parent=0 // pred_region
    %v131 = vld [vmem:[#allocation2] sm:$0x3]
    %v132 = vld [vmem:[%s2] sm:$0x1]
    %v134 = vlaneseq
    %v135 = vshrl.u32 %v134, 7
    %v136 = vsub.s32 0, %v135
    %v137 = vrot.slane %v132, %v136
    %v139 = vadd.f32 %v131, %v137
    %v140 = vmax.f32 %v139, 0.0
    %v141 = vpack.c.bf16 %v140, %v140
    %142 = vst [vmem:[%s3] sm:$0x1] %v141
  $region21: #{distilbert_classifier_forward.24} parent=0 // pred_fallthru
    _
  // Predicated region
  $region22: #{distilbert_classifier_forward.24} parent=0 // pred_check
    _
  $region23: #{distilbert_classifier_forward.24} parent=0 // pred_check_branch
    %144 = sbr.rel (0) target = $region25
  $region24: #{distilbert_classifier_forward.24} parent=0 // pred_region
    _
  $region25: #{distilbert_classifier_forward.24} parent=0 // pred_fallthru
    _
  // Predicated region
  $region26: #{distilbert_classifier_forward.24} parent=0 // pred_check
    _
  $region27: #{distilbert_classifier_forward.24} parent=0 // pred_check_branch
    %146 = sbr.rel (0) target = $region29
  $region28: #{distilbert_classifier_forward.24} parent=0 // pred_region
    _
  $region29: #{distilbert_classifier_forward.24} parent=0 // pred_fallthru
    _

// kernel: distilbert_classifier_forward.25
$region0: #{distilbert_classifier_forward.25}
  #allocation0 [shape = 'u32[]', space=smem, size = 0x4, offset = 0x4, fixed_abs, tag = 'smem constant byte address 0x4 - core index']
  #allocation1 [shape = 'u32[144,128]{1,0:T(1,128)}', space=vmem, size = 0x12000, scoped, tag = 'internal scratch']
  #allocation2 [shape = 'f32[2,128]{1,0:T(2,128)}', space=vmem, size = 0x400, scoped, tag = 'scratch operand']
  %s0 = inlined_call_operand.vmem [shape: bf16[2,128], index: 0, kind: input, shape index: {}]
  %s1 = inlined_call_operand.vmem [shape: bf16[128,128], index: 1, kind: input, shape index: {}]
  %s2 = inlined_call_operand.vmem [shape: f32[1,128], index: 2, kind: input, shape index: {}]
  %s3 = inlined_call_operand.hbm [shape: f32[2,128], index: 3, kind: output, shape index: {}]
  %s4 = sld [smem:[#allocation0]]
  $region30: #{distilbert_classifier_forward.25} parent=0
    _
  %s6 = ssub.s32 1, %s4
  %s7 = scalar_select 0, %s6, %s4
  $region1: #{distilbert_classifier_forward.25} parent=0
    #allocation3 [shape = 'u8[1024]{0}', space=vmem, size = 0x400, scoped, tag = 'output window, operand 0, single buffered']
    #allocation4 [shape = 's32[1]{0}', space=sflag, size = 0x4, scoped, tag = 'scoped memory for distilbert_classifier_forward.25']
    %8 = vsyncpa [#allocation4], 0
    // Predicated region
    $region2: #{distilbert_classifier_forward.25} parent=1 // pred_check
      _
    $region3: #{distilbert_classifier_forward.25} parent=1 // pred_check_branch
      %10 = sbr.rel (0) target = $region5
    $region4: #{distilbert_classifier_forward.25} parent=1 // pred_region
      _
    $region5: #{distilbert_classifier_forward.25} parent=1 // pred_fallthru
      _
    // Predicated region
    $region6: #{distilbert_classifier_forward.25} parent=1 // pred_check
      _
    $region7: #{distilbert_classifier_forward.25} parent=1 // pred_check_branch
      %12 = sbr.rel (0) target = $region9
    $region8: #{distilbert_classifier_forward.25} parent=1 // pred_region
      _
    $region9: #{distilbert_classifier_forward.25} parent=1 // pred_fallthru
      _
    // Predicated region
    $region10: #{distilbert_classifier_forward.25} parent=1 // pred_check
      _
    $region11: #{distilbert_classifier_forward.25} parent=1 // pred_check_branch
      %14 = sbr.rel (0) target = $region13
    $region12: #{distilbert_classifier_forward.25} parent=1 // pred_region
      _
    $region13: #{distilbert_classifier_forward.25} parent=1 // pred_fallthru
      _
    %p16 = scmp.eq.s32.totalorder 0, 0
    // Predicated region
    $region14: #{distilbert_classifier_forward.25} parent=1 // pred_check
      %p17 = pneg %p16
    $region15: #{distilbert_classifier_forward.25} parent=1 // pred_check_branch
      %19 = sbr.rel (%p17) target = $region17
    $region16: #{distilbert_classifier_forward.25} parent=1 // pred_region
      %20 = vst [vmem:[#allocation2] sm:$0x3] 0.0
    $region17: #{distilbert_classifier_forward.25} parent=1 // pred_fallthru
      _
    %v21 = vld [vmem:[#allocation2] sm:$0x3]
    %v22 = vld [vmem:[%s0] sm:$0x1]
    %v23 = vld [vmem:[%s1] sm:$0xf]
    %v24 = vld [vmem:[%s1 + $0x4] sm:$0xf]
    %v25 = vld [vmem:[%s1 + $0x8] sm:$0xf]
    %v26 = vld [vmem:[%s1 + $0xc] sm:$0xf]
    %v27 = vld [vmem:[%s1 + $0x10] sm:$0xf]
    %v28 = vld [vmem:[%s1 + $0x14] sm:$0xf]
    %v29 = vld [vmem:[%s1 + $0x18] sm:$0xf]
    %v30 = vld [vmem:[%s1 + $0x1c] sm:$0xf]
    %v31 = vld [vmem:[%s1 + $0x20] sm:$0xf]
    %v32 = vld [vmem:[%s1 + $0x24] sm:$0xf]
    %v33 = vld [vmem:[%s1 + $0x28] sm:$0xf]
    %v34 = vld [vmem:[%s1 + $0x2c] sm:$0xf]
    %v35 = vld [vmem:[%s1 + $0x30] sm:$0xf]
    %v36 = vld [vmem:[%s1 + $0x34] sm:$0xf]
    %v37 = vld [vmem:[%s1 + $0x38] sm:$0xf]
    %v38 = vld [vmem:[%s1 + $0x3c] sm:$0xf]
    %v55 = vunpack.c.l.b16 %v23
    %v56 = vunpack.c.l.b16 %v24
    %v57 = vunpack.c.l.b16 %v25
    %v58 = vunpack.c.l.b16 %v26
    %v59 = vunpack.c.l.b16 %v27
    %v60 = vunpack.c.l.b16 %v28
    %v61 = vunpack.c.l.b16 %v29
    %v62 = vunpack.c.l.b16 %v30
    %v63 = vunpack.c.l.b16 %v31
    %v64 = vunpack.c.l.b16 %v32
    %v65 = vunpack.c.l.b16 %v33
    %v66 = vunpack.c.l.b16 %v34
    %v67 = vunpack.c.l.b16 %v35
    %v68 = vunpack.c.l.b16 %v36
    %v69 = vunpack.c.l.b16 %v37
    %v70 = vunpack.c.l.b16 %v38
    %v71 = vpack.c.b16 %v56, %v55
    %v72 = vpack.c.b16 %v58, %v57
    %v73 = vpack.c.b16 %v60, %v59
    %v74 = vpack.c.b16 %v62, %v61
    %v75 = vpack.c.b16 %v64, %v63
    %v76 = vpack.c.b16 %v66, %v65
    %v77 = vpack.c.b16 %v68, %v67
    %v78 = vpack.c.b16 %v70, %v69
    %87 = vmatprep.subr.bf16.mxu0 0
    %88 = vmatpush1.bf16.msra.mxu0 %v78
    %89 = vmatprep.subr.bf16.mxu0 0
    %90 = vmatpush1.bf16.msra.mxu0 %v77
    %91 = vmatprep.subr.bf16.mxu0 0
    %92 = vmatpush1.bf16.msra.mxu0 %v76
    %93 = vmatprep.subr.bf16.mxu0 0
    %94 = vmatpush1.bf16.msra.mxu0 %v75
    %95 = vmatprep.subr.bf16.mxu0 0
    %96 = vmatpush1.bf16.msra.mxu0 %v74
    %97 = vmatprep.subr.bf16.mxu0 0
    %98 = vmatpush1.bf16.msra.mxu0 %v73
    %99 = vmatprep.subr.bf16.mxu0 0
    %100 = vmatpush1.bf16.msra.mxu0 %v72
    %101 = vmatprep.subr.bf16.mxu0 0
    %102 = vmatpush1.bf16.msra.mxu0 %v71
    %103 = vmatprep.subr.bf16.mxu0 0
    %104 = vmatpush2.bf16.msra.mxu0 0
    %105 = vmatprep.subr.bf16.mxu0 0
    %106 = vmatpush2.bf16.msra.mxu0 0
    %107 = vmatprep.subr.bf16.mxu0 0
    %108 = vmatpush2.bf16.msra.mxu0 0
    %109 = vmatprep.subr.bf16.mxu0 0
    %110 = vmatpush2.bf16.msra.mxu0 0
    %111 = vmatprep.subr.bf16.mxu0 0
    %112 = vmatpush2.bf16.msra.mxu0 0
    %113 = vmatprep.subr.bf16.mxu0 0
    %114 = vmatpush2.bf16.msra.mxu0 0
    %115 = vmatprep.subr.bf16.mxu0 0
    %116 = vmatpush2.bf16.msra.mxu0 0
    %117 = vmatprep.subr.bf16.mxu0 0
    %118 = vmatpush2.bf16.msra.mxu0 0
    %119 = vmatprep.mubr.bf16.mxu0 0
    %120 = vmatmul.mubr.bf16.gmra.mxu0 %v22
    %v121 = vpop.f32.mrf.mxu0
    %v122 = vadd.f32 0.0, %v121
    %v123 = vpop.f32.mrf.mxu0
    %v124 = vpop.f32.mrf.mxu0
    %v125 = vpop.f32.mrf.mxu0
    %126 = vdwg.mxu0
    %v127 = vadd.f32 %v21, %v122
    %128 = vst [vmem:[#allocation2] sm:$0x3] %v127
    // Predicated region
    $region18: #{distilbert_classifier_forward.25} parent=1 // pred_check
      %p129 = pneg %p16
    $region19: #{distilbert_classifier_forward.25} parent=1 // pred_check_branch
      %131 = sbr.rel (%p129) target = $region21
    $region20: #{distilbert_classifier_forward.25} parent=1 // pred_region
      %v132 = vld [vmem:[#allocation2] sm:$0x3]
      %v133 = vld [vmem:[%s2] sm:$0x1]
      %v135 = vlaneseq
      %v136 = vshrl.u32 %v135, 7
      %v137 = vsub.s32 0, %v136
      %v138 = vrot.slane %v133, %v137
      %v140 = vadd.f32 %v132, %v138
      %141 = vst [vmem:[#allocation3] sm:$0x3] %v140
    $region21: #{distilbert_classifier_forward.25} parent=1 // pred_fallthru
      _
    // Predicated region
    $region22: #{distilbert_classifier_forward.25} parent=1 // pred_check
      _
    $region23: #{distilbert_classifier_forward.25} parent=1 // pred_check_branch
      %143 = sbr.rel (0) target = $region25
    $region24: #{distilbert_classifier_forward.25} parent=1 // pred_region
      %s145 = ssub.s32 32, 32
      %146 = vsyncadd [#allocation4], %s145
      %s148 = sshll.u32 [#allocation3], 4
      %s149 = int_to_ptr.vmem [resolvable:$true] %s148
      %151 = dma.vmem_to_hbm [thread:$0]  %s149, 32, %s3, [#allocation4]
    $region25: #{distilbert_classifier_forward.25} parent=1 // pred_fallthru
      _
    // Predicated region
    $region26: #{distilbert_classifier_forward.25} parent=1 // pred_check
      _
    $region27: #{distilbert_classifier_forward.25} parent=1 // pred_check_branch
      %153 = sbr.rel (0) target = $region29
    $region28: #{distilbert_classifier_forward.25} parent=1 // pred_region
      %154 = dma.done [#allocation4], 32
    $region29: #{distilbert_classifier_forward.25} parent=1 // pred_fallthru
      _
    %155 = vsyncpa [#allocation4], 1

// kernel: distilbert_classifier_forward.17
$region0: #{distilbert_classifier_forward.17}
  #allocation0 [shape = 'u32[]', space=smem, size = 0x4, offset = 0x4, fixed_abs, tag = 'smem constant byte address 0x4 - core index']
  #allocation1 [shape = 'u32[144,128]{1,0:T(1,128)}', space=vmem, size = 0x12000, scoped, tag = 'internal scratch']
  #allocation2 [shape = 'f32[16,256]{1,0:T(8,128)}', space=vmem, size = 0x4000, scoped, tag = 'scratch operand']
  %s0 = inlined_call_operand.vmem [shape: bf16[16,128], index: 0, kind: input, shape index: {}]
  %s1 = inlined_call_operand.vmem [shape: bf16[128,256], index: 1, kind: input, shape index: {}]
  %s2 = inlined_call_operand.vmem [shape: f32[1,256], index: 2, kind: input, shape index: {}]
  %s3 = inlined_call_operand.vmem [shape: bf16[16,256], index: 3, kind: output, shape index: {}]
  %s4 = sld [smem:[#allocation0]]
  $region30: #{distilbert_classifier_forward.17} parent=0
    _
  %s6 = ssub.s32 1, %s4
  %s7 = scalar_select 0, %s6, %s4
  // Predicated region
  $region2: #{distilbert_classifier_forward.17} parent=0 // pred_check
    _
  $region3: #{distilbert_classifier_forward.17} parent=0 // pred_check_branch
    %9 = sbr.rel (0) target = $region5
  $region4: #{distilbert_classifier_forward.17} parent=0 // pred_region
    _
  $region5: #{distilbert_classifier_forward.17} parent=0 // pred_fallthru
    _
  // Predicated region
  $region6: #{distilbert_classifier_forward.17} parent=0 // pred_check
    _
  $region7: #{distilbert_classifier_forward.17} parent=0 // pred_check_branch
    %11 = sbr.rel (0) target = $region9
  $region8: #{distilbert_classifier_forward.17} parent=0 // pred_region
    _
  $region9: #{distilbert_classifier_forward.17} parent=0 // pred_fallthru
    _
  // Predicated region
  $region10: #{distilbert_classifier_forward.17} parent=0 // pred_check
    _
  $region11: #{distilbert_classifier_forward.17} parent=0 // pred_check_branch
    %13 = sbr.rel (0) target = $region13
  $region12: #{distilbert_classifier_forward.17} parent=0 // pred_region
    _
  $region13: #{distilbert_classifier_forward.17} parent=0 // pred_fallthru
    _
  %p15 = scmp.eq.s32.totalorder 0, 0
  // Predicated region
  $region14: #{distilbert_classifier_forward.17} parent=0 // pred_check
    %p16 = pneg %p15
  $region15: #{distilbert_classifier_forward.17} parent=0 // pred_check_branch
    %18 = sbr.rel (%p16) target = $region17
  $region16: #{distilbert_classifier_forward.17} parent=0 // pred_region
    %19 = vst [vmem:[#allocation2] sm:$0xff] 0.0
    %20 = vst [vmem:[#allocation2 + $0x8] sm:$0xff] 0.0
    %21 = vst [vmem:[#allocation2 + $0x10] sm:$0xff] 0.0
    %22 = vst [vmem:[#allocation2 + $0x18] sm:$0xff] 0.0
  $region17: #{distilbert_classifier_forward.17} parent=0 // pred_fallthru
    _
  %v23 = vld [vmem:[#allocation2] sm:$0xff]
  %v24 = vld [vmem:[#allocation2 + $0x8] sm:$0xff]
  %v25 = vld [vmem:[#allocation2 + $0x10] sm:$0xff]
  %v26 = vld [vmem:[#allocation2 + $0x18] sm:$0xff]
  %v27 = vld [vmem:[%s0] sm:$0xf]
  %v28 = vld [vmem:[%s0 + $0x4] sm:$0xf]
  %v29 = vld [vmem:[%s1] sm:$0xff]
  %v30 = vld [vmem:[%s1 + $0x8] sm:$0xff]
  %v31 = vld [vmem:[%s1 + $0x10] sm:$0xff]
  %v32 = vld [vmem:[%s1 + $0x18] sm:$0xff]
  %v33 = vld [vmem:[%s1 + $0x20] sm:$0xff]
  %v34 = vld [vmem:[%s1 + $0x28] sm:$0xff]
  %v35 = vld [vmem:[%s1 + $0x30] sm:$0xff]
  %v36 = vld [vmem:[%s1 + $0x38] sm:$0xff]
  %v37 = vld [vmem:[%s1 + $0x40] sm:$0xff]
  %v38 = vld [vmem:[%s1 + $0x48] sm:$0xff]
  %v39 = vld [vmem:[%s1 + $0x50] sm:$0xff]
  %v40 = vld [vmem:[%s1 + $0x58] sm:$0xff]
  %v41 = vld [vmem:[%s1 + $0x60] sm:$0xff]
  %v42 = vld [vmem:[%s1 + $0x68] sm:$0xff]
  %v43 = vld [vmem:[%s1 + $0x70] sm:$0xff]
  %v44 = vld [vmem:[%s1 + $0x78] sm:$0xff]
  %v47 = vunpack.c.l.b16 %v27
  %v48 = vunpack.c.l.b16 %v28
  %v49 = vpack.c.b16 %v48, %v47
  %v67 = vunpack.c.l.b16 %v29
  %v68 = vunpack.c.h.b16 %v29
  %v69 = vunpack.c.l.b16 %v30
  %v70 = vunpack.c.h.b16 %v30
  %v71 = vunpack.c.l.b16 %v31
  %v72 = vunpack.c.h.b16 %v31
  %v73 = vunpack.c.l.b16 %v32
  %v74 = vunpack.c.h.b16 %v32
  %v75 = vunpack.c.l.b16 %v33
  %v76 = vunpack.c.h.b16 %v33
  %v77 = vunpack.c.l.b16 %v34
  %v78 = vunpack.c.h.b16 %v34
  %v79 = vunpack.c.l.b16 %v35
  %v80 = vunpack.c.h.b16 %v35
  %v81 = vunpack.c.l.b16 %v36
  %v82 = vunpack.c.h.b16 %v36
  %v83 = vunpack.c.l.b16 %v37
  %v84 = vunpack.c.h.b16 %v37
  %v85 = vunpack.c.l.b16 %v38
  %v86 = vunpack.c.h.b16 %v38
  %v87 = vunpack.c.l.b16 %v39
  %v88 = vunpack.c.h.b16 %v39
  %v89 = vunpack.c.l.b16 %v40
  %v90 = vunpack.c.h.b16 %v40
  %v91 = vunpack.c.l.b16 %v41
  %v92 = vunpack.c.h.b16 %v41
  %v93 = vunpack.c.l.b16 %v42
  %v94 = vunpack.c.h.b16 %v42
  %v95 = vunpack.c.l.b16 %v43
  %v96 = vunpack.c.h.b16 %v43
  %v97 = vunpack.c.l.b16 %v44
  %v98 = vunpack.c.h.b16 %v44
  %v99 = vpack.c.b16 %v69, %v67
  %v100 = vpack.c.b16 %v70, %v68
  %v101 = vpack.c.b16 %v73, %v71
  %v102 = vpack.c.b16 %v74, %v72
  %v103 = vpack.c.b16 %v77, %v75
  %v104 = vpack.c.b16 %v78, %v76
  %v105 = vpack.c.b16 %v81, %v79
  %v106 = vpack.c.b16 %v82, %v80
  %v107 = vpack.c.b16 %v85, %v83
  %v108 = vpack.c.b16 %v86, %v84
  %v109 = vpack.c.b16 %v89, %v87
  %v110 = vpack.c.b16 %v90, %v88
  %v111 = vpack.c.b16 %v93, %v91
  %v112 = vpack.c.b16 %v94, %v92
  %v113 = vpack.c.b16 %v97, %v95
  %v114 = vpack.c.b16 %v98, %v96
  %131 = vmatprep.subr.bf16.mxu0 %v114
  %132 = vmatpush1.bf16.msra.mxu0 %v113
  %133 = vmatprep.subr.bf16.mxu0 %v112
  %134 = vmatpush1.bf16.msra.mxu0 %v111
  %135 = vmatprep.subr.bf16.mxu0 %v110
  %136 = vmatpush1.bf16.msra.mxu0 %v109
  %137 = vmatprep.subr.bf16.mxu0 %v108
  %138 = vmatpush1.bf16.msra.mxu0 %v107
  %139 = vmatprep.subr.bf16.mxu0 %v106
  %140 = vmatpush1.bf16.msra.mxu0 %v105
  %141 = vmatprep.subr.bf16.mxu0 %v104
  %142 = vmatpush1.bf16.msra.mxu0 %v103
  %143 = vmatprep.subr.bf16.mxu0 %v102
  %144 = vmatpush1.bf16.msra.mxu0 %v101
  %145 = vmatprep.subr.bf16.mxu0 %v100
  %146 = vmatpush1.bf16.msra.mxu0 %v99
  %147 = vmatprep.subr.bf16.mxu0 0
  %148 = vmatpush2.bf16.msra.mxu0 0
  %149 = vmatprep.subr.bf16.mxu0 0
  %150 = vmatpush2.bf16.msra.mxu0 0
  %151 = vmatprep.subr.bf16.mxu0 0
  %152 = vmatpush2.bf16.msra.mxu0 0
  %153 = vmatprep.subr.bf16.mxu0 0
  %154 = vmatpush2.bf16.msra.mxu0 0
  %155 = vmatprep.subr.bf16.mxu0 0
  %156 = vmatpush2.bf16.msra.mxu0 0
  %157 = vmatprep.subr.bf16.mxu0 0
  %158 = vmatpush2.bf16.msra.mxu0 0
  %159 = vmatprep.subr.bf16.mxu0 0
  %160 = vmatpush2.bf16.msra.mxu0 0
  %161 = vmatprep.subr.bf16.mxu0 0
  %162 = vmatpush2.bf16.msra.mxu0 0
  %163 = vmatprep.mubr.bf16.mxu0 0
  %164 = vmatmul.mubr.bf16.gmra.mxu0 %v49
  %v165 = vpop.f32.mrf.mxu0
  %v166 = vadd.f32 0.0, %v165
  %v167 = vpop.f32.mrf.mxu0
  %v168 = vadd.f32 0.0, %v167
  %v169 = vpop.f32.mrf.mxu0
  %v170 = vadd.f32 0.0, %v169
  %v171 = vpop.f32.mrf.mxu0
  %v172 = vadd.f32 0.0, %v171
  %173 = vdwg.mxu0
  %v174 = vadd.f32 %v23, %v166
  %v175 = vadd.f32 %v24, %v168
  %v176 = vadd.f32 %v25, %v170
  %v177 = vadd.f32 %v26, %v172
  %178 = vst [vmem:[#allocation2] sm:$0xff] %v174
  %179 = vst [vmem:[#allocation2 + $0x8] sm:$0xff] %v175
  %180 = vst [vmem:[#allocation2 + $0x10] sm:$0xff] %v176
  %181 = vst [vmem:[#allocation2 + $0x18] sm:$0xff] %v177
  // Predicated region
  $region18: #{distilbert_classifier_forward.17} parent=0 // pred_check
    %p182 = pneg %p15
  $region19: #{distilbert_classifier_forward.17} parent=0 // pred_check_branch
    %184 = sbr.rel (%p182) target = $region21
  $region20: #{distilbert_classifier_forward.17} parent=0 // pred_region
    %v185 = vld [vmem:[#allocation2] sm:$0xff]
    %v186 = vld [vmem:[#allocation2 + $0x8] sm:$0xff]
    %v187 = vld [vmem:[#allocation2 + $0x10] sm:$0xff]
    %v188 = vld [vmem:[#allocation2 + $0x18] sm:$0xff]
    %v189 = vld [vmem:[%s2] sm:$0x3]
    %v191 = vlaneseq
    %v192 = vshrl.u32 %v191, 7
    %v193 = vsub.s32 0, %v192
    %v194 = vrot.slane %v189, %v193
    %v195 = vlaneseq
    %v196 = vshrl.u32 %v195, 7
    %v197 = vsub.s32 1, %v196
    %v198 = vrot.slane %v189, %v197
    %v201 = vadd.f32 %v185, %v194
    %v202 = vadd.f32 %v186, %v198
    %v203 = vadd.f32 %v187, %v194
    %v204 = vadd.f32 %v188, %v198
    %v205 = vmul.f32 %v201, %v201
    %v206 = vmul.f32 %v202, %v202
    %v207 = vmul.f32 %v203, %v203
    %v208 = vmul.f32 %v204, %v204
    %v209 = vmul.f32 %v201, %v205
    %v210 = vmul.f32 %v202, %v206
    %v211 = vmul.f32 %v203, %v207
    %v212 = vmul.f32 %v204, %v208
    %v213 = vmul.f32 %v209, 0.044715
    %v214 = vmul.f32 %v210, 0.044715
    %v215 = vmul.f32 %v211, 0.044715
    %v216 = vmul.f32 %v212, 0.044715
    %v217 = vadd.f32 %v201, %v213
    %v218 = vadd.f32 %v202, %v214
    %v219 = vadd.f32 %v203, %v215
    %v220 = vadd.f32 %v204, %v216
    %v221 = vmul.f32 %v217, 0.7978846
    %v222 = vmul.f32 %v218, 0.7978846
    %v223 = vmul.f32 %v219, 0.7978846
    %v224 = vmul.f32 %v220, 0.7978846
    %v225 = vtanh.pop %v221
    %v226 = vtanh.pop %v222
    %v227 = vtanh.pop %v223
    %v228 = vtanh.pop %v224
    %v229 = vadd.f32 %v225, 1.0
    %v230 = vadd.f32 %v226, 1.0
    %v231 = vadd.f32 %v227, 1.0
    %v232 = vadd.f32 %v228, 1.0
    %v233 = vmul.f32 %v229, 0.5
    %v234 = vmul.f32 %v230, 0.5
    %v235 = vmul.f32 %v231, 0.5
    %v236 = vmul.f32 %v232, 0.5
    %v237 = vmul.f32 %v201, %v233
    %v238 = vmul.f32 %v202, %v234
    %v239 = vmul.f32 %v203, %v235
    %v240 = vmul.f32 %v204, %v236
    %v241 = vpack.c.bf16 %v239, %v237
    %v242 = vpack.c.bf16 %v240, %v238
    %v245 = vunpack.c.l.b16 %v241
    %v246 = vunpack.c.l.b16 %v242
    %v247 = vunpack.c.h.b16 %v241
    %v248 = vunpack.c.h.b16 %v242
    %v249 = vpack.c.b16 %v246, %v245
    %v250 = vpack.c.b16 %v248, %v247
    %253 = vst [vmem:[%s3] sm:$0xff] %v249
    %254 = vst [vmem:[%s3 + $0x8] sm:$0xff] %v250
  $region21: #{distilbert_classifier_forward.17} parent=0 // pred_fallthru
    _
  // Predicated region
  $region22: #{distilbert_classifier_forward.17} parent=0 // pred_check
    _
  $region23: #{distilbert_classifier_forward.17} parent=0 // pred_check_branch
    %256 = sbr.rel (0) target = $region25
  $region24: #{distilbert_classifier_forward.17} parent=0 // pred_region
    _
  $region25: #{distilbert_classifier_forward.17} parent=0 // pred_fallthru
    _
  // Predicated region
  $region26: #{distilbert_classifier_forward.17} parent=0 // pred_check
    _
  $region27: #{distilbert_classifier_forward.17} parent=0 // pred_check_branch
    %258 = sbr.rel (0) target = $region29
  $region28: #{distilbert_classifier_forward.17} parent=0 // pred_region
    _
  $region29: #{distilbert_classifier_forward.17} parent=0 // pred_fallthru
    _

// kernel: distilbert_classifier_forward.18
$region0: #{distilbert_classifier_forward.18}
  #allocation0 [shape = 'u32[]', space=smem, size = 0x4, offset = 0x4, fixed_abs, tag = 'smem constant byte address 0x4 - core index']
  #allocation1 [shape = 'u32[144,128]{1,0:T(1,128)}', space=vmem, size = 0x12000, scoped, tag = 'internal scratch']
  #allocation2 [shape = 'f32[16,128]{1,0:T(8,128)}', space=vmem, size = 0x2000, scoped, tag = 'scratch operand']
  %s0 = inlined_call_operand.vmem [shape: bf16[16,256], index: 0, kind: input, shape index: {}]
  %s1 = inlined_call_operand.vmem [shape: bf16[256,128], index: 1, kind: input, shape index: {}]
  %s2 = inlined_call_operand.vmem [shape: f32[1,128], index: 2, kind: input, shape index: {}]
  %s3 = inlined_call_operand.vmem [shape: bf16[16,128], index: 3, kind: input, shape index: {}]
  %s4 = inlined_call_operand.vmem [shape: f32[1,128], index: 4, kind: input, shape index: {}]
  %s5 = inlined_call_operand.vmem [shape: f32[1,128], index: 5, kind: input, shape index: {}]
  %s6 = inlined_call_operand.vmem [shape: bf16[16,128], index: 6, kind: output, shape index: {}]
  %s7 = sld [smem:[#allocation0]]
  $region42: #{distilbert_classifier_forward.18} parent=0
    _
  %s9 = ssub.s32 1, %s7
  %s10 = scalar_select 0, %s9, %s7
  // Predicated region
  $region2: #{distilbert_classifier_forward.18} parent=0 // pred_check
    _
  $region3: #{distilbert_classifier_forward.18} parent=0 // pred_check_branch
    %12 = sbr.rel (0) target = $region5
  $region4: #{distilbert_classifier_forward.18} parent=0 // pred_region
    _
  $region5: #{distilbert_classifier_forward.18} parent=0 // pred_fallthru
    _
  // Predicated region
  $region6: #{distilbert_classifier_forward.18} parent=0 // pred_check
    _
  $region7: #{distilbert_classifier_forward.18} parent=0 // pred_check_branch
    %14 = sbr.rel (0) target = $region9
  $region8: #{distilbert_classifier_forward.18} parent=0 // pred_region
    _
  $region9: #{distilbert_classifier_forward.18} parent=0 // pred_fallthru
    _
  // Predicated region
  $region10: #{distilbert_classifier_forward.18} parent=0 // pred_check
    _
  $region11: #{distilbert_classifier_forward.18} parent=0 // pred_check_branch
    %16 = sbr.rel (0) target = $region13
  $region12: #{distilbert_classifier_forward.18} parent=0 // pred_region
    _
  $region13: #{distilbert_classifier_forward.18} parent=0 // pred_fallthru
    _
  // Predicated region
  $region14: #{distilbert_classifier_forward.18} parent=0 // pred_check
    _
  $region15: #{distilbert_classifier_forward.18} parent=0 // pred_check_branch
    %18 = sbr.rel (0) target = $region17
  $region16: #{distilbert_classifier_forward.18} parent=0 // pred_region
    _
  $region17: #{distilbert_classifier_forward.18} parent=0 // pred_fallthru
    _
  // Predicated region
  $region18: #{distilbert_classifier_forward.18} parent=0 // pred_check
    _
  $region19: #{distilbert_classifier_forward.18} parent=0 // pred_check_branch
    %20 = sbr.rel (0) target = $region21
  $region20: #{distilbert_classifier_forward.18} parent=0 // pred_region
    _
  $region21: #{distilbert_classifier_forward.18} parent=0 // pred_fallthru
    _
  // Predicated region
  $region22: #{distilbert_classifier_forward.18} parent=0 // pred_check
    _
  $region23: #{distilbert_classifier_forward.18} parent=0 // pred_check_branch
    %22 = sbr.rel (0) target = $region25
  $region24: #{distilbert_classifier_forward.18} parent=0 // pred_region
    _
  $region25: #{distilbert_classifier_forward.18} parent=0 // pred_fallthru
    _
  %p24 = scmp.eq.s32.totalorder 0, 0
  // Predicated region
  $region26: #{distilbert_classifier_forward.18} parent=0 // pred_check
    %p25 = pneg %p24
  $region27: #{distilbert_classifier_forward.18} parent=0 // pred_check_branch
    %27 = sbr.rel (%p25) target = $region29
  $region28: #{distilbert_classifier_forward.18} parent=0 // pred_region
    %28 = vst [vmem:[#allocation2] sm:$0xff] 0.0
    %29 = vst [vmem:[#allocation2 + $0x8] sm:$0xff] 0.0
  $region29: #{distilbert_classifier_forward.18} parent=0 // pred_fallthru
    _
  %v30 = vld [vmem:[#allocation2] sm:$0xff]
  %v31 = vld [vmem:[#allocation2 + $0x8] sm:$0xff]
  %v32 = vld [vmem:[%s0] sm:$0xff]
  %v33 = vld [vmem:[%s0 + $0x8] sm:$0xff]
  %v34 = vld [vmem:[%s1] sm:$0xf]
  %v35 = vld [vmem:[%s1 + $0x4] sm:$0xf]
  %v36 = vld [vmem:[%s1 + $0x8] sm:$0xf]
  %v37 = vld [vmem:[%s1 + $0xc] sm:$0xf]
  %v38 = vld [vmem:[%s1 + $0x10] sm:$0xf]
  %v39 = vld [vmem:[%s1 + $0x14] sm:$0xf]
  %v40 = vld [vmem:[%s1 + $0x18] sm:$0xf]
  %v41 = vld [vmem:[%s1 + $0x1c] sm:$0xf]
  %v42 = vld [vmem:[%s1 + $0x20] sm:$0xf]
  %v43 = vld [vmem:[%s1 + $0x24] sm:$0xf]
  %v44 = vld [vmem:[%s1 + $0x28] sm:$0xf]
  %v45 = vld [vmem:[%s1 + $0x2c] sm:$0xf]
  %v46 = vld [vmem:[%s1 + $0x30] sm:$0xf]
  %v47 = vld [vmem:[%s1 + $0x34] sm:$0xf]
  %v48 = vld [vmem:[%s1 + $0x38] sm:$0xf]
  %v49 = vld [vmem:[%s1 + $0x3c] sm:$0xf]
  %v50 = vld [vmem:[%s1 + $0x40] sm:$0xf]
  %v51 = vld [vmem:[%s1 + $0x44] sm:$0xf]
  %v52 = vld [vmem:[%s1 + $0x48] sm:$0xf]
  %v53 = vld [vmem:[%s1 + $0x4c] sm:$0xf]
  %v54 = vld [vmem:[%s1 + $0x50] sm:$0xf]
  %v55 = vld [vmem:[%s1 + $0x54] sm:$0xf]
  %v56 = vld [vmem:[%s1 + $0x58] sm:$0xf]
  %v57 = vld [vmem:[%s1 + $0x5c] sm:$0xf]
  %v58 = vld [vmem:[%s1 + $0x60] sm:$0xf]
  %v59 = vld [vmem:[%s1 + $0x64] sm:$0xf]
  %v60 = vld [vmem:[%s1 + $0x68] sm:$0xf]
  %v61 = vld [vmem:[%s1 + $0x6c] sm:$0xf]
  %v62 = vld [vmem:[%s1 + $0x70] sm:$0xf]
  %v63 = vld [vmem:[%s1 + $0x74] sm:$0xf]
  %v64 = vld [vmem:[%s1 + $0x78] sm:$0xf]
  %v65 = vld [vmem:[%s1 + $0x7c] sm:$0xf]
  %v68 = vunpack.c.l.b16 %v32
  %v69 = vunpack.c.h.b16 %v32
  %v70 = vunpack.c.l.b16 %v33
  %v71 = vunpack.c.h.b16 %v33
  %v72 = vpack.c.b16 %v70, %v68
  %v73 = vpack.c.b16 %v71, %v69
  %v108 = vunpack.c.l.b16 %v34
  %v109 = vunpack.c.l.b16 %v35
  %v110 = vunpack.c.l.b16 %v36
  %v111 = vunpack.c.l.b16 %v37
  %v112 = vunpack.c.l.b16 %v38
  %v113 = vunpack.c.l.b16 %v39
  %v114 = vunpack.c.l.b16 %v40
  %v115 = vunpack.c.l.b16 %v41
  %v116 = vunpack.c.l.b16 %v42
  %v117 = vunpack.c.l.b16 %v43
  %v118 = vunpack.c.l.b16 %v44
  %v119 = vunpack.c.l.b16 %v45
  %v120 = vunpack.c.l.b16 %v46
  %v121 = vunpack.c.l.b16 %v47
  %v122 = vunpack.c.l.b16 %v48
  %v123 = vunpack.c.l.b16 %v49
  %v124 = vunpack.c.l.b16 %v50
  %v125 = vunpack.c.l.b16 %v51
  %v126 = vunpack.c.l.b16 %v52
  %v127 = vunpack.c.l.b16 %v53
  %v128 = vunpack.c.l.b16 %v54
  %v129 = vunpack.c.l.b16 %v55
  %v130 = vunpack.c.l.b16 %v56
  %v131 = vunpack.c.l.b16 %v57
  %v132 = vunpack.c.l.b16 %v58
  %v133 = vunpack.c.l.b16 %v59
  %v134 = vunpack.c.l.b16 %v60
  %v135 = vunpack.c.l.b16 %v61
  %v136 = vunpack.c.l.b16 %v62
  %v137 = vunpack.c.l.b16 %v63
  %v138 = vunpack.c.l.b16 %v64
  %v139 = vunpack.c.l.b16 %v65
  %v140 = vpack.c.b16 %v109, %v108
  %v141 = vpack.c.b16 %v111, %v110
  %v142 = vpack.c.b16 %v113, %v112
  %v143 = vpack.c.b16 %v115, %v114
  %v144 = vpack.c.b16 %v117, %v116
  %v145 = vpack.c.b16 %v119, %v118
  %v146 = vpack.c.b16 %v121, %v120
  %v147 = vpack.c.b16 %v123, %v122
  %v148 = vpack.c.b16 %v125, %v124
  %v149 = vpack.c.b16 %v127, %v126
  %v150 = vpack.c.b16 %v129, %v128
  %v151 = vpack.c.b16 %v131, %v130
  %v152 = vpack.c.b16 %v133, %v132
  %v153 = vpack.c.b16 %v135, %v134
  %v154 = vpack.c.b16 %v137, %v136
  %v155 = vpack.c.b16 %v139, %v138
  %172 = vmatprep.subr.bf16.mxu0 0
  %173 = vmatpush1.bf16.msra.mxu0 %v147
  %174 = vmatprep.subr.bf16.mxu0 0
  %175 = vmatpush1.bf16.msra.mxu0 %v146
  %176 = vmatprep.subr.bf16.mxu0 0
  %177 = vmatpush1.bf16.msra.mxu0 %v145
  %178 = vmatprep.subr.bf16.mxu0 0
  %179 = vmatpush1.bf16.msra.mxu0 %v144
  %180 = vmatprep.subr.bf16.mxu0 0
  %181 = vmatpush1.bf16.msra.mxu0 %v143
  %182 = vmatprep.subr.bf16.mxu0 0
  %183 = vmatpush1.bf16.msra.mxu0 %v142
  %184 = vmatprep.subr.bf16.mxu0 0
  %185 = vmatpush1.bf16.msra.mxu0 %v141
  %186 = vmatprep.subr.bf16.mxu0 0
  %187 = vmatpush1.bf16.msra.mxu0 %v140
  %188 = vmatprep.subr.bf16.mxu0 0
  %189 = vmatpush2.bf16.msra.mxu0 %v155
  %190 = vmatprep.subr.bf16.mxu0 0
  %191 = vmatpush2.bf16.msra.mxu0 %v154
  %192 = vmatprep.subr.bf16.mxu0 0
  %193 = vmatpush2.bf16.msra.mxu0 %v153
  %194 = vmatprep.subr.bf16.mxu0 0
  %195 = vmatpush2.bf16.msra.mxu0 %v152
  %196 = vmatprep.subr.bf16.mxu0 0
  %197 = vmatpush2.bf16.msra.mxu0 %v151
  %198 = vmatprep.subr.bf16.mxu0 0
  %199 = vmatpush2.bf16.msra.mxu0 %v150
  %200 = vmatprep.subr.bf16.mxu0 0
  %201 = vmatpush2.bf16.msra.mxu0 %v149
  %202 = vmatprep.subr.bf16.mxu0 0
  %203 = vmatpush2.bf16.msra.mxu0 %v148
  %204 = vmatprep.mubr.bf16.mxu0 %v73
  %205 = vmatmul.mubr.bf16.gmra.mxu0 %v72
  %v206 = vpop.f32.mrf.mxu0
  %v207 = vadd.f32 0.0, %v206
  %v208 = vpop.f32.mrf.mxu0
  %v209 = vpop.f32.mrf.mxu0
  %v210 = vadd.f32 0.0, %v209
  %v211 = vpop.f32.mrf.mxu0
  %212 = vdwg.mxu0
  %v213 = vadd.f32 %v30, %v207
  %v214 = vadd.f32 %v31, %v210
  %215 = vst [vmem:[#allocation2] sm:$0xff] %v213
  %216 = vst [vmem:[#allocation2 + $0x8] sm:$0xff] %v214
  // Predicated region
  $region30: #{distilbert_classifier_forward.18} parent=0 // pred_check
    %p217 = pneg %p24
  $region31: #{distilbert_classifier_forward.18} parent=0 // pred_check_branch
    %219 = sbr.rel (%p217) target = $region33
  $region32: #{distilbert_classifier_forward.18} parent=0 // pred_region
    %v220 = vld [vmem:[#allocation2] sm:$0xff]
    %v221 = vld [vmem:[#allocation2 + $0x8] sm:$0xff]
    %v222 = vld [vmem:[%s2] sm:$0x1]
    %v224 = vlaneseq
    %v225 = vshrl.u32 %v224, 7
    %v226 = vsub.s32 0, %v225
    %v227 = vrot.slane %v222, %v226
    %v229 = vadd.f32 %v220, %v227
    %v230 = vadd.f32 %v221, %v227
    %v231 = vld [vmem:[%s3] sm:$0xf]
    %v232 = vld [vmem:[%s3 + $0x4] sm:$0xf]
    %v233 = vunpack.c.l.bf16 %v231
    %v234 = vunpack.c.l.bf16 %v232
    %v235 = vadd.f32 %v229, %v233
    %v236 = vadd.f32 %v230, %v234
    %237 = vadd.xlane.f32.xlu0 %v235
    %v238 = vpop.xlane.xlu0 %237
    %239 = vadd.xlane.f32.xlu0 %v236
    %v240 = vpop.xlane.xlu0 %239
    %v241 = vrcp.pop 128.0
    %v242 = vmul.f32 %v238, %v241
    %v243 = vmul.f32 %v240, %v241
    %v244 = vsub.f32 %v235, %v242
    %v245 = vsub.f32 %v236, %v243
    %v246 = vmul.f32 %v244, %v244
    %v247 = vmul.f32 %v245, %v245
    %248 = vadd.xlane.f32.xlu0 %v246
    %v249 = vpop.xlane.xlu0 %248
    %250 = vadd.xlane.f32.xlu0 %v247
    %v251 = vpop.xlane.xlu0 %250
    %v252 = vmul.f32 %v249, %v241
    %v253 = vmul.f32 %v251, %v241
    %v254 = vadd.f32 %v252, 1e-12
    %v255 = vadd.f32 %v253, 1e-12
    %v256 = vrsqrt.pop %v254
    %v257 = vrsqrt.pop %v255
    %v258 = vmul.f32 %v244, %v256
    %v259 = vmul.f32 %v245, %v257
    %v260 = vld [vmem:[%s4] sm:$0x1]
    %v262 = vlaneseq
    %v263 = vshrl.u32 %v262, 7
    %v264 = vsub.s32 0, %v263
    %v265 = vrot.slane %v260, %v264
    %v267 = vmul.f32 %v258, %v265
    %v268 = vmul.f32 %v259, %v265
    %v269 = vld [vmem:[%s5] sm:$0x1]
    %v271 = vlaneseq
    %v272 = vshrl.u32 %v271, 7
    %v273 = vsub.s32 0, %v272
    %v274 = vrot.slane %v269, %v273
    %v276 = vadd.f32 %v267, %v274
    %v277 = vadd.f32 %v268, %v274
    %v278 = vpack.c.bf16 %v277, %v276
    %v280 = vunpack.c.l.b16 %v278
    %v281 = vunpack.c.h.b16 %v278
    %v282 = vpack.c.b16 %v280, %v280
    %v283 = vpack.c.b16 %v281, %v281
    %286 = vst [vmem:[%s6] sm:$0xf] %v282
    %287 = vst [vmem:[%s6 + $0x4] sm:$0xf] %v283
  $region33: #{distilbert_classifier_forward.18} parent=0 // pred_fallthru
    _
  // Predicated region
  $region34: #{distilbert_classifier_forward.18} parent=0 // pred_check
    _
  $region35: #{distilbert_classifier_forward.18} parent=0 // pred_check_branch
    %289 = sbr.rel (0) target = $region37
  $region36: #{distilbert_classifier_forward.18} parent=0 // pred_region
    _
  $region37: #{distilbert_classifier_forward.18} parent=0 // pred_fallthru
    _
  // Predicated region
  $region38: #{distilbert_classifier_forward.18} parent=0 // pred_check
    _
  $region39: #{distilbert_classifier_forward.18} parent=0 // pred_check_branch
    %291 = sbr.rel (0) target = $region41
  $region40: #{distilbert_classifier_forward.18} parent=0 // pred_region
    _
  $region41: #{distilbert_classifier_forward.18} parent=0 // pred_fallthru
    _

</llo_original>
